<compile_context>
chip_gen: v5e
topology: v5e:2x2
jax: 0.10.0
libtpu: 0.0.40
codegen_flags: <defaults>
</compile_context>

<pallas_src>
import functools

import jax
import jax.numpy as jnp
from jax.experimental import pallas as pl
from jax.experimental.pallas import tpu as pltpu


def _round_up(n, m):
    return (n + m - 1) // m * m


def mlp_kernel(x_ref, w1_ref, w2_ref, w3_ref, w4_ref, o_ref, *, relu_bf16):
    """Fused 4-layer MLP on one batch tile; bf16 MXU operands, f32 accum."""
    act_dtype = jnp.bfloat16 if relu_bf16 else jnp.float32

    def act(h):
        # ReLU in the generation-appropriate dtype, then bf16 for the next MXU op.
        return jnp.maximum(h.astype(act_dtype), 0).astype(jnp.bfloat16)

    # Layer 1: cast the f32 input tile to bf16 in VMEM (no extra HBM pass).
    x = x_ref[...].astype(jnp.bfloat16)
    h = act(jnp.dot(x, w1_ref[...], preferred_element_type=jnp.float32))
    # Layer 2.
    h = act(jnp.dot(h, w2_ref[...], preferred_element_type=jnp.float32))
    # Layer 3.
    h = act(jnp.dot(h, w3_ref[...], preferred_element_type=jnp.float32))
    # Layer 4 (H -> 1): plain matmul, (bb, 1) output block. No transpose.
    out = jnp.dot(h, w4_ref[...], preferred_element_type=jnp.float32)
    o_ref[...] = out.astype(o_ref.dtype)


@functools.partial(jax.jit, static_argnames=("block_b", "relu_bf16"))
def four_layer_nn(x, w1, w2, w3, w4, *, block_b=1024, relu_bf16=True):
    """Forward pass of FourLayerNN.

    x: (B, d_in) float32.  Weights are (in, out); bf16 preferred (f32 accepted,
    cast once here).  Returns (B, 1) float32.
    """
    B, d_in = x.shape
    hidden = w1.shape[1]
    assert w1.shape == (d_in, hidden)
    assert w2.shape == (hidden, hidden) and w3.shape == (hidden, hidden)
    assert w4.shape == (hidden, 1)

    # Batch tile: as large as requested but never bigger than the batch;
    # MXU-aligned (multiple of 128 when big, multiple of 8 otherwise).
    bb = min(block_b, _round_up(B, 8))
    bb = (bb // 128) * 128 if bb >= 128 else _round_up(bb, 8)
    n_blocks = pl.cdiv(B, bb)  # partial last block handled by masked stores

    # Weight casts are no-ops when the caller already stores weights in bf16.
    def as_bf16(w):
        return w if w.dtype == jnp.bfloat16 else w.astype(jnp.bfloat16)

    w1_b, w2_b, w3_b, w4_b = map(as_bf16, (w1, w2, w3, w4))

    return pl.pallas_call(
        functools.partial(mlp_kernel, relu_bf16=relu_bf16),
        out_shape=jax.ShapeDtypeStruct((B, 1), jnp.float32),
        grid_spec=pltpu.PrefetchScalarGridSpec(
            num_scalar_prefetch=0,
            grid=(n_blocks,),
            in_specs=[
                # Batch tile of x (f32), pipelined across the grid.
                pl.BlockSpec((bb, d_in), lambda i: (i, 0)),
                # Weights: constant block index -> fetched once, VMEM-resident.
                pl.BlockSpec((d_in, hidden), lambda i: (0, 0)),
                pl.BlockSpec((hidden, hidden), lambda i: (0, 0)),
                pl.BlockSpec((hidden, hidden), lambda i: (0, 0)),
                pl.BlockSpec((hidden, 1), lambda i: (0, 0)),
            ],
            # Natural (B, 1) output; (bb, 1) block (last dim == full extent).
            out_specs=pl.BlockSpec((bb, 1), lambda i: (i, 0)),
        ),
        compiler_params=pltpu.CompilerParams(
            dimension_semantics=("parallel",),
        ),
    )(x, w1_b, w2_b, w3_b, w4_b)


def init_params(key, input_dim=20, hidden_dim=256, dtype=jnp.float32):
    """PyTorch-Linear-like init: U(-1/sqrt(fan_in), +1/sqrt(fan_in)).

    Weights stored as (in_features, out_features) so forward is x @ W.
    """
    k1, k2, k3, k4 = jax.random.split(key, 4)

    def uniform_w(k, fan_in, fan_out):
        bound = 1.0 / jnp.sqrt(fan_in)
        return jax.random.uniform(
            k, (fan_in, fan_out), dtype=dtype, minval=-bound, maxval=bound
        )

    w1 = uniform_w(k1, input_dim, hidden_dim)
    w2 = uniform_w(k2, hidden_dim, hidden_dim)
    w3 = uniform_w(k3, hidden_dim, hidden_dim)
    w4 = uniform_w(k4, hidden_dim, 1)
    return w1, w2, w3, w4


def reference_forward(x, w1, w2, w3, w4):
    """Pure-JAX reference with the same bf16-operand / f32-accum recipe.

    Note: a bit-exact match to the f32 PyTorch module would require f32 MXU
    operands; this reference matches the kernel's numerics instead.
    """
    bf = jnp.bfloat16
    h = jnp.maximum(
        jnp.dot(x.astype(bf), w1.astype(bf), preferred_element_type=jnp.float32), 0.0)
    h = jnp.maximum(
        jnp.dot(h.astype(bf), w2.astype(bf), preferred_element_type=jnp.float32), 0.0)
    h = jnp.maximum(
        jnp.dot(h.astype(bf), w3.astype(bf), preferred_element_type=jnp.float32), 0.0)
    return jnp.dot(h.astype(bf), w4.astype(bf), preferred_element_type=jnp.float32)


if __name__ == "__main__":
    key = jax.random.PRNGKey(0)
    key_x, key_w = jax.random.split(key)

    # Shapes implied by the module: d_in=20, hidden=256.  batch=2048 with
    # block_b=1024 -> 2 grid steps (even step count keeps both v7x TCs busy).
    batch, input_dim, hidden_dim = 2048, 20, 256
    x = jax.random.normal(key_x, (batch, input_dim), dtype=jnp.float32)
    w1, w2, w3, w4 = init_params(key_w, input_dim, hidden_dim)

    # Pre-cast weights to bf16 once (avoids per-call cast launches).
    w1b, w2b, w3b, w4b = (w.astype(jnp.bfloat16) for w in (w1, w2, w3, w4))

    # bf16 ReLU only on generations with bf16 VALUs (v6e / v7x); f32 elsewhere.
    kind = jax.devices()[0].device_kind.lower()
    relu_bf16 = ("v6" in kind) or ("v7" in kind)

    out = four_layer_nn(x, w1b, w2b, w3b, w4b, block_b=1024, relu_bf16=relu_bf16)
    out = jax.block_until_ready(out)

    ref = reference_forward(x, w1, w2, w3, w4)
    assert out.shape == (batch, 1), out.shape
    assert jnp.allclose(out, ref, atol=1e-3, rtol=1e-3), "mismatch vs reference"

    print("KERNEL_OK")
</pallas_src>

<mosaic_0001>
module attributes {stable_mosaic.version = 11 : i64} {
  func.func @mlp_kernel(%arg0: i32, %arg1: memref<1024x20xf32, #tpu.memory_space<vmem>>, %arg2: memref<20x256xbf16, #tpu.memory_space<vmem>>, %arg3: memref<256x256xbf16, #tpu.memory_space<vmem>>, %arg4: memref<256x256xbf16, #tpu.memory_space<vmem>>, %arg5: memref<256x1xbf16, #tpu.memory_space<vmem>>, %arg6: memref<1024x1xf32, #tpu.memory_space<vmem>>) attributes {dimension_semantics = [#tpu.dimension_semantics<parallel>], iteration_bounds = array<i64: 2>, scalar_prefetch = 0 : i64, scratch_operands = 0 : i64, tpu.core_type = #tpu.core_type<tc>, window_params = [{transform_indices = @transform_0, window_bounds = array<i64: 1024, 20>}, {pipeline_mode = #tpu.pipeline_mode<synchronous>, transform_indices = @transform_1, window_bounds = array<i64: 20, 256>}, {pipeline_mode = #tpu.pipeline_mode<synchronous>, transform_indices = @transform_2, window_bounds = array<i64: 256, 256>}, {pipeline_mode = #tpu.pipeline_mode<synchronous>, transform_indices = @transform_3, window_bounds = array<i64: 256, 256>}, {pipeline_mode = #tpu.pipeline_mode<synchronous>, transform_indices = @transform_4, window_bounds = array<i64: 256, 1>}, {transform_indices = @transform_5, window_bounds = array<i64: 1024, 1>}]} {
    %c0 = arith.constant 0 : index
    %c0_0 = arith.constant 0 : index
    %0 = vector.load %arg1[%c0, %c0_0] : memref<1024x20xf32, #tpu.memory_space<vmem>>, vector<1024x20xf32>
    %1 = arith.truncf %0 : vector<1024x20xf32> to vector<1024x20xbf16>
    %c0_1 = arith.constant 0 : index
    %c0_2 = arith.constant 0 : index
    %2 = vector.load %arg2[%c0_1, %c0_2] : memref<20x256xbf16, #tpu.memory_space<vmem>>, vector<20x256xbf16>
    %cst = arith.constant dense<0.000000e+00> : vector<1024x256xf32>
    %3 = tpu.matmul %1, %2, %cst {dimension_numbers = #tpu.dot_dimension_numbers<[1], [0], [0], [1], [0, 0, 1, 1], [], []>} : vector<1024x20xbf16>, vector<20x256xbf16>, vector<1024x256xf32> -> vector<1024x256xf32>
    %cst_3 = arith.constant 0.000000e+00 : f32
    %4 = vector.broadcast %cst_3 : f32 to vector<1024x256xf32>
    %5 = arith.maximumf %3, %4 : vector<1024x256xf32>
    %6 = arith.truncf %5 : vector<1024x256xf32> to vector<1024x256xbf16>
    %c0_4 = arith.constant 0 : index
    %c0_5 = arith.constant 0 : index
    %7 = vector.load %arg3[%c0_4, %c0_5] : memref<256x256xbf16, #tpu.memory_space<vmem>>, vector<256x256xbf16>
    %cst_6 = arith.constant dense<0.000000e+00> : vector<1024x256xf32>
    %8 = tpu.matmul %6, %7, %cst_6 {dimension_numbers = #tpu.dot_dimension_numbers<[1], [0], [0], [1], [0, 0, 1, 1], [], []>} : vector<1024x256xbf16>, vector<256x256xbf16>, vector<1024x256xf32> -> vector<1024x256xf32>
    %cst_7 = arith.constant 0.000000e+00 : f32
    %9 = vector.broadcast %cst_7 : f32 to vector<1024x256xf32>
    %10 = arith.maximumf %8, %9 : vector<1024x256xf32>
    %11 = arith.truncf %10 : vector<1024x256xf32> to vector<1024x256xbf16>
    %c0_8 = arith.constant 0 : index
    %c0_9 = arith.constant 0 : index
    %12 = vector.load %arg4[%c0_8, %c0_9] : memref<256x256xbf16, #tpu.memory_space<vmem>>, vector<256x256xbf16>
    %cst_10 = arith.constant dense<0.000000e+00> : vector<1024x256xf32>
    %13 = tpu.matmul %11, %12, %cst_10 {dimension_numbers = #tpu.dot_dimension_numbers<[1], [0], [0], [1], [0, 0, 1, 1], [], []>} : vector<1024x256xbf16>, vector<256x256xbf16>, vector<1024x256xf32> -> vector<1024x256xf32>
    %cst_11 = arith.constant 0.000000e+00 : f32
    %14 = vector.broadcast %cst_11 : f32 to vector<1024x256xf32>
    %15 = arith.maximumf %13, %14 : vector<1024x256xf32>
    %16 = arith.truncf %15 : vector<1024x256xf32> to vector<1024x256xbf16>
    %c0_12 = arith.constant 0 : index
    %c0_13 = arith.constant 0 : index
    %17 = vector.load %arg5[%c0_12, %c0_13] : memref<256x1xbf16, #tpu.memory_space<vmem>>, vector<256x1xbf16>
    %cst_14 = arith.constant dense<0.000000e+00> : vector<1024x1xf32>
    %18 = tpu.matmul %16, %17, %cst_14 {dimension_numbers = #tpu.dot_dimension_numbers<[1], [0], [0], [1], [0, 0, 1, 1], [], []>} : vector<1024x256xbf16>, vector<256x1xbf16>, vector<1024x1xf32> -> vector<1024x1xf32>
    %c0_15 = arith.constant 0 : index
    %c0_16 = arith.constant 0 : index
    %19 = vector.load %arg6[%c0_15, %c0_16] : memref<1024x1xf32, #tpu.memory_space<vmem>>, vector<1024x1xf32>
    tpu.vector_store %arg6[%c0_15, %c0_16], %18 {strides = array<i32>} : memref<1024x1xf32, #tpu.memory_space<vmem>>, vector<1024x1xf32>,
    return
  }
  func.func @transform_0(%arg0: i32) -> (i32, i32) {
    %c0_i32 = arith.constant 0 : i32
    %c0_i32_0 = arith.constant 0 : i32
    return %arg0, %c0_i32 : i32, i32
  }
  func.func @transform_1(%arg0: i32) -> (i32, i32) {
    %c0_i32 = arith.constant 0 : i32
    %c0_i32_0 = arith.constant 0 : i32
    %c0_i32_1 = arith.constant 0 : i32
    return %c0_i32, %c0_i32_0 : i32, i32
  }
  func.func @transform_2(%arg0: i32) -> (i32, i32) {
    %c0_i32 = arith.constant 0 : i32
    %c0_i32_0 = arith.constant 0 : i32
    %c0_i32_1 = arith.constant 0 : i32
    return %c0_i32, %c0_i32_0 : i32, i32
  }
  func.func @transform_3(%arg0: i32) -> (i32, i32) {
    %c0_i32 = arith.constant 0 : i32
    %c0_i32_0 = arith.constant 0 : i32
    %c0_i32_1 = arith.constant 0 : i32
    return %c0_i32, %c0_i32_0 : i32, i32
  }
  func.func @transform_4(%arg0: i32) -> (i32, i32) {
    %c0_i32 = arith.constant 0 : i32
    %c0_i32_0 = arith.constant 0 : i32
    %c0_i32_1 = arith.constant 0 : i32
    return %c0_i32, %c0_i32_0 : i32, i32
  }
  func.func @transform_5(%arg0: i32) -> (i32, i32) {
    %c0_i32 = arith.constant 0 : i32
    %c0_i32_0 = arith.constant 0 : i32
    return %arg0, %c0_i32 : i32, i32
  }
}

</mosaic_0001>

<llo_original>
// kernel: four_layer_nn.1
$region0: #{four_layer_nn.1}
  #allocation0 [shape = 'u32[]', space=smem, size = 0x4, offset = 0x4, fixed_abs, tag = 'smem constant byte address 0x4 - core index']
  #allocation1 [shape = 'u32[72,128]{1,0:T(1,128)}', space=vmem, size = 0x9000, scoped, tag = 'internal scratch']
  %s0 = inlined_call_operand.vmem [shape: f32[2048,20], index: 0, kind: input, shape index: {}]
  %s1 = inlined_call_operand.vmem [shape: bf16[20,256], index: 1, kind: input, shape index: {}]
  %s2 = inlined_call_operand.vmem [shape: bf16[256,256], index: 2, kind: input, shape index: {}]
  %s3 = inlined_call_operand.vmem [shape: bf16[256,256], index: 3, kind: input, shape index: {}]
  %s4 = inlined_call_operand.vmem [shape: bf16[256,1], index: 4, kind: input, shape index: {}]
  %s5 = inlined_call_operand.vmem [shape: f32[2048,1], index: 5, kind: output, shape index: {}]
  %s6 = sld [smem:[#allocation0]]
  $region53: #{four_layer_nn.1} parent=0
    _
  %s8 = ssub.s32 1, %s6
  %s9 = scalar_select 0, %s8, %s6
  loop: start=0, step=1, limit=4
  $region2: #{four_layer_nn.1} parent=0 // loop_pre_header
    _
  $region3: #{four_layer_nn.1} parent=0 // loop_header
    %s11 = sphi 0, %s15
    %p12 = scmp.ge.s32.totalorder %s11, 4
    %s21 = sphi 0, %s23
    %s24 = sphi 0, %s21
    %s25 = sphi 0, %s24
    %s41 = sphi 0, %s25
    %s45 = sphi 0, %s45
    %s47 = sphi 0, %s45
    %s48 = sphi 0, %s47
    %s62 = sphi 0, %s48
    %s66 = sphi 0, %s66
    %s68 = sphi 0, %s66
    %s69 = sphi 0, %s68
    %s83 = sphi 0, %s69
    %s87 = sphi 0, %s87
    %s89 = sphi 0, %s87
    %s90 = sphi 0, %s89
    %s104 = sphi 0, %s90
    %s108 = sphi 0, %s108
    %s110 = sphi 0, %s108
    %s111 = sphi 0, %s110
    %s125 = sphi 0, %s111
    %s131 = sphi 0, %s133
    %s134 = sphi 0, %s131
    %s135 = sphi 0, %s134
    %s151 = sphi 0, %s135
  $region4: #{four_layer_nn.1} parent=0 // loop_header_branch
    %14 = sbr.rel (%p12) target = $region8
  $region5: #{four_layer_nn.1} parent=0 // loop_body
    %s16 = ssub.s32 %s11, 1
    %s17 = ssub.s32 %s11, 2
    %s18 = sadd.s32 %s11, 1
    %s19 = ssub.s32 %s11, %s18
    %p20 = scmp.eq.s32.totalorder %s19, 0
    %s22 = sadd.s32 %s21, 1
    %s23 = scalar_select %p20, %s21, %s22
    %p26 = pneg %p20
    %p27 = scmp.eq.s32.totalorder %s11, 1
    %p28 = por %p26, %p27
    %p29 = scmp.ne.s32.totalorder %s21, %s24
    %p30 = scmp.eq.s32.totalorder %s11, 0
    %p31 = por %p29, %p30
    %p32 = scmp.ne.s32.totalorder %s21, %s24
    %p33 = scmp.eq.s32.totalorder %s16, 1
    %p34 = por %p32, %p33
    %p35 = scmp.ne.s32.totalorder %s24, %s25
    %p36 = scmp.eq.s32.totalorder %s16, 0
    %p37 = por %p35, %p36
    %p38 = scmp.ne.s32.totalorder %s24, %s25
    %p39 = scmp.eq.s32.totalorder %s17, 1
    %p40 = por %p38, %p39
    %p42 = scmp.ne.s32.totalorder %s25, %s41
    %p43 = scmp.eq.s32.totalorder %s17, 0
    %p44 = por %p42, %p43
    %s46 = sadd.s32 %s45, 1
    %p49 = scmp.eq.s32.totalorder %s11, 1
    %p50 = scmp.ne.s32.totalorder %s45, %s47
    %p51 = scmp.eq.s32.totalorder %s11, 0
    %p52 = por %p50, %p51
    %p53 = scmp.ne.s32.totalorder %s45, %s47
    %p54 = scmp.eq.s32.totalorder %s16, 1
    %p55 = por %p53, %p54
    %p56 = scmp.ne.s32.totalorder %s47, %s48
    %p57 = scmp.eq.s32.totalorder %s16, 0
    %p58 = por %p56, %p57
    %p59 = scmp.ne.s32.totalorder %s47, %s48
    %p60 = scmp.eq.s32.totalorder %s17, 1
    %p61 = por %p59, %p60
    %p63 = scmp.ne.s32.totalorder %s48, %s62
    %p64 = scmp.eq.s32.totalorder %s17, 0
    %p65 = por %p63, %p64
    %s67 = sadd.s32 %s66, 1
    %p70 = scmp.eq.s32.totalorder %s11, 1
    %p71 = scmp.ne.s32.totalorder %s66, %s68
    %p72 = scmp.eq.s32.totalorder %s11, 0
    %p73 = por %p71, %p72
    %p74 = scmp.ne.s32.totalorder %s66, %s68
    %p75 = scmp.eq.s32.totalorder %s16, 1
    %p76 = por %p74, %p75
    %p77 = scmp.ne.s32.totalorder %s68, %s69
    %p78 = scmp.eq.s32.totalorder %s16, 0
    %p79 = por %p77, %p78
    %p80 = scmp.ne.s32.totalorder %s68, %s69
    %p81 = scmp.eq.s32.totalorder %s17, 1
    %p82 = por %p80, %p81
    %p84 = scmp.ne.s32.totalorder %s69, %s83
    %p85 = scmp.eq.s32.totalorder %s17, 0
    %p86 = por %p84, %p85
    %s88 = sadd.s32 %s87, 1
    %p91 = scmp.eq.s32.totalorder %s11, 1
    %p92 = scmp.ne.s32.totalorder %s87, %s89
    %p93 = scmp.eq.s32.totalorder %s11, 0
    %p94 = por %p92, %p93
    %p95 = scmp.ne.s32.totalorder %s87, %s89
    %p96 = scmp.eq.s32.totalorder %s16, 1
    %p97 = por %p95, %p96
    %p98 = scmp.ne.s32.totalorder %s89, %s90
    %p99 = scmp.eq.s32.totalorder %s16, 0
    %p100 = por %p98, %p99
    %p101 = scmp.ne.s32.totalorder %s89, %s90
    %p102 = scmp.eq.s32.totalorder %s17, 1
    %p103 = por %p101, %p102
    %p105 = scmp.ne.s32.totalorder %s90, %s104
    %p106 = scmp.eq.s32.totalorder %s17, 0
    %p107 = por %p105, %p106
    %s109 = sadd.s32 %s108, 1
    %p112 = scmp.eq.s32.totalorder %s11, 1
    %p113 = scmp.ne.s32.totalorder %s108, %s110
    %p114 = scmp.eq.s32.totalorder %s11, 0
    %p115 = por %p113, %p114
    %p116 = scmp.ne.s32.totalorder %s108, %s110
    %p117 = scmp.eq.s32.totalorder %s16, 1
    %p118 = por %p116, %p117
    %p119 = scmp.ne.s32.totalorder %s110, %s111
    %p120 = scmp.eq.s32.totalorder %s16, 0
    %p121 = por %p119, %p120
    %p122 = scmp.ne.s32.totalorder %s110, %s111
    %p123 = scmp.eq.s32.totalorder %s17, 1
    %p124 = por %p122, %p123
    %p126 = scmp.ne.s32.totalorder %s111, %s125
    %p127 = scmp.eq.s32.totalorder %s17, 0
    %p128 = por %p126, %p127
    %s129 = ssub.s32 %s11, %s18
    %p130 = scmp.eq.s32.totalorder %s129, 0
    %s132 = sadd.s32 %s131, 1
    %s133 = scalar_select %p130, %s131, %s132
    %p136 = pneg %p130
    %p137 = scmp.eq.s32.totalorder %s11, 1
    %p138 = por %p136, %p137
    %p139 = scmp.ne.s32.totalorder %s131, %s134
    %p140 = scmp.eq.s32.totalorder %s11, 0
    %p141 = por %p139, %p140
    %p142 = scmp.ne.s32.totalorder %s131, %s134
    %p143 = scmp.eq.s32.totalorder %s16, 1
    %p144 = por %p142, %p143
    %p145 = scmp.ne.s32.totalorder %s134, %s135
    %p146 = scmp.eq.s32.totalorder %s16, 0
    %p147 = por %p145, %p146
    %p148 = scmp.ne.s32.totalorder %s134, %s135
    %p149 = scmp.eq.s32.totalorder %s17, 1
    %p150 = por %p148, %p149
    %p152 = scmp.ne.s32.totalorder %s135, %s151
    %p153 = scmp.eq.s32.totalorder %s17, 0
    %p154 = por %p152, %p153
    %p155 = scmp.le.s32.totalorder 1, %s11
    %p156 = scmp.lt.s32.totalorder %s11, 3
    %p157 = pnand %p155, %p156
    %p158 = pneg %p157
    // Predicated region
    $region9: #{four_layer_nn.1} parent=5 // pred_check
      _
    $region10: #{four_layer_nn.1} parent=5 // pred_check_branch
      %160 = sbr.rel (%p157) target = $region12
    $region11: #{four_layer_nn.1} parent=5 // pred_region
      %s161 = ssub.s32 %s11, 1
      // Predicated region
      $region13: #{four_layer_nn.1} parent=11 // pred_check
        %p162 = pneg %p58
      $region14: #{four_layer_nn.1} parent=11 // pred_check_branch
        %164 = sbr.rel (%p162) target = $region16
      $region15: #{four_layer_nn.1} parent=11 // pred_region
        _
      $region16: #{four_layer_nn.1} parent=11 // pred_fallthru
        _
      // Predicated region
      $region17: #{four_layer_nn.1} parent=11 // pred_check
        %p165 = pneg %p79
      $region18: #{four_layer_nn.1} parent=11 // pred_check_branch
        %167 = sbr.rel (%p165) target = $region20
      $region19: #{four_layer_nn.1} parent=11 // pred_region
        _
      $region20: #{four_layer_nn.1} parent=11 // pred_fallthru
        _
      // Predicated region
      $region21: #{four_layer_nn.1} parent=11 // pred_check
        %p168 = pneg %p100
      $region22: #{four_layer_nn.1} parent=11 // pred_check_branch
        %170 = sbr.rel (%p168) target = $region24
      $region23: #{four_layer_nn.1} parent=11 // pred_region
        _
      $region24: #{four_layer_nn.1} parent=11 // pred_fallthru
        _
      // Predicated region
      $region25: #{four_layer_nn.1} parent=11 // pred_check
        %p171 = pneg %p121
      $region26: #{four_layer_nn.1} parent=11 // pred_check_branch
        %173 = sbr.rel (%p171) target = $region28
      $region27: #{four_layer_nn.1} parent=11 // pred_region
        _
      $region28: #{four_layer_nn.1} parent=11 // pred_fallthru
        _
    $region12: #{four_layer_nn.1} parent=5 // pred_fallthru
      _
    %p174 = scmp.lt.s32.totalorder %s11, 2
    // Predicated region
    $region29: #{four_layer_nn.1} parent=5 // pred_check
      %p175 = pneg %p174
    $region30: #{four_layer_nn.1} parent=5 // pred_check_branch
      %177 = sbr.rel (%p175) target = $region32
    $region31: #{four_layer_nn.1} parent=5 // pred_region
      // Predicated region
      $region33: #{four_layer_nn.1} parent=31 // pred_check
        %p178 = pneg %p31
      $region34: #{four_layer_nn.1} parent=31 // pred_check_branch
        %180 = sbr.rel (%p178) target = $region36
      $region35: #{four_layer_nn.1} parent=31 // pred_region
        %s181 = smul.u32 128, %s11
        %p182 = scmp.lt.s32.totalorder %s181, 255
        %s183 = scalar_select %p182, %s181, 255
        %s184 = smul.addr %s183, 8
        %s185 = scalar_lea.vmem %s0, %s184
        %s186 = smul.u32 128, %s11
      $region36: #{four_layer_nn.1} parent=31 // pred_fallthru
        _
    $region32: #{four_layer_nn.1} parent=5 // pred_fallthru
      _
    %p187 = scmp.le.s32.totalorder 1, %s11
    %p188 = scmp.lt.s32.totalorder %s11, 3
    %p189 = pnand %p187, %p188
    %p190 = pneg %p189
    // Predicated region
    $region37: #{four_layer_nn.1} parent=5 // pred_check
      _
    $region38: #{four_layer_nn.1} parent=5 // pred_check_branch
      %192 = sbr.rel (%p189) target = $region40
    $region39: #{four_layer_nn.1} parent=5 // pred_region
      %s193 = ssub.s32 %s11, 1
      %s194 = smul.u32 128, %s16
      %p195 = scmp.lt.s32.totalorder %s194, 255
      %s196 = scalar_select %p195, %s194, 255
      %s197 = smul.addr %s196, 8
      %s198 = scalar_lea.vmem %s0, %s197
      %p199 = pneg %p37
      %p200 = pneg %p34
      %p201 = pneg %p58
      %p202 = pneg %p55
      %p203 = pneg %p79
      %p204 = pneg %p76
      %p205 = pneg %p100
      %p206 = pneg %p97
      %p207 = pneg %p121
      %p208 = pneg %p118
      %p209 = pneg %p147
      %p210 = pneg %p144
      %s211 = smul.u32 128, %s16
      %p212 = scmp.lt.s32.totalorder %s211, 255
      %s213 = scalar_select %p212, %s211, 255
      %s214 = smul.addr %s213, 8
      %s215 = scalar_lea.vmem %s5, %s214
      %s216 = smul.u32 128, %s16
      %p217 = scmp.lt.s32.totalorder %s216, 255
      %s218 = scalar_select %p217, %s216, 255
      %s219 = smul.addr %s218, 8
      %s220 = scalar_lea.vmem %s0, %s219
      %s221 = smul.u32 128, %s16
      %s222 = smul.u32 128, %s16
      %p223 = scmp.lt.s32.totalorder %s222, 255
      %s224 = scalar_select %p223, %s222, 255
      %s225 = smul.addr %s224, 8
      %s226 = scalar_lea.vmem %s5, %s225
      %s227 = smul.u32 128, %s16
      %v229 = vld [vmem:[%s220] sm:$0xff]
      %v230 = vld [vmem:[%s220 + $0x8] sm:$0xff]
      %v231 = vld [vmem:[%s220 + $0x10] sm:$0xff]
      %v232 = vld [vmem:[%s220 + $0x18] sm:$0xff]
      %v233 = vld [vmem:[%s220 + $0x20] sm:$0xff]
      %v234 = vld [vmem:[%s220 + $0x28] sm:$0xff]
      %v235 = vld [vmem:[%s220 + $0x30] sm:$0xff]
      %v236 = vld [vmem:[%s220 + $0x38] sm:$0xff]
      %v237 = vld [vmem:[%s220 + $0x40] sm:$0xff]
      %v238 = vld [vmem:[%s220 + $0x48] sm:$0xff]
      %v239 = vld [vmem:[%s220 + $0x50] sm:$0xff]
      %v240 = vld [vmem:[%s220 + $0x58] sm:$0xff]
      %v241 = vld [vmem:[%s220 + $0x60] sm:$0xff]
      %v242 = vld [vmem:[%s220 + $0x68] sm:$0xff]
      %v243 = vld [vmem:[%s220 + $0x70] sm:$0xff]
      %v244 = vld [vmem:[%s220 + $0x78] sm:$0xff]
      %v245 = vld [vmem:[%s220 + $0x80] sm:$0xff]
      %v246 = vld [vmem:[%s220 + $0x88] sm:$0xff]
      %v247 = vld [vmem:[%s220 + $0x90] sm:$0xff]
      %v248 = vld [vmem:[%s220 + $0x98] sm:$0xff]
      %v249 = vld [vmem:[%s220 + $0xa0] sm:$0xff]
      %v250 = vld [vmem:[%s220 + $0xa8] sm:$0xff]
      %v251 = vld [vmem:[%s220 + $0xb0] sm:$0xff]
      %v252 = vld [vmem:[%s220 + $0xb8] sm:$0xff]
      %v253 = vld [vmem:[%s220 + $0xc0] sm:$0xff]
      %v254 = vld [vmem:[%s220 + $0xc8] sm:$0xff]
      %v255 = vld [vmem:[%s220 + $0xd0] sm:$0xff]
      %v256 = vld [vmem:[%s220 + $0xd8] sm:$0xff]
      %v257 = vld [vmem:[%s220 + $0xe0] sm:$0xff]
      %v258 = vld [vmem:[%s220 + $0xe8] sm:$0xff]
      %v259 = vld [vmem:[%s220 + $0xf0] sm:$0xff]
      %v260 = vld [vmem:[%s220 + $0xf8] sm:$0xff]
      %v261 = vld [vmem:[%s220 + $0x100] sm:$0xff]
      %v262 = vld [vmem:[%s220 + $0x108] sm:$0xff]
      %v263 = vld [vmem:[%s220 + $0x110] sm:$0xff]
      %v264 = vld [vmem:[%s220 + $0x118] sm:$0xff]
      %v265 = vld [vmem:[%s220 + $0x120] sm:$0xff]
      %v266 = vld [vmem:[%s220 + $0x128] sm:$0xff]
      %v267 = vld [vmem:[%s220 + $0x130] sm:$0xff]
      %v268 = vld [vmem:[%s220 + $0x138] sm:$0xff]
      %v269 = vld [vmem:[%s220 + $0x140] sm:$0xff]
      %v270 = vld [vmem:[%s220 + $0x148] sm:$0xff]
      %v271 = vld [vmem:[%s220 + $0x150] sm:$0xff]
      %v272 = vld [vmem:[%s220 + $0x158] sm:$0xff]
      %v273 = vld [vmem:[%s220 + $0x160] sm:$0xff]
      %v274 = vld [vmem:[%s220 + $0x168] sm:$0xff]
      %v275 = vld [vmem:[%s220 + $0x170] sm:$0xff]
      %v276 = vld [vmem:[%s220 + $0x178] sm:$0xff]
      %v277 = vld [vmem:[%s220 + $0x180] sm:$0xff]
      %v278 = vld [vmem:[%s220 + $0x188] sm:$0xff]
      %v279 = vld [vmem:[%s220 + $0x190] sm:$0xff]
      %v280 = vld [vmem:[%s220 + $0x198] sm:$0xff]
      %v281 = vld [vmem:[%s220 + $0x1a0] sm:$0xff]
      %v282 = vld [vmem:[%s220 + $0x1a8] sm:$0xff]
      %v283 = vld [vmem:[%s220 + $0x1b0] sm:$0xff]
      %v284 = vld [vmem:[%s220 + $0x1b8] sm:$0xff]
      %v285 = vld [vmem:[%s220 + $0x1c0] sm:$0xff]
      %v286 = vld [vmem:[%s220 + $0x1c8] sm:$0xff]
      %v287 = vld [vmem:[%s220 + $0x1d0] sm:$0xff]
      %v288 = vld [vmem:[%s220 + $0x1d8] sm:$0xff]
      %v289 = vld [vmem:[%s220 + $0x1e0] sm:$0xff]
      %v290 = vld [vmem:[%s220 + $0x1e8] sm:$0xff]
      %v291 = vld [vmem:[%s220 + $0x1f0] sm:$0xff]
      %v292 = vld [vmem:[%s220 + $0x1f8] sm:$0xff]
      %v293 = vld [vmem:[%s220 + $0x200] sm:$0xff]
      %v294 = vld [vmem:[%s220 + $0x208] sm:$0xff]
      %v295 = vld [vmem:[%s220 + $0x210] sm:$0xff]
      %v296 = vld [vmem:[%s220 + $0x218] sm:$0xff]
      %v297 = vld [vmem:[%s220 + $0x220] sm:$0xff]
      %v298 = vld [vmem:[%s220 + $0x228] sm:$0xff]
      %v299 = vld [vmem:[%s220 + $0x230] sm:$0xff]
      %v300 = vld [vmem:[%s220 + $0x238] sm:$0xff]
      %v301 = vld [vmem:[%s220 + $0x240] sm:$0xff]
      %v302 = vld [vmem:[%s220 + $0x248] sm:$0xff]
      %v303 = vld [vmem:[%s220 + $0x250] sm:$0xff]
      %v304 = vld [vmem:[%s220 + $0x258] sm:$0xff]
      %v305 = vld [vmem:[%s220 + $0x260] sm:$0xff]
      %v306 = vld [vmem:[%s220 + $0x268] sm:$0xff]
      %v307 = vld [vmem:[%s220 + $0x270] sm:$0xff]
      %v308 = vld [vmem:[%s220 + $0x278] sm:$0xff]
      %v309 = vld [vmem:[%s220 + $0x280] sm:$0xff]
      %v310 = vld [vmem:[%s220 + $0x288] sm:$0xff]
      %v311 = vld [vmem:[%s220 + $0x290] sm:$0xff]
      %v312 = vld [vmem:[%s220 + $0x298] sm:$0xff]
      %v313 = vld [vmem:[%s220 + $0x2a0] sm:$0xff]
      %v314 = vld [vmem:[%s220 + $0x2a8] sm:$0xff]
      %v315 = vld [vmem:[%s220 + $0x2b0] sm:$0xff]
      %v316 = vld [vmem:[%s220 + $0x2b8] sm:$0xff]
      %v317 = vld [vmem:[%s220 + $0x2c0] sm:$0xff]
      %v318 = vld [vmem:[%s220 + $0x2c8] sm:$0xff]
      %v319 = vld [vmem:[%s220 + $0x2d0] sm:$0xff]
      %v320 = vld [vmem:[%s220 + $0x2d8] sm:$0xff]
      %v321 = vld [vmem:[%s220 + $0x2e0] sm:$0xff]
      %v322 = vld [vmem:[%s220 + $0x2e8] sm:$0xff]
      %v323 = vld [vmem:[%s220 + $0x2f0] sm:$0xff]
      %v324 = vld [vmem:[%s220 + $0x2f8] sm:$0xff]
      %v325 = vld [vmem:[%s220 + $0x300] sm:$0xff]
      %v326 = vld [vmem:[%s220 + $0x308] sm:$0xff]
      %v327 = vld [vmem:[%s220 + $0x310] sm:$0xff]
      %v328 = vld [vmem:[%s220 + $0x318] sm:$0xff]
      %v329 = vld [vmem:[%s220 + $0x320] sm:$0xff]
      %v330 = vld [vmem:[%s220 + $0x328] sm:$0xff]
      %v331 = vld [vmem:[%s220 + $0x330] sm:$0xff]
      %v332 = vld [vmem:[%s220 + $0x338] sm:$0xff]
      %v333 = vld [vmem:[%s220 + $0x340] sm:$0xff]
      %v334 = vld [vmem:[%s220 + $0x348] sm:$0xff]
      %v335 = vld [vmem:[%s220 + $0x350] sm:$0xff]
      %v336 = vld [vmem:[%s220 + $0x358] sm:$0xff]
      %v337 = vld [vmem:[%s220 + $0x360] sm:$0xff]
      %v338 = vld [vmem:[%s220 + $0x368] sm:$0xff]
      %v339 = vld [vmem:[%s220 + $0x370] sm:$0xff]
      %v340 = vld [vmem:[%s220 + $0x378] sm:$0xff]
      %v341 = vld [vmem:[%s220 + $0x380] sm:$0xff]
      %v342 = vld [vmem:[%s220 + $0x388] sm:$0xff]
      %v343 = vld [vmem:[%s220 + $0x390] sm:$0xff]
      %v344 = vld [vmem:[%s220 + $0x398] sm:$0xff]
      %v345 = vld [vmem:[%s220 + $0x3a0] sm:$0xff]
      %v346 = vld [vmem:[%s220 + $0x3a8] sm:$0xff]
      %v347 = vld [vmem:[%s220 + $0x3b0] sm:$0xff]
      %v348 = vld [vmem:[%s220 + $0x3b8] sm:$0xff]
      %v349 = vld [vmem:[%s220 + $0x3c0] sm:$0xff]
      %v350 = vld [vmem:[%s220 + $0x3c8] sm:$0xff]
      %v351 = vld [vmem:[%s220 + $0x3d0] sm:$0xff]
      %v352 = vld [vmem:[%s220 + $0x3d8] sm:$0xff]
      %v353 = vld [vmem:[%s220 + $0x3e0] sm:$0xff]
      %v354 = vld [vmem:[%s220 + $0x3e8] sm:$0xff]
      %v355 = vld [vmem:[%s220 + $0x3f0] sm:$0xff]
      %v356 = vld [vmem:[%s220 + $0x3f8] sm:$0xff]
      %v357 = vpack.c.bf16 %v230, %v229
      %v358 = vpack.c.bf16 %v232, %v231
      %v359 = vpack.c.bf16 %v234, %v233
      %v360 = vpack.c.bf16 %v236, %v235
      %v361 = vpack.c.bf16 %v238, %v237
      %v362 = vpack.c.bf16 %v240, %v239
      %v363 = vpack.c.bf16 %v242, %v241
      %v364 = vpack.c.bf16 %v244, %v243
      %v365 = vpack.c.bf16 %v246, %v245
      %v366 = vpack.c.bf16 %v248, %v247
      %v367 = vpack.c.bf16 %v250, %v249
      %v368 = vpack.c.bf16 %v252, %v251
      %v369 = vpack.c.bf16 %v254, %v253
      %v370 = vpack.c.bf16 %v256, %v255
      %v371 = vpack.c.bf16 %v258, %v257
      %v372 = vpack.c.bf16 %v260, %v259
      %v373 = vpack.c.bf16 %v262, %v261
      %v374 = vpack.c.bf16 %v264, %v263
      %v375 = vpack.c.bf16 %v266, %v265
      %v376 = vpack.c.bf16 %v268, %v267
      %v377 = vpack.c.bf16 %v270, %v269
      %v378 = vpack.c.bf16 %v272, %v271
      %v379 = vpack.c.bf16 %v274, %v273
      %v380 = vpack.c.bf16 %v276, %v275
      %v381 = vpack.c.bf16 %v278, %v277
      %v382 = vpack.c.bf16 %v280, %v279
      %v383 = vpack.c.bf16 %v282, %v281
      %v384 = vpack.c.bf16 %v284, %v283
      %v385 = vpack.c.bf16 %v286, %v285
      %v386 = vpack.c.bf16 %v288, %v287
      %v387 = vpack.c.bf16 %v290, %v289
      %v388 = vpack.c.bf16 %v292, %v291
      %v389 = vpack.c.bf16 %v294, %v293
      %v390 = vpack.c.bf16 %v296, %v295
      %v391 = vpack.c.bf16 %v298, %v297
      %v392 = vpack.c.bf16 %v300, %v299
      %v393 = vpack.c.bf16 %v302, %v301
      %v394 = vpack.c.bf16 %v304, %v303
      %v395 = vpack.c.bf16 %v306, %v305
      %v396 = vpack.c.bf16 %v308, %v307
      %v397 = vpack.c.bf16 %v310, %v309
      %v398 = vpack.c.bf16 %v312, %v311
      %v399 = vpack.c.bf16 %v314, %v313
      %v400 = vpack.c.bf16 %v316, %v315
      %v401 = vpack.c.bf16 %v318, %v317
      %v402 = vpack.c.bf16 %v320, %v319
      %v403 = vpack.c.bf16 %v322, %v321
      %v404 = vpack.c.bf16 %v324, %v323
      %v405 = vpack.c.bf16 %v326, %v325
      %v406 = vpack.c.bf16 %v328, %v327
      %v407 = vpack.c.bf16 %v330, %v329
      %v408 = vpack.c.bf16 %v332, %v331
      %v409 = vpack.c.bf16 %v334, %v333
      %v410 = vpack.c.bf16 %v336, %v335
      %v411 = vpack.c.bf16 %v338, %v337
      %v412 = vpack.c.bf16 %v340, %v339
      %v413 = vpack.c.bf16 %v342, %v341
      %v414 = vpack.c.bf16 %v344, %v343
      %v415 = vpack.c.bf16 %v346, %v345
      %v416 = vpack.c.bf16 %v348, %v347
      %v417 = vpack.c.bf16 %v350, %v349
      %v418 = vpack.c.bf16 %v352, %v351
      %v419 = vpack.c.bf16 %v354, %v353
      %v420 = vpack.c.bf16 %v356, %v355
      %v421 = vld [vmem:[%s1] sm:$0xff]
      %v422 = vld [vmem:[%s1 + $0x8] sm:$0xff]
      %v423 = vld [vmem:[%s1 + $0x10] sm:$0x33]
      %v427 = vunpack.c.l.b16 %v421
      %v428 = vunpack.c.h.b16 %v421
      %v429 = vunpack.c.l.b16 %v422
      %v430 = vunpack.c.h.b16 %v422
      %v431 = vunpack.c.l.b16 %v423
      %v432 = vunpack.c.h.b16 %v423
      %v433 = vpack.c.b16 %v429, %v427
      %v434 = vpack.c.b16 %v430, %v428
      %v435 = vpack.c.b16 %v431, %v431
      %v436 = vpack.c.b16 %v432, %v432
      %vm439 = vcmask 162816
      %v441 = vsel %vm439, %v357, 0
      %v444 = vsel %vm439, %v358, 0
      %v447 = vsel %vm439, %v359, 0
      %v450 = vsel %vm439, %v360, 0
      %v453 = vsel %vm439, %v361, 0
      %v456 = vsel %vm439, %v362, 0
      %v459 = vsel %vm439, %v363, 0
      %v462 = vsel %vm439, %v364, 0
      %v465 = vsel %vm439, %v365, 0
      %v468 = vsel %vm439, %v366, 0
      %v471 = vsel %vm439, %v367, 0
      %v474 = vsel %vm439, %v368, 0
      %v477 = vsel %vm439, %v369, 0
      %v480 = vsel %vm439, %v370, 0
      %v483 = vsel %vm439, %v371, 0
      %v486 = vsel %vm439, %v372, 0
      %v489 = vsel %vm439, %v373, 0
      %v492 = vsel %vm439, %v374, 0
      %v495 = vsel %vm439, %v375, 0
      %v498 = vsel %vm439, %v376, 0
      %v501 = vsel %vm439, %v377, 0
      %v504 = vsel %vm439, %v378, 0
      %v507 = vsel %vm439, %v379, 0
      %v510 = vsel %vm439, %v380, 0
      %v513 = vsel %vm439, %v381, 0
      %v516 = vsel %vm439, %v382, 0
      %v519 = vsel %vm439, %v383, 0
      %v522 = vsel %vm439, %v384, 0
      %v525 = vsel %vm439, %v385, 0
      %v528 = vsel %vm439, %v386, 0
      %v531 = vsel %vm439, %v387, 0
      %v534 = vsel %vm439, %v388, 0
      %v537 = vsel %vm439, %v389, 0
      %v540 = vsel %vm439, %v390, 0
      %v543 = vsel %vm439, %v391, 0
      %v546 = vsel %vm439, %v392, 0
      %v549 = vsel %vm439, %v393, 0
      %v552 = vsel %vm439, %v394, 0
      %v555 = vsel %vm439, %v395, 0
      %v558 = vsel %vm439, %v396, 0
      %v561 = vsel %vm439, %v397, 0
      %v564 = vsel %vm439, %v398, 0
      %v567 = vsel %vm439, %v399, 0
      %v570 = vsel %vm439, %v400, 0
      %v573 = vsel %vm439, %v401, 0
      %v576 = vsel %vm439, %v402, 0
      %v579 = vsel %vm439, %v403, 0
      %v582 = vsel %vm439, %v404, 0
      %v585 = vsel %vm439, %v405, 0
      %v588 = vsel %vm439, %v406, 0
      %v591 = vsel %vm439, %v407, 0
      %v594 = vsel %vm439, %v408, 0
      %v597 = vsel %vm439, %v409, 0
      %v600 = vsel %vm439, %v410, 0
      %v603 = vsel %vm439, %v411, 0
      %v606 = vsel %vm439, %v412, 0
      %v609 = vsel %vm439, %v413, 0
      %v612 = vsel %vm439, %v414, 0
      %v615 = vsel %vm439, %v415, 0
      %v618 = vsel %vm439, %v416, 0
      %v621 = vsel %vm439, %v417, 0
      %v624 = vsel %vm439, %v418, 0
      %v627 = vsel %vm439, %v419, 0
      %v630 = vsel %vm439, %v420, 0
      %vm632 = vcmask 1041408
      %v634 = vsel %vm632, %v435, 0
      %v637 = vsel %vm632, %v436, 0
      %639 = vmatpush.bf16.msra.mxu0 0
      %640 = vmatpush.bf16.msra.mxu0 0
      %641 = vmatpush.bf16.msra.mxu0 0
      %642 = vmatpush.bf16.msra.mxu0 0
      %643 = vmatpush.bf16.msra.mxu0 0
      %644 = vmatpush.bf16.msra.mxu0 0
      %645 = vmatpush.bf16.msra.mxu0 %v634
      %646 = vmatpush.bf16.msra.mxu0 %v433
      %647 = vmatmul.bf16.gmra.mxu0 %v441
      %v648 = vpop.f32.mrf.mxu0
      %v649 = vadd.f32 0.0, %v648
      %v650 = vpop.f32.mrf.mxu0
      %v651 = vadd.f32 0.0, %v650
      %652 = vmatmul.bf16.gmra.mxu0 %v444
      %v653 = vpop.f32.mrf.mxu0
      %v654 = vadd.f32 0.0, %v653
      %v655 = vpop.f32.mrf.mxu0
      %v656 = vadd.f32 0.0, %v655
      %657 = vmatmul.bf16.gmra.mxu0 %v447
      %v658 = vpop.f32.mrf.mxu0
      %v659 = vadd.f32 0.0, %v658
      %v660 = vpop.f32.mrf.mxu0
      %v661 = vadd.f32 0.0, %v660
      %662 = vmatmul.bf16.gmra.mxu0 %v450
      %v663 = vpop.f32.mrf.mxu0
      %v664 = vadd.f32 0.0, %v663
      %v665 = vpop.f32.mrf.mxu0
      %v666 = vadd.f32 0.0, %v665
      %667 = vmatmul.bf16.gmra.mxu0 %v453
      %v668 = vpop.f32.mrf.mxu0
      %v669 = vadd.f32 0.0, %v668
      %v670 = vpop.f32.mrf.mxu0
      %v671 = vadd.f32 0.0, %v670
      %672 = vmatmul.bf16.gmra.mxu0 %v456
      %v673 = vpop.f32.mrf.mxu0
      %v674 = vadd.f32 0.0, %v673
      %v675 = vpop.f32.mrf.mxu0
      %v676 = vadd.f32 0.0, %v675
      %677 = vmatmul.bf16.gmra.mxu0 %v459
      %v678 = vpop.f32.mrf.mxu0
      %v679 = vadd.f32 0.0, %v678
      %v680 = vpop.f32.mrf.mxu0
      %v681 = vadd.f32 0.0, %v680
      %682 = vmatmul.bf16.gmra.mxu0 %v462
      %v683 = vpop.f32.mrf.mxu0
      %v684 = vadd.f32 0.0, %v683
      %v685 = vpop.f32.mrf.mxu0
      %v686 = vadd.f32 0.0, %v685
      %687 = vmatmul.bf16.gmra.mxu0 %v465
      %v688 = vpop.f32.mrf.mxu0
      %v689 = vadd.f32 0.0, %v688
      %v690 = vpop.f32.mrf.mxu0
      %v691 = vadd.f32 0.0, %v690
      %692 = vmatmul.bf16.gmra.mxu0 %v468
      %v693 = vpop.f32.mrf.mxu0
      %v694 = vadd.f32 0.0, %v693
      %v695 = vpop.f32.mrf.mxu0
      %v696 = vadd.f32 0.0, %v695
      %697 = vmatmul.bf16.gmra.mxu0 %v471
      %v698 = vpop.f32.mrf.mxu0
      %v699 = vadd.f32 0.0, %v698
      %v700 = vpop.f32.mrf.mxu0
      %v701 = vadd.f32 0.0, %v700
      %702 = vmatmul.bf16.gmra.mxu0 %v474
      %v703 = vpop.f32.mrf.mxu0
      %v704 = vadd.f32 0.0, %v703
      %v705 = vpop.f32.mrf.mxu0
      %v706 = vadd.f32 0.0, %v705
      %707 = vmatmul.bf16.gmra.mxu0 %v477
      %v708 = vpop.f32.mrf.mxu0
      %v709 = vadd.f32 0.0, %v708
      %v710 = vpop.f32.mrf.mxu0
      %v711 = vadd.f32 0.0, %v710
      %712 = vmatmul.bf16.gmra.mxu0 %v480
      %v713 = vpop.f32.mrf.mxu0
      %v714 = vadd.f32 0.0, %v713
      %v715 = vpop.f32.mrf.mxu0
      %v716 = vadd.f32 0.0, %v715
      %717 = vmatmul.bf16.gmra.mxu0 %v483
      %v718 = vpop.f32.mrf.mxu0
      %v719 = vadd.f32 0.0, %v718
      %v720 = vpop.f32.mrf.mxu0
      %v721 = vadd.f32 0.0, %v720
      %722 = vmatmul.bf16.gmra.mxu0 %v486
      %v723 = vpop.f32.mrf.mxu0
      %v724 = vadd.f32 0.0, %v723
      %v725 = vpop.f32.mrf.mxu0
      %v726 = vadd.f32 0.0, %v725
      %727 = vmatmul.bf16.gmra.mxu0 %v489
      %v728 = vpop.f32.mrf.mxu0
      %v729 = vadd.f32 0.0, %v728
      %v730 = vpop.f32.mrf.mxu0
      %v731 = vadd.f32 0.0, %v730
      %732 = vmatmul.bf16.gmra.mxu0 %v492
      %v733 = vpop.f32.mrf.mxu0
      %v734 = vadd.f32 0.0, %v733
      %v735 = vpop.f32.mrf.mxu0
      %v736 = vadd.f32 0.0, %v735
      %737 = vmatmul.bf16.gmra.mxu0 %v495
      %v738 = vpop.f32.mrf.mxu0
      %v739 = vadd.f32 0.0, %v738
      %v740 = vpop.f32.mrf.mxu0
      %v741 = vadd.f32 0.0, %v740
      %742 = vmatmul.bf16.gmra.mxu0 %v498
      %v743 = vpop.f32.mrf.mxu0
      %v744 = vadd.f32 0.0, %v743
      %v745 = vpop.f32.mrf.mxu0
      %v746 = vadd.f32 0.0, %v745
      %747 = vmatmul.bf16.gmra.mxu0 %v501
      %v748 = vpop.f32.mrf.mxu0
      %v749 = vadd.f32 0.0, %v748
      %v750 = vpop.f32.mrf.mxu0
      %v751 = vadd.f32 0.0, %v750
      %752 = vmatmul.bf16.gmra.mxu0 %v504
      %v753 = vpop.f32.mrf.mxu0
      %v754 = vadd.f32 0.0, %v753
      %v755 = vpop.f32.mrf.mxu0
      %v756 = vadd.f32 0.0, %v755
      %757 = vmatmul.bf16.gmra.mxu0 %v507
      %v758 = vpop.f32.mrf.mxu0
      %v759 = vadd.f32 0.0, %v758
      %v760 = vpop.f32.mrf.mxu0
      %v761 = vadd.f32 0.0, %v760
      %762 = vmatmul.bf16.gmra.mxu0 %v510
      %v763 = vpop.f32.mrf.mxu0
      %v764 = vadd.f32 0.0, %v763
      %v765 = vpop.f32.mrf.mxu0
      %v766 = vadd.f32 0.0, %v765
      %767 = vmatmul.bf16.gmra.mxu0 %v513
      %v768 = vpop.f32.mrf.mxu0
      %v769 = vadd.f32 0.0, %v768
      %v770 = vpop.f32.mrf.mxu0
      %v771 = vadd.f32 0.0, %v770
      %772 = vmatmul.bf16.gmra.mxu0 %v516
      %v773 = vpop.f32.mrf.mxu0
      %v774 = vadd.f32 0.0, %v773
      %v775 = vpop.f32.mrf.mxu0
      %v776 = vadd.f32 0.0, %v775
      %777 = vmatmul.bf16.gmra.mxu0 %v519
      %v778 = vpop.f32.mrf.mxu0
      %v779 = vadd.f32 0.0, %v778
      %v780 = vpop.f32.mrf.mxu0
      %v781 = vadd.f32 0.0, %v780
      %782 = vmatmul.bf16.gmra.mxu0 %v522
      %v783 = vpop.f32.mrf.mxu0
      %v784 = vadd.f32 0.0, %v783
      %v785 = vpop.f32.mrf.mxu0
      %v786 = vadd.f32 0.0, %v785
      %787 = vmatmul.bf16.gmra.mxu0 %v525
      %v788 = vpop.f32.mrf.mxu0
      %v789 = vadd.f32 0.0, %v788
      %v790 = vpop.f32.mrf.mxu0
      %v791 = vadd.f32 0.0, %v790
      %792 = vmatmul.bf16.gmra.mxu0 %v528
      %v793 = vpop.f32.mrf.mxu0
      %v794 = vadd.f32 0.0, %v793
      %v795 = vpop.f32.mrf.mxu0
      %v796 = vadd.f32 0.0, %v795
      %797 = vmatmul.bf16.gmra.mxu0 %v531
      %v798 = vpop.f32.mrf.mxu0
      %v799 = vadd.f32 0.0, %v798
      %v800 = vpop.f32.mrf.mxu0
      %v801 = vadd.f32 0.0, %v800
      %802 = vmatmul.bf16.gmra.mxu0 %v534
      %v803 = vpop.f32.mrf.mxu0
      %v804 = vadd.f32 0.0, %v803
      %v805 = vpop.f32.mrf.mxu0
      %v806 = vadd.f32 0.0, %v805
      %807 = vmatmul.bf16.gmra.mxu0 %v537
      %v808 = vpop.f32.mrf.mxu0
      %v809 = vadd.f32 0.0, %v808
      %v810 = vpop.f32.mrf.mxu0
      %v811 = vadd.f32 0.0, %v810
      %812 = vmatmul.bf16.gmra.mxu0 %v540
      %v813 = vpop.f32.mrf.mxu0
      %v814 = vadd.f32 0.0, %v813
      %v815 = vpop.f32.mrf.mxu0
      %v816 = vadd.f32 0.0, %v815
      %817 = vmatmul.bf16.gmra.mxu0 %v543
      %v818 = vpop.f32.mrf.mxu0
      %v819 = vadd.f32 0.0, %v818
      %v820 = vpop.f32.mrf.mxu0
      %v821 = vadd.f32 0.0, %v820
      %822 = vmatmul.bf16.gmra.mxu0 %v546
      %v823 = vpop.f32.mrf.mxu0
      %v824 = vadd.f32 0.0, %v823
      %v825 = vpop.f32.mrf.mxu0
      %v826 = vadd.f32 0.0, %v825
      %827 = vmatmul.bf16.gmra.mxu0 %v549
      %v828 = vpop.f32.mrf.mxu0
      %v829 = vadd.f32 0.0, %v828
      %v830 = vpop.f32.mrf.mxu0
      %v831 = vadd.f32 0.0, %v830
      %832 = vmatmul.bf16.gmra.mxu0 %v552
      %v833 = vpop.f32.mrf.mxu0
      %v834 = vadd.f32 0.0, %v833
      %v835 = vpop.f32.mrf.mxu0
      %v836 = vadd.f32 0.0, %v835
      %837 = vmatmul.bf16.gmra.mxu0 %v555
      %v838 = vpop.f32.mrf.mxu0
      %v839 = vadd.f32 0.0, %v838
      %v840 = vpop.f32.mrf.mxu0
      %v841 = vadd.f32 0.0, %v840
      %842 = vmatmul.bf16.gmra.mxu0 %v558
      %v843 = vpop.f32.mrf.mxu0
      %v844 = vadd.f32 0.0, %v843
      %v845 = vpop.f32.mrf.mxu0
      %v846 = vadd.f32 0.0, %v845
      %847 = vmatmul.bf16.gmra.mxu0 %v561
      %v848 = vpop.f32.mrf.mxu0
      %v849 = vadd.f32 0.0, %v848
      %v850 = vpop.f32.mrf.mxu0
      %v851 = vadd.f32 0.0, %v850
      %852 = vmatmul.bf16.gmra.mxu0 %v564
      %v853 = vpop.f32.mrf.mxu0
      %v854 = vadd.f32 0.0, %v853
      %v855 = vpop.f32.mrf.mxu0
      %v856 = vadd.f32 0.0, %v855
      %857 = vmatmul.bf16.gmra.mxu0 %v567
      %v858 = vpop.f32.mrf.mxu0
      %v859 = vadd.f32 0.0, %v858
      %v860 = vpop.f32.mrf.mxu0
      %v861 = vadd.f32 0.0, %v860
      %862 = vmatmul.bf16.gmra.mxu0 %v570
      %v863 = vpop.f32.mrf.mxu0
      %v864 = vadd.f32 0.0, %v863
      %v865 = vpop.f32.mrf.mxu0
      %v866 = vadd.f32 0.0, %v865
      %867 = vmatmul.bf16.gmra.mxu0 %v573
      %v868 = vpop.f32.mrf.mxu0
      %v869 = vadd.f32 0.0, %v868
      %v870 = vpop.f32.mrf.mxu0
      %v871 = vadd.f32 0.0, %v870
      %872 = vmatmul.bf16.gmra.mxu0 %v576
      %v873 = vpop.f32.mrf.mxu0
      %v874 = vadd.f32 0.0, %v873
      %v875 = vpop.f32.mrf.mxu0
      %v876 = vadd.f32 0.0, %v875
      %877 = vmatmul.bf16.gmra.mxu0 %v579
      %v878 = vpop.f32.mrf.mxu0
      %v879 = vadd.f32 0.0, %v878
      %v880 = vpop.f32.mrf.mxu0
      %v881 = vadd.f32 0.0, %v880
      %882 = vmatmul.bf16.gmra.mxu0 %v582
      %v883 = vpop.f32.mrf.mxu0
      %v884 = vadd.f32 0.0, %v883
      %v885 = vpop.f32.mrf.mxu0
      %v886 = vadd.f32 0.0, %v885
      %887 = vmatmul.bf16.gmra.mxu0 %v585
      %v888 = vpop.f32.mrf.mxu0
      %v889 = vadd.f32 0.0, %v888
      %v890 = vpop.f32.mrf.mxu0
      %v891 = vadd.f32 0.0, %v890
      %892 = vmatmul.bf16.gmra.mxu0 %v588
      %v893 = vpop.f32.mrf.mxu0
      %v894 = vadd.f32 0.0, %v893
      %v895 = vpop.f32.mrf.mxu0
      %v896 = vadd.f32 0.0, %v895
      %897 = vmatmul.bf16.gmra.mxu0 %v591
      %v898 = vpop.f32.mrf.mxu0
      %v899 = vadd.f32 0.0, %v898
      %v900 = vpop.f32.mrf.mxu0
      %v901 = vadd.f32 0.0, %v900
      %902 = vmatmul.bf16.gmra.mxu0 %v594
      %v903 = vpop.f32.mrf.mxu0
      %v904 = vadd.f32 0.0, %v903
      %v905 = vpop.f32.mrf.mxu0
      %v906 = vadd.f32 0.0, %v905
      %907 = vmatmul.bf16.gmra.mxu0 %v597
      %v908 = vpop.f32.mrf.mxu0
      %v909 = vadd.f32 0.0, %v908
      %v910 = vpop.f32.mrf.mxu0
      %v911 = vadd.f32 0.0, %v910
      %912 = vmatmul.bf16.gmra.mxu0 %v600
      %v913 = vpop.f32.mrf.mxu0
      %v914 = vadd.f32 0.0, %v913
      %v915 = vpop.f32.mrf.mxu0
      %v916 = vadd.f32 0.0, %v915
      %917 = vmatmul.bf16.gmra.mxu0 %v603
      %v918 = vpop.f32.mrf.mxu0
      %v919 = vadd.f32 0.0, %v918
      %v920 = vpop.f32.mrf.mxu0
      %v921 = vadd.f32 0.0, %v920
      %922 = vmatmul.bf16.gmra.mxu0 %v606
      %v923 = vpop.f32.mrf.mxu0
      %v924 = vadd.f32 0.0, %v923
      %v925 = vpop.f32.mrf.mxu0
      %v926 = vadd.f32 0.0, %v925
      %927 = vmatmul.bf16.gmra.mxu0 %v609
      %v928 = vpop.f32.mrf.mxu0
      %v929 = vadd.f32 0.0, %v928
      %v930 = vpop.f32.mrf.mxu0
      %v931 = vadd.f32 0.0, %v930
      %932 = vmatmul.bf16.gmra.mxu0 %v612
      %v933 = vpop.f32.mrf.mxu0
      %v934 = vadd.f32 0.0, %v933
      %v935 = vpop.f32.mrf.mxu0
      %v936 = vadd.f32 0.0, %v935
      %937 = vmatmul.bf16.gmra.mxu0 %v615
      %v938 = vpop.f32.mrf.mxu0
      %v939 = vadd.f32 0.0, %v938
      %v940 = vpop.f32.mrf.mxu0
      %v941 = vadd.f32 0.0, %v940
      %942 = vmatmul.bf16.gmra.mxu0 %v618
      %v943 = vpop.f32.mrf.mxu0
      %v944 = vadd.f32 0.0, %v943
      %v945 = vpop.f32.mrf.mxu0
      %v946 = vadd.f32 0.0, %v945
      %947 = vmatmul.bf16.gmra.mxu0 %v621
      %v948 = vpop.f32.mrf.mxu0
      %v949 = vadd.f32 0.0, %v948
      %v950 = vpop.f32.mrf.mxu0
      %v951 = vadd.f32 0.0, %v950
      %952 = vmatmul.bf16.gmra.mxu0 %v624
      %v953 = vpop.f32.mrf.mxu0
      %v954 = vadd.f32 0.0, %v953
      %v955 = vpop.f32.mrf.mxu0
      %v956 = vadd.f32 0.0, %v955
      %957 = vmatmul.bf16.gmra.mxu0 %v627
      %v958 = vpop.f32.mrf.mxu0
      %v959 = vadd.f32 0.0, %v958
      %v960 = vpop.f32.mrf.mxu0
      %v961 = vadd.f32 0.0, %v960
      %962 = vmatmul.bf16.gmra.mxu0 %v630
      %v963 = vpop.f32.mrf.mxu0
      %v964 = vadd.f32 0.0, %v963
      %v965 = vpop.f32.mrf.mxu0
      %v966 = vadd.f32 0.0, %v965
      %967 = vdwg.mxu0
      %968 = vmatpush.bf16.msra.mxu0 0
      %969 = vmatpush.bf16.msra.mxu0 0
      %970 = vmatpush.bf16.msra.mxu0 0
      %971 = vmatpush.bf16.msra.mxu0 0
      %972 = vmatpush.bf16.msra.mxu0 0
      %973 = vmatpush.bf16.msra.mxu0 0
      %974 = vmatpush.bf16.msra.mxu0 %v637
      %975 = vmatpush.bf16.msra.mxu0 %v434
      %976 = vmatmul.bf16.gmra.mxu0 %v441
      %v977 = vpop.f32.mrf.mxu0
      %v978 = vadd.f32 0.0, %v977
      %v979 = vpop.f32.mrf.mxu0
      %v980 = vadd.f32 0.0, %v979
      %981 = vmatmul.bf16.gmra.mxu0 %v444
      %v982 = vpop.f32.mrf.mxu0
      %v983 = vadd.f32 0.0, %v982
      %v984 = vpop.f32.mrf.mxu0
      %v985 = vadd.f32 0.0, %v984
      %986 = vmatmul.bf16.gmra.mxu0 %v447
      %v987 = vpop.f32.mrf.mxu0
      %v988 = vadd.f32 0.0, %v987
      %v989 = vpop.f32.mrf.mxu0
      %v990 = vadd.f32 0.0, %v989
      %991 = vmatmul.bf16.gmra.mxu0 %v450
      %v992 = vpop.f32.mrf.mxu0
      %v993 = vadd.f32 0.0, %v992
      %v994 = vpop.f32.mrf.mxu0
      %v995 = vadd.f32 0.0, %v994
      %996 = vmatmul.bf16.gmra.mxu0 %v453
      %v997 = vpop.f32.mrf.mxu0
      %v998 = vadd.f32 0.0, %v997
      %v999 = vpop.f32.mrf.mxu0
      %v1000 = vadd.f32 0.0, %v999
      %1001 = vmatmul.bf16.gmra.mxu0 %v456
      %v1002 = vpop.f32.mrf.mxu0
      %v1003 = vadd.f32 0.0, %v1002
      %v1004 = vpop.f32.mrf.mxu0
      %v1005 = vadd.f32 0.0, %v1004
      %1006 = vmatmul.bf16.gmra.mxu0 %v459
      %v1007 = vpop.f32.mrf.mxu0
      %v1008 = vadd.f32 0.0, %v1007
      %v1009 = vpop.f32.mrf.mxu0
      %v1010 = vadd.f32 0.0, %v1009
      %1011 = vmatmul.bf16.gmra.mxu0 %v462
      %v1012 = vpop.f32.mrf.mxu0
      %v1013 = vadd.f32 0.0, %v1012
      %v1014 = vpop.f32.mrf.mxu0
      %v1015 = vadd.f32 0.0, %v1014
      %1016 = vmatmul.bf16.gmra.mxu0 %v465
      %v1017 = vpop.f32.mrf.mxu0
      %v1018 = vadd.f32 0.0, %v1017
      %v1019 = vpop.f32.mrf.mxu0
      %v1020 = vadd.f32 0.0, %v1019
      %1021 = vmatmul.bf16.gmra.mxu0 %v468
      %v1022 = vpop.f32.mrf.mxu0
      %v1023 = vadd.f32 0.0, %v1022
      %v1024 = vpop.f32.mrf.mxu0
      %v1025 = vadd.f32 0.0, %v1024
      %1026 = vmatmul.bf16.gmra.mxu0 %v471
      %v1027 = vpop.f32.mrf.mxu0
      %v1028 = vadd.f32 0.0, %v1027
      %v1029 = vpop.f32.mrf.mxu0
      %v1030 = vadd.f32 0.0, %v1029
      %1031 = vmatmul.bf16.gmra.mxu0 %v474
      %v1032 = vpop.f32.mrf.mxu0
      %v1033 = vadd.f32 0.0, %v1032
      %v1034 = vpop.f32.mrf.mxu0
      %v1035 = vadd.f32 0.0, %v1034
      %1036 = vmatmul.bf16.gmra.mxu0 %v477
      %v1037 = vpop.f32.mrf.mxu0
      %v1038 = vadd.f32 0.0, %v1037
      %v1039 = vpop.f32.mrf.mxu0
      %v1040 = vadd.f32 0.0, %v1039
      %1041 = vmatmul.bf16.gmra.mxu0 %v480
      %v1042 = vpop.f32.mrf.mxu0
      %v1043 = vadd.f32 0.0, %v1042
      %v1044 = vpop.f32.mrf.mxu0
      %v1045 = vadd.f32 0.0, %v1044
      %1046 = vmatmul.bf16.gmra.mxu0 %v483
      %v1047 = vpop.f32.mrf.mxu0
      %v1048 = vadd.f32 0.0, %v1047
      %v1049 = vpop.f32.mrf.mxu0
      %v1050 = vadd.f32 0.0, %v1049
      %1051 = vmatmul.bf16.gmra.mxu0 %v486
      %v1052 = vpop.f32.mrf.mxu0
      %v1053 = vadd.f32 0.0, %v1052
      %v1054 = vpop.f32.mrf.mxu0
      %v1055 = vadd.f32 0.0, %v1054
      %1056 = vmatmul.bf16.gmra.mxu0 %v489
      %v1057 = vpop.f32.mrf.mxu0
      %v1058 = vadd.f32 0.0, %v1057
      %v1059 = vpop.f32.mrf.mxu0
      %v1060 = vadd.f32 0.0, %v1059
      %1061 = vmatmul.bf16.gmra.mxu0 %v492
      %v1062 = vpop.f32.mrf.mxu0
      %v1063 = vadd.f32 0.0, %v1062
      %v1064 = vpop.f32.mrf.mxu0
      %v1065 = vadd.f32 0.0, %v1064
      %1066 = vmatmul.bf16.gmra.mxu0 %v495
      %v1067 = vpop.f32.mrf.mxu0
      %v1068 = vadd.f32 0.0, %v1067
      %v1069 = vpop.f32.mrf.mxu0
      %v1070 = vadd.f32 0.0, %v1069
      %1071 = vmatmul.bf16.gmra.mxu0 %v498
      %v1072 = vpop.f32.mrf.mxu0
      %v1073 = vadd.f32 0.0, %v1072
      %v1074 = vpop.f32.mrf.mxu0
      %v1075 = vadd.f32 0.0, %v1074
      %1076 = vmatmul.bf16.gmra.mxu0 %v501
      %v1077 = vpop.f32.mrf.mxu0
      %v1078 = vadd.f32 0.0, %v1077
      %v1079 = vpop.f32.mrf.mxu0
      %v1080 = vadd.f32 0.0, %v1079
      %1081 = vmatmul.bf16.gmra.mxu0 %v504
      %v1082 = vpop.f32.mrf.mxu0
      %v1083 = vadd.f32 0.0, %v1082
      %v1084 = vpop.f32.mrf.mxu0
      %v1085 = vadd.f32 0.0, %v1084
      %1086 = vmatmul.bf16.gmra.mxu0 %v507
      %v1087 = vpop.f32.mrf.mxu0
      %v1088 = vadd.f32 0.0, %v1087
      %v1089 = vpop.f32.mrf.mxu0
      %v1090 = vadd.f32 0.0, %v1089
      %1091 = vmatmul.bf16.gmra.mxu0 %v510
      %v1092 = vpop.f32.mrf.mxu0
      %v1093 = vadd.f32 0.0, %v1092
      %v1094 = vpop.f32.mrf.mxu0
      %v1095 = vadd.f32 0.0, %v1094
      %1096 = vmatmul.bf16.gmra.mxu0 %v513
      %v1097 = vpop.f32.mrf.mxu0
      %v1098 = vadd.f32 0.0, %v1097
      %v1099 = vpop.f32.mrf.mxu0
      %v1100 = vadd.f32 0.0, %v1099
      %1101 = vmatmul.bf16.gmra.mxu0 %v516
      %v1102 = vpop.f32.mrf.mxu0
      %v1103 = vadd.f32 0.0, %v1102
      %v1104 = vpop.f32.mrf.mxu0
      %v1105 = vadd.f32 0.0, %v1104
      %1106 = vmatmul.bf16.gmra.mxu0 %v519
      %v1107 = vpop.f32.mrf.mxu0
      %v1108 = vadd.f32 0.0, %v1107
      %v1109 = vpop.f32.mrf.mxu0
      %v1110 = vadd.f32 0.0, %v1109
      %1111 = vmatmul.bf16.gmra.mxu0 %v522
      %v1112 = vpop.f32.mrf.mxu0
      %v1113 = vadd.f32 0.0, %v1112
      %v1114 = vpop.f32.mrf.mxu0
      %v1115 = vadd.f32 0.0, %v1114
      %1116 = vmatmul.bf16.gmra.mxu0 %v525
      %v1117 = vpop.f32.mrf.mxu0
      %v1118 = vadd.f32 0.0, %v1117
      %v1119 = vpop.f32.mrf.mxu0
      %v1120 = vadd.f32 0.0, %v1119
      %1121 = vmatmul.bf16.gmra.mxu0 %v528
      %v1122 = vpop.f32.mrf.mxu0
      %v1123 = vadd.f32 0.0, %v1122
      %v1124 = vpop.f32.mrf.mxu0
      %v1125 = vadd.f32 0.0, %v1124
      %1126 = vmatmul.bf16.gmra.mxu0 %v531
      %v1127 = vpop.f32.mrf.mxu0
      %v1128 = vadd.f32 0.0, %v1127
      %v1129 = vpop.f32.mrf.mxu0
      %v1130 = vadd.f32 0.0, %v1129
      %1131 = vmatmul.bf16.gmra.mxu0 %v534
      %v1132 = vpop.f32.mrf.mxu0
      %v1133 = vadd.f32 0.0, %v1132
      %v1134 = vpop.f32.mrf.mxu0
      %v1135 = vadd.f32 0.0, %v1134
      %1136 = vmatmul.bf16.gmra.mxu0 %v537
      %v1137 = vpop.f32.mrf.mxu0
      %v1138 = vadd.f32 0.0, %v1137
      %v1139 = vpop.f32.mrf.mxu0
      %v1140 = vadd.f32 0.0, %v1139
      %1141 = vmatmul.bf16.gmra.mxu0 %v540
      %v1142 = vpop.f32.mrf.mxu0
      %v1143 = vadd.f32 0.0, %v1142
      %v1144 = vpop.f32.mrf.mxu0
      %v1145 = vadd.f32 0.0, %v1144
      %1146 = vmatmul.bf16.gmra.mxu0 %v543
      %v1147 = vpop.f32.mrf.mxu0
      %v1148 = vadd.f32 0.0, %v1147
      %v1149 = vpop.f32.mrf.mxu0
      %v1150 = vadd.f32 0.0, %v1149
      %1151 = vmatmul.bf16.gmra.mxu0 %v546
      %v1152 = vpop.f32.mrf.mxu0
      %v1153 = vadd.f32 0.0, %v1152
      %v1154 = vpop.f32.mrf.mxu0
      %v1155 = vadd.f32 0.0, %v1154
      %1156 = vmatmul.bf16.gmra.mxu0 %v549
      %v1157 = vpop.f32.mrf.mxu0
      %v1158 = vadd.f32 0.0, %v1157
      %v1159 = vpop.f32.mrf.mxu0
      %v1160 = vadd.f32 0.0, %v1159
      %1161 = vmatmul.bf16.gmra.mxu0 %v552
      %v1162 = vpop.f32.mrf.mxu0
      %v1163 = vadd.f32 0.0, %v1162
      %v1164 = vpop.f32.mrf.mxu0
      %v1165 = vadd.f32 0.0, %v1164
      %1166 = vmatmul.bf16.gmra.mxu0 %v555
      %v1167 = vpop.f32.mrf.mxu0
      %v1168 = vadd.f32 0.0, %v1167
      %v1169 = vpop.f32.mrf.mxu0
      %v1170 = vadd.f32 0.0, %v1169
      %1171 = vmatmul.bf16.gmra.mxu0 %v558
      %v1172 = vpop.f32.mrf.mxu0
      %v1173 = vadd.f32 0.0, %v1172
      %v1174 = vpop.f32.mrf.mxu0
      %v1175 = vadd.f32 0.0, %v1174
      %1176 = vmatmul.bf16.gmra.mxu0 %v561
      %v1177 = vpop.f32.mrf.mxu0
      %v1178 = vadd.f32 0.0, %v1177
      %v1179 = vpop.f32.mrf.mxu0
      %v1180 = vadd.f32 0.0, %v1179
      %1181 = vmatmul.bf16.gmra.mxu0 %v564
      %v1182 = vpop.f32.mrf.mxu0
      %v1183 = vadd.f32 0.0, %v1182
      %v1184 = vpop.f32.mrf.mxu0
      %v1185 = vadd.f32 0.0, %v1184
      %1186 = vmatmul.bf16.gmra.mxu0 %v567
      %v1187 = vpop.f32.mrf.mxu0
      %v1188 = vadd.f32 0.0, %v1187
      %v1189 = vpop.f32.mrf.mxu0
      %v1190 = vadd.f32 0.0, %v1189
      %1191 = vmatmul.bf16.gmra.mxu0 %v570
      %v1192 = vpop.f32.mrf.mxu0
      %v1193 = vadd.f32 0.0, %v1192
      %v1194 = vpop.f32.mrf.mxu0
      %v1195 = vadd.f32 0.0, %v1194
      %1196 = vmatmul.bf16.gmra.mxu0 %v573
      %v1197 = vpop.f32.mrf.mxu0
      %v1198 = vadd.f32 0.0, %v1197
      %v1199 = vpop.f32.mrf.mxu0
      %v1200 = vadd.f32 0.0, %v1199
      %1201 = vmatmul.bf16.gmra.mxu0 %v576
      %v1202 = vpop.f32.mrf.mxu0
      %v1203 = vadd.f32 0.0, %v1202
      %v1204 = vpop.f32.mrf.mxu0
      %v1205 = vadd.f32 0.0, %v1204
      %1206 = vmatmul.bf16.gmra.mxu0 %v579
      %v1207 = vpop.f32.mrf.mxu0
      %v1208 = vadd.f32 0.0, %v1207
      %v1209 = vpop.f32.mrf.mxu0
      %v1210 = vadd.f32 0.0, %v1209
      %1211 = vmatmul.bf16.gmra.mxu0 %v582
      %v1212 = vpop.f32.mrf.mxu0
      %v1213 = vadd.f32 0.0, %v1212
      %v1214 = vpop.f32.mrf.mxu0
      %v1215 = vadd.f32 0.0, %v1214
      %1216 = vmatmul.bf16.gmra.mxu0 %v585
      %v1217 = vpop.f32.mrf.mxu0
      %v1218 = vadd.f32 0.0, %v1217
      %v1219 = vpop.f32.mrf.mxu0
      %v1220 = vadd.f32 0.0, %v1219
      %1221 = vmatmul.bf16.gmra.mxu0 %v588
      %v1222 = vpop.f32.mrf.mxu0
      %v1223 = vadd.f32 0.0, %v1222
      %v1224 = vpop.f32.mrf.mxu0
      %v1225 = vadd.f32 0.0, %v1224
      %1226 = vmatmul.bf16.gmra.mxu0 %v591
      %v1227 = vpop.f32.mrf.mxu0
      %v1228 = vadd.f32 0.0, %v1227
      %v1229 = vpop.f32.mrf.mxu0
      %v1230 = vadd.f32 0.0, %v1229
      %1231 = vmatmul.bf16.gmra.mxu0 %v594
      %v1232 = vpop.f32.mrf.mxu0
      %v1233 = vadd.f32 0.0, %v1232
      %v1234 = vpop.f32.mrf.mxu0
      %v1235 = vadd.f32 0.0, %v1234
      %1236 = vmatmul.bf16.gmra.mxu0 %v597
      %v1237 = vpop.f32.mrf.mxu0
      %v1238 = vadd.f32 0.0, %v1237
      %v1239 = vpop.f32.mrf.mxu0
      %v1240 = vadd.f32 0.0, %v1239
      %1241 = vmatmul.bf16.gmra.mxu0 %v600
      %v1242 = vpop.f32.mrf.mxu0
      %v1243 = vadd.f32 0.0, %v1242
      %v1244 = vpop.f32.mrf.mxu0
      %v1245 = vadd.f32 0.0, %v1244
      %1246 = vmatmul.bf16.gmra.mxu0 %v603
      %v1247 = vpop.f32.mrf.mxu0
      %v1248 = vadd.f32 0.0, %v1247
      %v1249 = vpop.f32.mrf.mxu0
      %v1250 = vadd.f32 0.0, %v1249
      %1251 = vmatmul.bf16.gmra.mxu0 %v606
      %v1252 = vpop.f32.mrf.mxu0
      %v1253 = vadd.f32 0.0, %v1252
      %v1254 = vpop.f32.mrf.mxu0
      %v1255 = vadd.f32 0.0, %v1254
      %1256 = vmatmul.bf16.gmra.mxu0 %v609
      %v1257 = vpop.f32.mrf.mxu0
      %v1258 = vadd.f32 0.0, %v1257
      %v1259 = vpop.f32.mrf.mxu0
      %v1260 = vadd.f32 0.0, %v1259
      %1261 = vmatmul.bf16.gmra.mxu0 %v612
      %v1262 = vpop.f32.mrf.mxu0
      %v1263 = vadd.f32 0.0, %v1262
      %v1264 = vpop.f32.mrf.mxu0
      %v1265 = vadd.f32 0.0, %v1264
      %1266 = vmatmul.bf16.gmra.mxu0 %v615
      %v1267 = vpop.f32.mrf.mxu0
      %v1268 = vadd.f32 0.0, %v1267
      %v1269 = vpop.f32.mrf.mxu0
      %v1270 = vadd.f32 0.0, %v1269
      %1271 = vmatmul.bf16.gmra.mxu0 %v618
      %v1272 = vpop.f32.mrf.mxu0
      %v1273 = vadd.f32 0.0, %v1272
      %v1274 = vpop.f32.mrf.mxu0
      %v1275 = vadd.f32 0.0, %v1274
      %1276 = vmatmul.bf16.gmra.mxu0 %v621
      %v1277 = vpop.f32.mrf.mxu0
      %v1278 = vadd.f32 0.0, %v1277
      %v1279 = vpop.f32.mrf.mxu0
      %v1280 = vadd.f32 0.0, %v1279
      %1281 = vmatmul.bf16.gmra.mxu0 %v624
      %v1282 = vpop.f32.mrf.mxu0
      %v1283 = vadd.f32 0.0, %v1282
      %v1284 = vpop.f32.mrf.mxu0
      %v1285 = vadd.f32 0.0, %v1284
      %1286 = vmatmul.bf16.gmra.mxu0 %v627
      %v1287 = vpop.f32.mrf.mxu0
      %v1288 = vadd.f32 0.0, %v1287
      %v1289 = vpop.f32.mrf.mxu0
      %v1290 = vadd.f32 0.0, %v1289
      %1291 = vmatmul.bf16.gmra.mxu0 %v630
      %v1292 = vpop.f32.mrf.mxu0
      %v1293 = vadd.f32 0.0, %v1292
      %v1294 = vpop.f32.mrf.mxu0
      %v1295 = vadd.f32 0.0, %v1294
      %1296 = vdwg.mxu0
      %v1297 = vmax.f32 %v649, 0.0
      %v1298 = vmax.f32 %v978, 0.0
      %v1299 = vmax.f32 %v651, 0.0
      %v1300 = vmax.f32 %v980, 0.0
      %v1301 = vmax.f32 %v654, 0.0
      %v1302 = vmax.f32 %v983, 0.0
      %v1303 = vmax.f32 %v656, 0.0
      %v1304 = vmax.f32 %v985, 0.0
      %v1305 = vmax.f32 %v659, 0.0
      %v1306 = vmax.f32 %v988, 0.0
      %v1307 = vmax.f32 %v661, 0.0
      %v1308 = vmax.f32 %v990, 0.0
      %v1309 = vmax.f32 %v664, 0.0
      %v1310 = vmax.f32 %v993, 0.0
      %v1311 = vmax.f32 %v666, 0.0
      %v1312 = vmax.f32 %v995, 0.0
      %v1313 = vmax.f32 %v669, 0.0
      %v1314 = vmax.f32 %v998, 0.0
      %v1315 = vmax.f32 %v671, 0.0
      %v1316 = vmax.f32 %v1000, 0.0
      %v1317 = vmax.f32 %v674, 0.0
      %v1318 = vmax.f32 %v1003, 0.0
      %v1319 = vmax.f32 %v676, 0.0
      %v1320 = vmax.f32 %v1005, 0.0
      %v1321 = vmax.f32 %v679, 0.0
      %v1322 = vmax.f32 %v1008, 0.0
      %v1323 = vmax.f32 %v681, 0.0
      %v1324 = vmax.f32 %v1010, 0.0
      %v1325 = vmax.f32 %v684, 0.0
      %v1326 = vmax.f32 %v1013, 0.0
      %v1327 = vmax.f32 %v686, 0.0
      %v1328 = vmax.f32 %v1015, 0.0
      %v1329 = vmax.f32 %v689, 0.0
      %v1330 = vmax.f32 %v1018, 0.0
      %v1331 = vmax.f32 %v691, 0.0
      %v1332 = vmax.f32 %v1020, 0.0
      %v1333 = vmax.f32 %v694, 0.0
      %v1334 = vmax.f32 %v1023, 0.0
      %v1335 = vmax.f32 %v696, 0.0
      %v1336 = vmax.f32 %v1025, 0.0
      %v1337 = vmax.f32 %v699, 0.0
      %v1338 = vmax.f32 %v1028, 0.0
      %v1339 = vmax.f32 %v701, 0.0
      %v1340 = vmax.f32 %v1030, 0.0
      %v1341 = vmax.f32 %v704, 0.0
      %v1342 = vmax.f32 %v1033, 0.0
      %v1343 = vmax.f32 %v706, 0.0
      %v1344 = vmax.f32 %v1035, 0.0
      %v1345 = vmax.f32 %v709, 0.0
      %v1346 = vmax.f32 %v1038, 0.0
      %v1347 = vmax.f32 %v711, 0.0
      %v1348 = vmax.f32 %v1040, 0.0
      %v1349 = vmax.f32 %v714, 0.0
      %v1350 = vmax.f32 %v1043, 0.0
      %v1351 = vmax.f32 %v716, 0.0
      %v1352 = vmax.f32 %v1045, 0.0
      %v1353 = vmax.f32 %v719, 0.0
      %v1354 = vmax.f32 %v1048, 0.0
      %v1355 = vmax.f32 %v721, 0.0
      %v1356 = vmax.f32 %v1050, 0.0
      %v1357 = vmax.f32 %v724, 0.0
      %v1358 = vmax.f32 %v1053, 0.0
      %v1359 = vmax.f32 %v726, 0.0
      %v1360 = vmax.f32 %v1055, 0.0
      %v1361 = vmax.f32 %v729, 0.0
      %v1362 = vmax.f32 %v1058, 0.0
      %v1363 = vmax.f32 %v731, 0.0
      %v1364 = vmax.f32 %v1060, 0.0
      %v1365 = vmax.f32 %v734, 0.0
      %v1366 = vmax.f32 %v1063, 0.0
      %v1367 = vmax.f32 %v736, 0.0
      %v1368 = vmax.f32 %v1065, 0.0
      %v1369 = vmax.f32 %v739, 0.0
      %v1370 = vmax.f32 %v1068, 0.0
      %v1371 = vmax.f32 %v741, 0.0
      %v1372 = vmax.f32 %v1070, 0.0
      %v1373 = vmax.f32 %v744, 0.0
      %v1374 = vmax.f32 %v1073, 0.0
      %v1375 = vmax.f32 %v746, 0.0
      %v1376 = vmax.f32 %v1075, 0.0
      %v1377 = vmax.f32 %v749, 0.0
      %v1378 = vmax.f32 %v1078, 0.0
      %v1379 = vmax.f32 %v751, 0.0
      %v1380 = vmax.f32 %v1080, 0.0
      %v1381 = vmax.f32 %v754, 0.0
      %v1382 = vmax.f32 %v1083, 0.0
      %v1383 = vmax.f32 %v756, 0.0
      %v1384 = vmax.f32 %v1085, 0.0
      %v1385 = vmax.f32 %v759, 0.0
      %v1386 = vmax.f32 %v1088, 0.0
      %v1387 = vmax.f32 %v761, 0.0
      %v1388 = vmax.f32 %v1090, 0.0
      %v1389 = vmax.f32 %v764, 0.0
      %v1390 = vmax.f32 %v1093, 0.0
      %v1391 = vmax.f32 %v766, 0.0
      %v1392 = vmax.f32 %v1095, 0.0
      %v1393 = vmax.f32 %v769, 0.0
      %v1394 = vmax.f32 %v1098, 0.0
      %v1395 = vmax.f32 %v771, 0.0
      %v1396 = vmax.f32 %v1100, 0.0
      %v1397 = vmax.f32 %v774, 0.0
      %v1398 = vmax.f32 %v1103, 0.0
      %v1399 = vmax.f32 %v776, 0.0
      %v1400 = vmax.f32 %v1105, 0.0
      %v1401 = vmax.f32 %v779, 0.0
      %v1402 = vmax.f32 %v1108, 0.0
      %v1403 = vmax.f32 %v781, 0.0
      %v1404 = vmax.f32 %v1110, 0.0
      %v1405 = vmax.f32 %v784, 0.0
      %v1406 = vmax.f32 %v1113, 0.0
      %v1407 = vmax.f32 %v786, 0.0
      %v1408 = vmax.f32 %v1115, 0.0
      %v1409 = vmax.f32 %v789, 0.0
      %v1410 = vmax.f32 %v1118, 0.0
      %v1411 = vmax.f32 %v791, 0.0
      %v1412 = vmax.f32 %v1120, 0.0
      %v1413 = vmax.f32 %v794, 0.0
      %v1414 = vmax.f32 %v1123, 0.0
      %v1415 = vmax.f32 %v796, 0.0
      %v1416 = vmax.f32 %v1125, 0.0
      %v1417 = vmax.f32 %v799, 0.0
      %v1418 = vmax.f32 %v1128, 0.0
      %v1419 = vmax.f32 %v801, 0.0
      %v1420 = vmax.f32 %v1130, 0.0
      %v1421 = vmax.f32 %v804, 0.0
      %v1422 = vmax.f32 %v1133, 0.0
      %v1423 = vmax.f32 %v806, 0.0
      %v1424 = vmax.f32 %v1135, 0.0
      %v1425 = vmax.f32 %v809, 0.0
      %v1426 = vmax.f32 %v1138, 0.0
      %v1427 = vmax.f32 %v811, 0.0
      %v1428 = vmax.f32 %v1140, 0.0
      %v1429 = vmax.f32 %v814, 0.0
      %v1430 = vmax.f32 %v1143, 0.0
      %v1431 = vmax.f32 %v816, 0.0
      %v1432 = vmax.f32 %v1145, 0.0
      %v1433 = vmax.f32 %v819, 0.0
      %v1434 = vmax.f32 %v1148, 0.0
      %v1435 = vmax.f32 %v821, 0.0
      %v1436 = vmax.f32 %v1150, 0.0
      %v1437 = vmax.f32 %v824, 0.0
      %v1438 = vmax.f32 %v1153, 0.0
      %v1439 = vmax.f32 %v826, 0.0
      %v1440 = vmax.f32 %v1155, 0.0
      %v1441 = vmax.f32 %v829, 0.0
      %v1442 = vmax.f32 %v1158, 0.0
      %v1443 = vmax.f32 %v831, 0.0
      %v1444 = vmax.f32 %v1160, 0.0
      %v1445 = vmax.f32 %v834, 0.0
      %v1446 = vmax.f32 %v1163, 0.0
      %v1447 = vmax.f32 %v836, 0.0
      %v1448 = vmax.f32 %v1165, 0.0
      %v1449 = vmax.f32 %v839, 0.0
      %v1450 = vmax.f32 %v1168, 0.0
      %v1451 = vmax.f32 %v841, 0.0
      %v1452 = vmax.f32 %v1170, 0.0
      %v1453 = vmax.f32 %v844, 0.0
      %v1454 = vmax.f32 %v1173, 0.0
      %v1455 = vmax.f32 %v846, 0.0
      %v1456 = vmax.f32 %v1175, 0.0
      %v1457 = vmax.f32 %v849, 0.0
      %v1458 = vmax.f32 %v1178, 0.0
      %v1459 = vmax.f32 %v851, 0.0
      %v1460 = vmax.f32 %v1180, 0.0
      %v1461 = vmax.f32 %v854, 0.0
      %v1462 = vmax.f32 %v1183, 0.0
      %v1463 = vmax.f32 %v856, 0.0
      %v1464 = vmax.f32 %v1185, 0.0
      %v1465 = vmax.f32 %v859, 0.0
      %v1466 = vmax.f32 %v1188, 0.0
      %v1467 = vmax.f32 %v861, 0.0
      %v1468 = vmax.f32 %v1190, 0.0
      %v1469 = vmax.f32 %v864, 0.0
      %v1470 = vmax.f32 %v1193, 0.0
      %v1471 = vmax.f32 %v866, 0.0
      %v1472 = vmax.f32 %v1195, 0.0
      %v1473 = vmax.f32 %v869, 0.0
      %v1474 = vmax.f32 %v1198, 0.0
      %v1475 = vmax.f32 %v871, 0.0
      %v1476 = vmax.f32 %v1200, 0.0
      %v1477 = vmax.f32 %v874, 0.0
      %v1478 = vmax.f32 %v1203, 0.0
      %v1479 = vmax.f32 %v876, 0.0
      %v1480 = vmax.f32 %v1205, 0.0
      %v1481 = vmax.f32 %v879, 0.0
      %v1482 = vmax.f32 %v1208, 0.0
      %v1483 = vmax.f32 %v881, 0.0
      %v1484 = vmax.f32 %v1210, 0.0
      %v1485 = vmax.f32 %v884, 0.0
      %v1486 = vmax.f32 %v1213, 0.0
      %v1487 = vmax.f32 %v886, 0.0
      %v1488 = vmax.f32 %v1215, 0.0
      %v1489 = vmax.f32 %v889, 0.0
      %v1490 = vmax.f32 %v1218, 0.0
      %v1491 = vmax.f32 %v891, 0.0
      %v1492 = vmax.f32 %v1220, 0.0
      %v1493 = vmax.f32 %v894, 0.0
      %v1494 = vmax.f32 %v1223, 0.0
      %v1495 = vmax.f32 %v896, 0.0
      %v1496 = vmax.f32 %v1225, 0.0
      %v1497 = vmax.f32 %v899, 0.0
      %v1498 = vmax.f32 %v1228, 0.0
      %v1499 = vmax.f32 %v901, 0.0
      %v1500 = vmax.f32 %v1230, 0.0
      %v1501 = vmax.f32 %v904, 0.0
      %v1502 = vmax.f32 %v1233, 0.0
      %v1503 = vmax.f32 %v906, 0.0
      %v1504 = vmax.f32 %v1235, 0.0
      %v1505 = vmax.f32 %v909, 0.0
      %v1506 = vmax.f32 %v1238, 0.0
      %v1507 = vmax.f32 %v911, 0.0
      %v1508 = vmax.f32 %v1240, 0.0
      %v1509 = vmax.f32 %v914, 0.0
      %v1510 = vmax.f32 %v1243, 0.0
      %v1511 = vmax.f32 %v916, 0.0
      %v1512 = vmax.f32 %v1245, 0.0
      %v1513 = vmax.f32 %v919, 0.0
      %v1514 = vmax.f32 %v1248, 0.0
      %v1515 = vmax.f32 %v921, 0.0
      %v1516 = vmax.f32 %v1250, 0.0
      %v1517 = vmax.f32 %v924, 0.0
      %v1518 = vmax.f32 %v1253, 0.0
      %v1519 = vmax.f32 %v926, 0.0
      %v1520 = vmax.f32 %v1255, 0.0
      %v1521 = vmax.f32 %v929, 0.0
      %v1522 = vmax.f32 %v1258, 0.0
      %v1523 = vmax.f32 %v931, 0.0
      %v1524 = vmax.f32 %v1260, 0.0
      %v1525 = vmax.f32 %v934, 0.0
      %v1526 = vmax.f32 %v1263, 0.0
      %v1527 = vmax.f32 %v936, 0.0
      %v1528 = vmax.f32 %v1265, 0.0
      %v1529 = vmax.f32 %v939, 0.0
      %v1530 = vmax.f32 %v1268, 0.0
      %v1531 = vmax.f32 %v941, 0.0
      %v1532 = vmax.f32 %v1270, 0.0
      %v1533 = vmax.f32 %v944, 0.0
      %v1534 = vmax.f32 %v1273, 0.0
      %v1535 = vmax.f32 %v946, 0.0
      %v1536 = vmax.f32 %v1275, 0.0
      %v1537 = vmax.f32 %v949, 0.0
      %v1538 = vmax.f32 %v1278, 0.0
      %v1539 = vmax.f32 %v951, 0.0
      %v1540 = vmax.f32 %v1280, 0.0
      %v1541 = vmax.f32 %v954, 0.0
      %v1542 = vmax.f32 %v1283, 0.0
      %v1543 = vmax.f32 %v956, 0.0
      %v1544 = vmax.f32 %v1285, 0.0
      %v1545 = vmax.f32 %v959, 0.0
      %v1546 = vmax.f32 %v1288, 0.0
      %v1547 = vmax.f32 %v961, 0.0
      %v1548 = vmax.f32 %v1290, 0.0
      %v1549 = vmax.f32 %v964, 0.0
      %v1550 = vmax.f32 %v1293, 0.0
      %v1551 = vmax.f32 %v966, 0.0
      %v1552 = vmax.f32 %v1295, 0.0
      %v1553 = vpack.c.bf16 %v1299, %v1297
      %v1554 = vpack.c.bf16 %v1300, %v1298
      %v1555 = vpack.c.bf16 %v1303, %v1301
      %v1556 = vpack.c.bf16 %v1304, %v1302
      %v1557 = vpack.c.bf16 %v1307, %v1305
      %v1558 = vpack.c.bf16 %v1308, %v1306
      %v1559 = vpack.c.bf16 %v1311, %v1309
      %v1560 = vpack.c.bf16 %v1312, %v1310
      %v1561 = vpack.c.bf16 %v1315, %v1313
      %v1562 = vpack.c.bf16 %v1316, %v1314
      %v1563 = vpack.c.bf16 %v1319, %v1317
      %v1564 = vpack.c.bf16 %v1320, %v1318
      %v1565 = vpack.c.bf16 %v1323, %v1321
      %v1566 = vpack.c.bf16 %v1324, %v1322
      %v1567 = vpack.c.bf16 %v1327, %v1325
      %v1568 = vpack.c.bf16 %v1328, %v1326
      %v1569 = vpack.c.bf16 %v1331, %v1329
      %v1570 = vpack.c.bf16 %v1332, %v1330
      %v1571 = vpack.c.bf16 %v1335, %v1333
      %v1572 = vpack.c.bf16 %v1336, %v1334
      %v1573 = vpack.c.bf16 %v1339, %v1337
      %v1574 = vpack.c.bf16 %v1340, %v1338
      %v1575 = vpack.c.bf16 %v1343, %v1341
      %v1576 = vpack.c.bf16 %v1344, %v1342
      %v1577 = vpack.c.bf16 %v1347, %v1345
      %v1578 = vpack.c.bf16 %v1348, %v1346
      %v1579 = vpack.c.bf16 %v1351, %v1349
      %v1580 = vpack.c.bf16 %v1352, %v1350
      %v1581 = vpack.c.bf16 %v1355, %v1353
      %v1582 = vpack.c.bf16 %v1356, %v1354
      %v1583 = vpack.c.bf16 %v1359, %v1357
      %v1584 = vpack.c.bf16 %v1360, %v1358
      %v1585 = vpack.c.bf16 %v1363, %v1361
      %v1586 = vpack.c.bf16 %v1364, %v1362
      %v1587 = vpack.c.bf16 %v1367, %v1365
      %v1588 = vpack.c.bf16 %v1368, %v1366
      %v1589 = vpack.c.bf16 %v1371, %v1369
      %v1590 = vpack.c.bf16 %v1372, %v1370
      %v1591 = vpack.c.bf16 %v1375, %v1373
      %v1592 = vpack.c.bf16 %v1376, %v1374
      %v1593 = vpack.c.bf16 %v1379, %v1377
      %v1594 = vpack.c.bf16 %v1380, %v1378
      %v1595 = vpack.c.bf16 %v1383, %v1381
      %v1596 = vpack.c.bf16 %v1384, %v1382
      %v1597 = vpack.c.bf16 %v1387, %v1385
      %v1598 = vpack.c.bf16 %v1388, %v1386
      %v1599 = vpack.c.bf16 %v1391, %v1389
      %v1600 = vpack.c.bf16 %v1392, %v1390
      %v1601 = vpack.c.bf16 %v1395, %v1393
      %v1602 = vpack.c.bf16 %v1396, %v1394
      %v1603 = vpack.c.bf16 %v1399, %v1397
      %v1604 = vpack.c.bf16 %v1400, %v1398
      %v1605 = vpack.c.bf16 %v1403, %v1401
      %v1606 = vpack.c.bf16 %v1404, %v1402
      %v1607 = vpack.c.bf16 %v1407, %v1405
      %v1608 = vpack.c.bf16 %v1408, %v1406
      %v1609 = vpack.c.bf16 %v1411, %v1409
      %v1610 = vpack.c.bf16 %v1412, %v1410
      %v1611 = vpack.c.bf16 %v1415, %v1413
      %v1612 = vpack.c.bf16 %v1416, %v1414
      %v1613 = vpack.c.bf16 %v1419, %v1417
      %v1614 = vpack.c.bf16 %v1420, %v1418
      %v1615 = vpack.c.bf16 %v1423, %v1421
      %v1616 = vpack.c.bf16 %v1424, %v1422
      %v1617 = vpack.c.bf16 %v1427, %v1425
      %v1618 = vpack.c.bf16 %v1428, %v1426
      %v1619 = vpack.c.bf16 %v1431, %v1429
      %v1620 = vpack.c.bf16 %v1432, %v1430
      %v1621 = vpack.c.bf16 %v1435, %v1433
      %v1622 = vpack.c.bf16 %v1436, %v1434
      %v1623 = vpack.c.bf16 %v1439, %v1437
      %v1624 = vpack.c.bf16 %v1440, %v1438
      %v1625 = vpack.c.bf16 %v1443, %v1441
      %v1626 = vpack.c.bf16 %v1444, %v1442
      %v1627 = vpack.c.bf16 %v1447, %v1445
      %v1628 = vpack.c.bf16 %v1448, %v1446
      %v1629 = vpack.c.bf16 %v1451, %v1449
      %v1630 = vpack.c.bf16 %v1452, %v1450
      %v1631 = vpack.c.bf16 %v1455, %v1453
      %v1632 = vpack.c.bf16 %v1456, %v1454
      %v1633 = vpack.c.bf16 %v1459, %v1457
      %v1634 = vpack.c.bf16 %v1460, %v1458
      %v1635 = vpack.c.bf16 %v1463, %v1461
      %v1636 = vpack.c.bf16 %v1464, %v1462
      %v1637 = vpack.c.bf16 %v1467, %v1465
      %v1638 = vpack.c.bf16 %v1468, %v1466
      %v1639 = vpack.c.bf16 %v1471, %v1469
      %v1640 = vpack.c.bf16 %v1472, %v1470
      %v1641 = vpack.c.bf16 %v1475, %v1473
      %v1642 = vpack.c.bf16 %v1476, %v1474
      %v1643 = vpack.c.bf16 %v1479, %v1477
      %v1644 = vpack.c.bf16 %v1480, %v1478
      %v1645 = vpack.c.bf16 %v1483, %v1481
      %v1646 = vpack.c.bf16 %v1484, %v1482
      %v1647 = vpack.c.bf16 %v1487, %v1485
      %v1648 = vpack.c.bf16 %v1488, %v1486
      %v1649 = vpack.c.bf16 %v1491, %v1489
      %v1650 = vpack.c.bf16 %v1492, %v1490
      %v1651 = vpack.c.bf16 %v1495, %v1493
      %v1652 = vpack.c.bf16 %v1496, %v1494
      %v1653 = vpack.c.bf16 %v1499, %v1497
      %v1654 = vpack.c.bf16 %v1500, %v1498
      %v1655 = vpack.c.bf16 %v1503, %v1501
      %v1656 = vpack.c.bf16 %v1504, %v1502
      %v1657 = vpack.c.bf16 %v1507, %v1505
      %v1658 = vpack.c.bf16 %v1508, %v1506
      %v1659 = vpack.c.bf16 %v1511, %v1509
      %v1660 = vpack.c.bf16 %v1512, %v1510
      %v1661 = vpack.c.bf16 %v1515, %v1513
      %v1662 = vpack.c.bf16 %v1516, %v1514
      %v1663 = vpack.c.bf16 %v1519, %v1517
      %v1664 = vpack.c.bf16 %v1520, %v1518
      %v1665 = vpack.c.bf16 %v1523, %v1521
      %v1666 = vpack.c.bf16 %v1524, %v1522
      %v1667 = vpack.c.bf16 %v1527, %v1525
      %v1668 = vpack.c.bf16 %v1528, %v1526
      %v1669 = vpack.c.bf16 %v1531, %v1529
      %v1670 = vpack.c.bf16 %v1532, %v1530
      %v1671 = vpack.c.bf16 %v1535, %v1533
      %v1672 = vpack.c.bf16 %v1536, %v1534
      %v1673 = vpack.c.bf16 %v1539, %v1537
      %v1674 = vpack.c.bf16 %v1540, %v1538
      %v1675 = vpack.c.bf16 %v1543, %v1541
      %v1676 = vpack.c.bf16 %v1544, %v1542
      %v1677 = vpack.c.bf16 %v1547, %v1545
      %v1678 = vpack.c.bf16 %v1548, %v1546
      %v1679 = vpack.c.bf16 %v1551, %v1549
      %v1680 = vpack.c.bf16 %v1552, %v1550
      %v1681 = vld [vmem:[%s2] sm:$0xff]
      %v1682 = vld [vmem:[%s2 + $0x8] sm:$0xff]
      %v1683 = vld [vmem:[%s2 + $0x10] sm:$0xff]
      %v1684 = vld [vmem:[%s2 + $0x18] sm:$0xff]
      %v1685 = vld [vmem:[%s2 + $0x20] sm:$0xff]
      %v1686 = vld [vmem:[%s2 + $0x28] sm:$0xff]
      %v1687 = vld [vmem:[%s2 + $0x30] sm:$0xff]
      %v1688 = vld [vmem:[%s2 + $0x38] sm:$0xff]
      %v1689 = vld [vmem:[%s2 + $0x40] sm:$0xff]
      %v1690 = vld [vmem:[%s2 + $0x48] sm:$0xff]
      %v1691 = vld [vmem:[%s2 + $0x50] sm:$0xff]
      %v1692 = vld [vmem:[%s2 + $0x58] sm:$0xff]
      %v1693 = vld [vmem:[%s2 + $0x60] sm:$0xff]
      %v1694 = vld [vmem:[%s2 + $0x68] sm:$0xff]
      %v1695 = vld [vmem:[%s2 + $0x70] sm:$0xff]
      %v1696 = vld [vmem:[%s2 + $0x78] sm:$0xff]
      %v1697 = vld [vmem:[%s2 + $0x80] sm:$0xff]
      %v1698 = vld [vmem:[%s2 + $0x88] sm:$0xff]
      %v1699 = vld [vmem:[%s2 + $0x90] sm:$0xff]
      %v1700 = vld [vmem:[%s2 + $0x98] sm:$0xff]
      %v1701 = vld [vmem:[%s2 + $0xa0] sm:$0xff]
      %v1702 = vld [vmem:[%s2 + $0xa8] sm:$0xff]
      %v1703 = vld [vmem:[%s2 + $0xb0] sm:$0xff]
      %v1704 = vld [vmem:[%s2 + $0xb8] sm:$0xff]
      %v1705 = vld [vmem:[%s2 + $0xc0] sm:$0xff]
      %v1706 = vld [vmem:[%s2 + $0xc8] sm:$0xff]
      %v1707 = vld [vmem:[%s2 + $0xd0] sm:$0xff]
      %v1708 = vld [vmem:[%s2 + $0xd8] sm:$0xff]
      %v1709 = vld [vmem:[%s2 + $0xe0] sm:$0xff]
      %v1710 = vld [vmem:[%s2 + $0xe8] sm:$0xff]
      %v1711 = vld [vmem:[%s2 + $0xf0] sm:$0xff]
      %v1712 = vld [vmem:[%s2 + $0xf8] sm:$0xff]
      %v1745 = vunpack.c.l.b16 %v1681
      %v1746 = vunpack.c.h.b16 %v1681
      %v1747 = vunpack.c.l.b16 %v1682
      %v1748 = vunpack.c.h.b16 %v1682
      %v1749 = vunpack.c.l.b16 %v1683
      %v1750 = vunpack.c.h.b16 %v1683
      %v1751 = vunpack.c.l.b16 %v1684
      %v1752 = vunpack.c.h.b16 %v1684
      %v1753 = vunpack.c.l.b16 %v1685
      %v1754 = vunpack.c.h.b16 %v1685
      %v1755 = vunpack.c.l.b16 %v1686
      %v1756 = vunpack.c.h.b16 %v1686
      %v1757 = vunpack.c.l.b16 %v1687
      %v1758 = vunpack.c.h.b16 %v1687
      %v1759 = vunpack.c.l.b16 %v1688
      %v1760 = vunpack.c.h.b16 %v1688
      %v1761 = vunpack.c.l.b16 %v1689
      %v1762 = vunpack.c.h.b16 %v1689
      %v1763 = vunpack.c.l.b16 %v1690
      %v1764 = vunpack.c.h.b16 %v1690
      %v1765 = vunpack.c.l.b16 %v1691
      %v1766 = vunpack.c.h.b16 %v1691
      %v1767 = vunpack.c.l.b16 %v1692
      %v1768 = vunpack.c.h.b16 %v1692
      %v1769 = vunpack.c.l.b16 %v1693
      %v1770 = vunpack.c.h.b16 %v1693
      %v1771 = vunpack.c.l.b16 %v1694
      %v1772 = vunpack.c.h.b16 %v1694
      %v1773 = vunpack.c.l.b16 %v1695
      %v1774 = vunpack.c.h.b16 %v1695
      %v1775 = vunpack.c.l.b16 %v1696
      %v1776 = vunpack.c.h.b16 %v1696
      %v1777 = vunpack.c.l.b16 %v1697
      %v1778 = vunpack.c.h.b16 %v1697
      %v1779 = vunpack.c.l.b16 %v1698
      %v1780 = vunpack.c.h.b16 %v1698
      %v1781 = vunpack.c.l.b16 %v1699
      %v1782 = vunpack.c.h.b16 %v1699
      %v1783 = vunpack.c.l.b16 %v1700
      %v1784 = vunpack.c.h.b16 %v1700
      %v1785 = vunpack.c.l.b16 %v1701
      %v1786 = vunpack.c.h.b16 %v1701
      %v1787 = vunpack.c.l.b16 %v1702
      %v1788 = vunpack.c.h.b16 %v1702
      %v1789 = vunpack.c.l.b16 %v1703
      %v1790 = vunpack.c.h.b16 %v1703
      %v1791 = vunpack.c.l.b16 %v1704
      %v1792 = vunpack.c.h.b16 %v1704
      %v1793 = vunpack.c.l.b16 %v1705
      %v1794 = vunpack.c.h.b16 %v1705
      %v1795 = vunpack.c.l.b16 %v1706
      %v1796 = vunpack.c.h.b16 %v1706
      %v1797 = vunpack.c.l.b16 %v1707
      %v1798 = vunpack.c.h.b16 %v1707
      %v1799 = vunpack.c.l.b16 %v1708
      %v1800 = vunpack.c.h.b16 %v1708
      %v1801 = vunpack.c.l.b16 %v1709
      %v1802 = vunpack.c.h.b16 %v1709
      %v1803 = vunpack.c.l.b16 %v1710
      %v1804 = vunpack.c.h.b16 %v1710
      %v1805 = vunpack.c.l.b16 %v1711
      %v1806 = vunpack.c.h.b16 %v1711
      %v1807 = vunpack.c.l.b16 %v1712
      %v1808 = vunpack.c.h.b16 %v1712
      %v1809 = vpack.c.b16 %v1747, %v1745
      %v1810 = vpack.c.b16 %v1748, %v1746
      %v1811 = vpack.c.b16 %v1751, %v1749
      %v1812 = vpack.c.b16 %v1752, %v1750
      %v1813 = vpack.c.b16 %v1755, %v1753
      %v1814 = vpack.c.b16 %v1756, %v1754
      %v1815 = vpack.c.b16 %v1759, %v1757
      %v1816 = vpack.c.b16 %v1760, %v1758
      %v1817 = vpack.c.b16 %v1763, %v1761
      %v1818 = vpack.c.b16 %v1764, %v1762
      %v1819 = vpack.c.b16 %v1767, %v1765
      %v1820 = vpack.c.b16 %v1768, %v1766
      %v1821 = vpack.c.b16 %v1771, %v1769
      %v1822 = vpack.c.b16 %v1772, %v1770
      %v1823 = vpack.c.b16 %v1775, %v1773
      %v1824 = vpack.c.b16 %v1776, %v1774
      %v1825 = vpack.c.b16 %v1779, %v1777
      %v1826 = vpack.c.b16 %v1780, %v1778
      %v1827 = vpack.c.b16 %v1783, %v1781
      %v1828 = vpack.c.b16 %v1784, %v1782
      %v1829 = vpack.c.b16 %v1787, %v1785
      %v1830 = vpack.c.b16 %v1788, %v1786
      %v1831 = vpack.c.b16 %v1791, %v1789
      %v1832 = vpack.c.b16 %v1792, %v1790
      %v1833 = vpack.c.b16 %v1795, %v1793
      %v1834 = vpack.c.b16 %v1796, %v1794
      %v1835 = vpack.c.b16 %v1799, %v1797
      %v1836 = vpack.c.b16 %v1800, %v1798
      %v1837 = vpack.c.b16 %v1803, %v1801
      %v1838 = vpack.c.b16 %v1804, %v1802
      %v1839 = vpack.c.b16 %v1807, %v1805
      %v1840 = vpack.c.b16 %v1808, %v1806
      %1873 = vmatpush.bf16.msra.mxu0 %v1823
      %1874 = vmatpush.bf16.msra.mxu0 %v1821
      %1875 = vmatpush.bf16.msra.mxu0 %v1819
      %1876 = vmatpush.bf16.msra.mxu0 %v1817
      %1877 = vmatpush.bf16.msra.mxu0 %v1815
      %1878 = vmatpush.bf16.msra.mxu0 %v1813
      %1879 = vmatpush.bf16.msra.mxu0 %v1811
      %1880 = vmatpush.bf16.msra.mxu0 %v1809
      %1881 = vmatmul.bf16.gmra.mxu0 %v1553
      %v1882 = vpop.f32.mrf.mxu0
      %v1883 = vadd.f32 0.0, %v1882
      %v1884 = vpop.f32.mrf.mxu0
      %v1885 = vadd.f32 0.0, %v1884
      %1886 = vmatmul.bf16.gmra.mxu0 %v1555
      %v1887 = vpop.f32.mrf.mxu0
      %v1888 = vadd.f32 0.0, %v1887
      %v1889 = vpop.f32.mrf.mxu0
      %v1890 = vadd.f32 0.0, %v1889
      %1891 = vmatmul.bf16.gmra.mxu0 %v1557
      %v1892 = vpop.f32.mrf.mxu0
      %v1893 = vadd.f32 0.0, %v1892
      %v1894 = vpop.f32.mrf.mxu0
      %v1895 = vadd.f32 0.0, %v1894
      %1896 = vmatmul.bf16.gmra.mxu0 %v1559
      %v1897 = vpop.f32.mrf.mxu0
      %v1898 = vadd.f32 0.0, %v1897
      %v1899 = vpop.f32.mrf.mxu0
      %v1900 = vadd.f32 0.0, %v1899
      %1901 = vmatmul.bf16.gmra.mxu0 %v1561
      %v1902 = vpop.f32.mrf.mxu0
      %v1903 = vadd.f32 0.0, %v1902
      %v1904 = vpop.f32.mrf.mxu0
      %v1905 = vadd.f32 0.0, %v1904
      %1906 = vmatmul.bf16.gmra.mxu0 %v1563
      %v1907 = vpop.f32.mrf.mxu0
      %v1908 = vadd.f32 0.0, %v1907
      %v1909 = vpop.f32.mrf.mxu0
      %v1910 = vadd.f32 0.0, %v1909
      %1911 = vmatmul.bf16.gmra.mxu0 %v1565
      %v1912 = vpop.f32.mrf.mxu0
      %v1913 = vadd.f32 0.0, %v1912
      %v1914 = vpop.f32.mrf.mxu0
      %v1915 = vadd.f32 0.0, %v1914
      %1916 = vmatmul.bf16.gmra.mxu0 %v1567
      %v1917 = vpop.f32.mrf.mxu0
      %v1918 = vadd.f32 0.0, %v1917
      %v1919 = vpop.f32.mrf.mxu0
      %v1920 = vadd.f32 0.0, %v1919
      %1921 = vmatmul.bf16.gmra.mxu0 %v1569
      %v1922 = vpop.f32.mrf.mxu0
      %v1923 = vadd.f32 0.0, %v1922
      %v1924 = vpop.f32.mrf.mxu0
      %v1925 = vadd.f32 0.0, %v1924
      %1926 = vmatmul.bf16.gmra.mxu0 %v1571
      %v1927 = vpop.f32.mrf.mxu0
      %v1928 = vadd.f32 0.0, %v1927
      %v1929 = vpop.f32.mrf.mxu0
      %v1930 = vadd.f32 0.0, %v1929
      %1931 = vmatmul.bf16.gmra.mxu0 %v1573
      %v1932 = vpop.f32.mrf.mxu0
      %v1933 = vadd.f32 0.0, %v1932
      %v1934 = vpop.f32.mrf.mxu0
      %v1935 = vadd.f32 0.0, %v1934
      %1936 = vmatmul.bf16.gmra.mxu0 %v1575
      %v1937 = vpop.f32.mrf.mxu0
      %v1938 = vadd.f32 0.0, %v1937
      %v1939 = vpop.f32.mrf.mxu0
      %v1940 = vadd.f32 0.0, %v1939
      %1941 = vmatmul.bf16.gmra.mxu0 %v1577
      %v1942 = vpop.f32.mrf.mxu0
      %v1943 = vadd.f32 0.0, %v1942
      %v1944 = vpop.f32.mrf.mxu0
      %v1945 = vadd.f32 0.0, %v1944
      %1946 = vmatmul.bf16.gmra.mxu0 %v1579
      %v1947 = vpop.f32.mrf.mxu0
      %v1948 = vadd.f32 0.0, %v1947
      %v1949 = vpop.f32.mrf.mxu0
      %v1950 = vadd.f32 0.0, %v1949
      %1951 = vmatmul.bf16.gmra.mxu0 %v1581
      %v1952 = vpop.f32.mrf.mxu0
      %v1953 = vadd.f32 0.0, %v1952
      %v1954 = vpop.f32.mrf.mxu0
      %v1955 = vadd.f32 0.0, %v1954
      %1956 = vmatmul.bf16.gmra.mxu0 %v1583
      %v1957 = vpop.f32.mrf.mxu0
      %v1958 = vadd.f32 0.0, %v1957
      %v1959 = vpop.f32.mrf.mxu0
      %v1960 = vadd.f32 0.0, %v1959
      %1961 = vmatmul.bf16.gmra.mxu0 %v1585
      %v1962 = vpop.f32.mrf.mxu0
      %v1963 = vadd.f32 0.0, %v1962
      %v1964 = vpop.f32.mrf.mxu0
      %v1965 = vadd.f32 0.0, %v1964
      %1966 = vmatmul.bf16.gmra.mxu0 %v1587
      %v1967 = vpop.f32.mrf.mxu0
      %v1968 = vadd.f32 0.0, %v1967
      %v1969 = vpop.f32.mrf.mxu0
      %v1970 = vadd.f32 0.0, %v1969
      %1971 = vmatmul.bf16.gmra.mxu0 %v1589
      %v1972 = vpop.f32.mrf.mxu0
      %v1973 = vadd.f32 0.0, %v1972
      %v1974 = vpop.f32.mrf.mxu0
      %v1975 = vadd.f32 0.0, %v1974
      %1976 = vmatmul.bf16.gmra.mxu0 %v1591
      %v1977 = vpop.f32.mrf.mxu0
      %v1978 = vadd.f32 0.0, %v1977
      %v1979 = vpop.f32.mrf.mxu0
      %v1980 = vadd.f32 0.0, %v1979
      %1981 = vmatmul.bf16.gmra.mxu0 %v1593
      %v1982 = vpop.f32.mrf.mxu0
      %v1983 = vadd.f32 0.0, %v1982
      %v1984 = vpop.f32.mrf.mxu0
      %v1985 = vadd.f32 0.0, %v1984
      %1986 = vmatmul.bf16.gmra.mxu0 %v1595
      %v1987 = vpop.f32.mrf.mxu0
      %v1988 = vadd.f32 0.0, %v1987
      %v1989 = vpop.f32.mrf.mxu0
      %v1990 = vadd.f32 0.0, %v1989
      %1991 = vmatmul.bf16.gmra.mxu0 %v1597
      %v1992 = vpop.f32.mrf.mxu0
      %v1993 = vadd.f32 0.0, %v1992
      %v1994 = vpop.f32.mrf.mxu0
      %v1995 = vadd.f32 0.0, %v1994
      %1996 = vmatmul.bf16.gmra.mxu0 %v1599
      %v1997 = vpop.f32.mrf.mxu0
      %v1998 = vadd.f32 0.0, %v1997
      %v1999 = vpop.f32.mrf.mxu0
      %v2000 = vadd.f32 0.0, %v1999
      %2001 = vmatmul.bf16.gmra.mxu0 %v1601
      %v2002 = vpop.f32.mrf.mxu0
      %v2003 = vadd.f32 0.0, %v2002
      %v2004 = vpop.f32.mrf.mxu0
      %v2005 = vadd.f32 0.0, %v2004
      %2006 = vmatmul.bf16.gmra.mxu0 %v1603
      %v2007 = vpop.f32.mrf.mxu0
      %v2008 = vadd.f32 0.0, %v2007
      %v2009 = vpop.f32.mrf.mxu0
      %v2010 = vadd.f32 0.0, %v2009
      %2011 = vmatmul.bf16.gmra.mxu0 %v1605
      %v2012 = vpop.f32.mrf.mxu0
      %v2013 = vadd.f32 0.0, %v2012
      %v2014 = vpop.f32.mrf.mxu0
      %v2015 = vadd.f32 0.0, %v2014
      %2016 = vmatmul.bf16.gmra.mxu0 %v1607
      %v2017 = vpop.f32.mrf.mxu0
      %v2018 = vadd.f32 0.0, %v2017
      %v2019 = vpop.f32.mrf.mxu0
      %v2020 = vadd.f32 0.0, %v2019
      %2021 = vmatmul.bf16.gmra.mxu0 %v1609
      %v2022 = vpop.f32.mrf.mxu0
      %v2023 = vadd.f32 0.0, %v2022
      %v2024 = vpop.f32.mrf.mxu0
      %v2025 = vadd.f32 0.0, %v2024
      %2026 = vmatmul.bf16.gmra.mxu0 %v1611
      %v2027 = vpop.f32.mrf.mxu0
      %v2028 = vadd.f32 0.0, %v2027
      %v2029 = vpop.f32.mrf.mxu0
      %v2030 = vadd.f32 0.0, %v2029
      %2031 = vmatmul.bf16.gmra.mxu0 %v1613
      %v2032 = vpop.f32.mrf.mxu0
      %v2033 = vadd.f32 0.0, %v2032
      %v2034 = vpop.f32.mrf.mxu0
      %v2035 = vadd.f32 0.0, %v2034
      %2036 = vmatmul.bf16.gmra.mxu0 %v1615
      %v2037 = vpop.f32.mrf.mxu0
      %v2038 = vadd.f32 0.0, %v2037
      %v2039 = vpop.f32.mrf.mxu0
      %v2040 = vadd.f32 0.0, %v2039
      %2041 = vmatmul.bf16.gmra.mxu0 %v1617
      %v2042 = vpop.f32.mrf.mxu0
      %v2043 = vadd.f32 0.0, %v2042
      %v2044 = vpop.f32.mrf.mxu0
      %v2045 = vadd.f32 0.0, %v2044
      %2046 = vmatmul.bf16.gmra.mxu0 %v1619
      %v2047 = vpop.f32.mrf.mxu0
      %v2048 = vadd.f32 0.0, %v2047
      %v2049 = vpop.f32.mrf.mxu0
      %v2050 = vadd.f32 0.0, %v2049
      %2051 = vmatmul.bf16.gmra.mxu0 %v1621
      %v2052 = vpop.f32.mrf.mxu0
      %v2053 = vadd.f32 0.0, %v2052
      %v2054 = vpop.f32.mrf.mxu0
      %v2055 = vadd.f32 0.0, %v2054
      %2056 = vmatmul.bf16.gmra.mxu0 %v1623
      %v2057 = vpop.f32.mrf.mxu0
      %v2058 = vadd.f32 0.0, %v2057
      %v2059 = vpop.f32.mrf.mxu0
      %v2060 = vadd.f32 0.0, %v2059
      %2061 = vmatmul.bf16.gmra.mxu0 %v1625
      %v2062 = vpop.f32.mrf.mxu0
      %v2063 = vadd.f32 0.0, %v2062
      %v2064 = vpop.f32.mrf.mxu0
      %v2065 = vadd.f32 0.0, %v2064
      %2066 = vmatmul.bf16.gmra.mxu0 %v1627
      %v2067 = vpop.f32.mrf.mxu0
      %v2068 = vadd.f32 0.0, %v2067
      %v2069 = vpop.f32.mrf.mxu0
      %v2070 = vadd.f32 0.0, %v2069
      %2071 = vmatmul.bf16.gmra.mxu0 %v1629
      %v2072 = vpop.f32.mrf.mxu0
      %v2073 = vadd.f32 0.0, %v2072
      %v2074 = vpop.f32.mrf.mxu0
      %v2075 = vadd.f32 0.0, %v2074
      %2076 = vmatmul.bf16.gmra.mxu0 %v1631
      %v2077 = vpop.f32.mrf.mxu0
      %v2078 = vadd.f32 0.0, %v2077
      %v2079 = vpop.f32.mrf.mxu0
      %v2080 = vadd.f32 0.0, %v2079
      %2081 = vmatmul.bf16.gmra.mxu0 %v1633
      %v2082 = vpop.f32.mrf.mxu0
      %v2083 = vadd.f32 0.0, %v2082
      %v2084 = vpop.f32.mrf.mxu0
      %v2085 = vadd.f32 0.0, %v2084
      %2086 = vmatmul.bf16.gmra.mxu0 %v1635
      %v2087 = vpop.f32.mrf.mxu0
      %v2088 = vadd.f32 0.0, %v2087
      %v2089 = vpop.f32.mrf.mxu0
      %v2090 = vadd.f32 0.0, %v2089
      %2091 = vmatmul.bf16.gmra.mxu0 %v1637
      %v2092 = vpop.f32.mrf.mxu0
      %v2093 = vadd.f32 0.0, %v2092
      %v2094 = vpop.f32.mrf.mxu0
      %v2095 = vadd.f32 0.0, %v2094
      %2096 = vmatmul.bf16.gmra.mxu0 %v1639
      %v2097 = vpop.f32.mrf.mxu0
      %v2098 = vadd.f32 0.0, %v2097
      %v2099 = vpop.f32.mrf.mxu0
      %v2100 = vadd.f32 0.0, %v2099
      %2101 = vmatmul.bf16.gmra.mxu0 %v1641
      %v2102 = vpop.f32.mrf.mxu0
      %v2103 = vadd.f32 0.0, %v2102
      %v2104 = vpop.f32.mrf.mxu0
      %v2105 = vadd.f32 0.0, %v2104
      %2106 = vmatmul.bf16.gmra.mxu0 %v1643
      %v2107 = vpop.f32.mrf.mxu0
      %v2108 = vadd.f32 0.0, %v2107
      %v2109 = vpop.f32.mrf.mxu0
      %v2110 = vadd.f32 0.0, %v2109
      %2111 = vmatmul.bf16.gmra.mxu0 %v1645
      %v2112 = vpop.f32.mrf.mxu0
      %v2113 = vadd.f32 0.0, %v2112
      %v2114 = vpop.f32.mrf.mxu0
      %v2115 = vadd.f32 0.0, %v2114
      %2116 = vmatmul.bf16.gmra.mxu0 %v1647
      %v2117 = vpop.f32.mrf.mxu0
      %v2118 = vadd.f32 0.0, %v2117
      %v2119 = vpop.f32.mrf.mxu0
      %v2120 = vadd.f32 0.0, %v2119
      %2121 = vmatmul.bf16.gmra.mxu0 %v1649
      %v2122 = vpop.f32.mrf.mxu0
      %v2123 = vadd.f32 0.0, %v2122
      %v2124 = vpop.f32.mrf.mxu0
      %v2125 = vadd.f32 0.0, %v2124
      %2126 = vmatmul.bf16.gmra.mxu0 %v1651
      %v2127 = vpop.f32.mrf.mxu0
      %v2128 = vadd.f32 0.0, %v2127
      %v2129 = vpop.f32.mrf.mxu0
      %v2130 = vadd.f32 0.0, %v2129
      %2131 = vmatmul.bf16.gmra.mxu0 %v1653
      %v2132 = vpop.f32.mrf.mxu0
      %v2133 = vadd.f32 0.0, %v2132
      %v2134 = vpop.f32.mrf.mxu0
      %v2135 = vadd.f32 0.0, %v2134
      %2136 = vmatmul.bf16.gmra.mxu0 %v1655
      %v2137 = vpop.f32.mrf.mxu0
      %v2138 = vadd.f32 0.0, %v2137
      %v2139 = vpop.f32.mrf.mxu0
      %v2140 = vadd.f32 0.0, %v2139
      %2141 = vmatmul.bf16.gmra.mxu0 %v1657
      %v2142 = vpop.f32.mrf.mxu0
      %v2143 = vadd.f32 0.0, %v2142
      %v2144 = vpop.f32.mrf.mxu0
      %v2145 = vadd.f32 0.0, %v2144
      %2146 = vmatmul.bf16.gmra.mxu0 %v1659
      %v2147 = vpop.f32.mrf.mxu0
      %v2148 = vadd.f32 0.0, %v2147
      %v2149 = vpop.f32.mrf.mxu0
      %v2150 = vadd.f32 0.0, %v2149
      %2151 = vmatmul.bf16.gmra.mxu0 %v1661
      %v2152 = vpop.f32.mrf.mxu0
      %v2153 = vadd.f32 0.0, %v2152
      %v2154 = vpop.f32.mrf.mxu0
      %v2155 = vadd.f32 0.0, %v2154
      %2156 = vmatmul.bf16.gmra.mxu0 %v1663
      %v2157 = vpop.f32.mrf.mxu0
      %v2158 = vadd.f32 0.0, %v2157
      %v2159 = vpop.f32.mrf.mxu0
      %v2160 = vadd.f32 0.0, %v2159
      %2161 = vmatmul.bf16.gmra.mxu0 %v1665
      %v2162 = vpop.f32.mrf.mxu0
      %v2163 = vadd.f32 0.0, %v2162
      %v2164 = vpop.f32.mrf.mxu0
      %v2165 = vadd.f32 0.0, %v2164
      %2166 = vmatmul.bf16.gmra.mxu0 %v1667
      %v2167 = vpop.f32.mrf.mxu0
      %v2168 = vadd.f32 0.0, %v2167
      %v2169 = vpop.f32.mrf.mxu0
      %v2170 = vadd.f32 0.0, %v2169
      %2171 = vmatmul.bf16.gmra.mxu0 %v1669
      %v2172 = vpop.f32.mrf.mxu0
      %v2173 = vadd.f32 0.0, %v2172
      %v2174 = vpop.f32.mrf.mxu0
      %v2175 = vadd.f32 0.0, %v2174
      %2176 = vmatmul.bf16.gmra.mxu0 %v1671
      %v2177 = vpop.f32.mrf.mxu0
      %v2178 = vadd.f32 0.0, %v2177
      %v2179 = vpop.f32.mrf.mxu0
      %v2180 = vadd.f32 0.0, %v2179
      %2181 = vmatmul.bf16.gmra.mxu0 %v1673
      %v2182 = vpop.f32.mrf.mxu0
      %v2183 = vadd.f32 0.0, %v2182
      %v2184 = vpop.f32.mrf.mxu0
      %v2185 = vadd.f32 0.0, %v2184
      %2186 = vmatmul.bf16.gmra.mxu0 %v1675
      %v2187 = vpop.f32.mrf.mxu0
      %v2188 = vadd.f32 0.0, %v2187
      %v2189 = vpop.f32.mrf.mxu0
      %v2190 = vadd.f32 0.0, %v2189
      %2191 = vmatmul.bf16.gmra.mxu0 %v1677
      %v2192 = vpop.f32.mrf.mxu0
      %v2193 = vadd.f32 0.0, %v2192
      %v2194 = vpop.f32.mrf.mxu0
      %v2195 = vadd.f32 0.0, %v2194
      %2196 = vmatmul.bf16.gmra.mxu0 %v1679
      %v2197 = vpop.f32.mrf.mxu0
      %v2198 = vadd.f32 0.0, %v2197
      %v2199 = vpop.f32.mrf.mxu0
      %v2200 = vadd.f32 0.0, %v2199
      %2201 = vdwg.mxu0
      %2202 = vmatpush.bf16.msra.mxu0 %v1839
      %2203 = vmatpush.bf16.msra.mxu0 %v1837
      %2204 = vmatpush.bf16.msra.mxu0 %v1835
      %2205 = vmatpush.bf16.msra.mxu0 %v1833
      %2206 = vmatpush.bf16.msra.mxu0 %v1831
      %2207 = vmatpush.bf16.msra.mxu0 %v1829
      %2208 = vmatpush.bf16.msra.mxu0 %v1827
      %2209 = vmatpush.bf16.msra.mxu0 %v1825
      %2210 = vmatmul.bf16.gmra.mxu0 %v1554
      %v2211 = vpop.f32.mrf.mxu0
      %v2212 = vadd.f32 %v1883, %v2211
      %v2213 = vpop.f32.mrf.mxu0
      %v2214 = vadd.f32 %v1885, %v2213
      %2215 = vmatmul.bf16.gmra.mxu0 %v1556
      %v2216 = vpop.f32.mrf.mxu0
      %v2217 = vadd.f32 %v1888, %v2216
      %v2218 = vpop.f32.mrf.mxu0
      %v2219 = vadd.f32 %v1890, %v2218
      %2220 = vmatmul.bf16.gmra.mxu0 %v1558
      %v2221 = vpop.f32.mrf.mxu0
      %v2222 = vadd.f32 %v1893, %v2221
      %v2223 = vpop.f32.mrf.mxu0
      %v2224 = vadd.f32 %v1895, %v2223
      %2225 = vmatmul.bf16.gmra.mxu0 %v1560
      %v2226 = vpop.f32.mrf.mxu0
      %v2227 = vadd.f32 %v1898, %v2226
      %v2228 = vpop.f32.mrf.mxu0
      %v2229 = vadd.f32 %v1900, %v2228
      %2230 = vmatmul.bf16.gmra.mxu0 %v1562
      %v2231 = vpop.f32.mrf.mxu0
      %v2232 = vadd.f32 %v1903, %v2231
      %v2233 = vpop.f32.mrf.mxu0
      %v2234 = vadd.f32 %v1905, %v2233
      %2235 = vmatmul.bf16.gmra.mxu0 %v1564
      %v2236 = vpop.f32.mrf.mxu0
      %v2237 = vadd.f32 %v1908, %v2236
      %v2238 = vpop.f32.mrf.mxu0
      %v2239 = vadd.f32 %v1910, %v2238
      %2240 = vmatmul.bf16.gmra.mxu0 %v1566
      %v2241 = vpop.f32.mrf.mxu0
      %v2242 = vadd.f32 %v1913, %v2241
      %v2243 = vpop.f32.mrf.mxu0
      %v2244 = vadd.f32 %v1915, %v2243
      %2245 = vmatmul.bf16.gmra.mxu0 %v1568
      %v2246 = vpop.f32.mrf.mxu0
      %v2247 = vadd.f32 %v1918, %v2246
      %v2248 = vpop.f32.mrf.mxu0
      %v2249 = vadd.f32 %v1920, %v2248
      %2250 = vmatmul.bf16.gmra.mxu0 %v1570
      %v2251 = vpop.f32.mrf.mxu0
      %v2252 = vadd.f32 %v1923, %v2251
      %v2253 = vpop.f32.mrf.mxu0
      %v2254 = vadd.f32 %v1925, %v2253
      %2255 = vmatmul.bf16.gmra.mxu0 %v1572
      %v2256 = vpop.f32.mrf.mxu0
      %v2257 = vadd.f32 %v1928, %v2256
      %v2258 = vpop.f32.mrf.mxu0
      %v2259 = vadd.f32 %v1930, %v2258
      %2260 = vmatmul.bf16.gmra.mxu0 %v1574
      %v2261 = vpop.f32.mrf.mxu0
      %v2262 = vadd.f32 %v1933, %v2261
      %v2263 = vpop.f32.mrf.mxu0
      %v2264 = vadd.f32 %v1935, %v2263
      %2265 = vmatmul.bf16.gmra.mxu0 %v1576
      %v2266 = vpop.f32.mrf.mxu0
      %v2267 = vadd.f32 %v1938, %v2266
      %v2268 = vpop.f32.mrf.mxu0
      %v2269 = vadd.f32 %v1940, %v2268
      %2270 = vmatmul.bf16.gmra.mxu0 %v1578
      %v2271 = vpop.f32.mrf.mxu0
      %v2272 = vadd.f32 %v1943, %v2271
      %v2273 = vpop.f32.mrf.mxu0
      %v2274 = vadd.f32 %v1945, %v2273
      %2275 = vmatmul.bf16.gmra.mxu0 %v1580
      %v2276 = vpop.f32.mrf.mxu0
      %v2277 = vadd.f32 %v1948, %v2276
      %v2278 = vpop.f32.mrf.mxu0
      %v2279 = vadd.f32 %v1950, %v2278
      %2280 = vmatmul.bf16.gmra.mxu0 %v1582
      %v2281 = vpop.f32.mrf.mxu0
      %v2282 = vadd.f32 %v1953, %v2281
      %v2283 = vpop.f32.mrf.mxu0
      %v2284 = vadd.f32 %v1955, %v2283
      %2285 = vmatmul.bf16.gmra.mxu0 %v1584
      %v2286 = vpop.f32.mrf.mxu0
      %v2287 = vadd.f32 %v1958, %v2286
      %v2288 = vpop.f32.mrf.mxu0
      %v2289 = vadd.f32 %v1960, %v2288
      %2290 = vmatmul.bf16.gmra.mxu0 %v1586
      %v2291 = vpop.f32.mrf.mxu0
      %v2292 = vadd.f32 %v1963, %v2291
      %v2293 = vpop.f32.mrf.mxu0
      %v2294 = vadd.f32 %v1965, %v2293
      %2295 = vmatmul.bf16.gmra.mxu0 %v1588
      %v2296 = vpop.f32.mrf.mxu0
      %v2297 = vadd.f32 %v1968, %v2296
      %v2298 = vpop.f32.mrf.mxu0
      %v2299 = vadd.f32 %v1970, %v2298
      %2300 = vmatmul.bf16.gmra.mxu0 %v1590
      %v2301 = vpop.f32.mrf.mxu0
      %v2302 = vadd.f32 %v1973, %v2301
      %v2303 = vpop.f32.mrf.mxu0
      %v2304 = vadd.f32 %v1975, %v2303
      %2305 = vmatmul.bf16.gmra.mxu0 %v1592
      %v2306 = vpop.f32.mrf.mxu0
      %v2307 = vadd.f32 %v1978, %v2306
      %v2308 = vpop.f32.mrf.mxu0
      %v2309 = vadd.f32 %v1980, %v2308
      %2310 = vmatmul.bf16.gmra.mxu0 %v1594
      %v2311 = vpop.f32.mrf.mxu0
      %v2312 = vadd.f32 %v1983, %v2311
      %v2313 = vpop.f32.mrf.mxu0
      %v2314 = vadd.f32 %v1985, %v2313
      %2315 = vmatmul.bf16.gmra.mxu0 %v1596
      %v2316 = vpop.f32.mrf.mxu0
      %v2317 = vadd.f32 %v1988, %v2316
      %v2318 = vpop.f32.mrf.mxu0
      %v2319 = vadd.f32 %v1990, %v2318
      %2320 = vmatmul.bf16.gmra.mxu0 %v1598
      %v2321 = vpop.f32.mrf.mxu0
      %v2322 = vadd.f32 %v1993, %v2321
      %v2323 = vpop.f32.mrf.mxu0
      %v2324 = vadd.f32 %v1995, %v2323
      %2325 = vmatmul.bf16.gmra.mxu0 %v1600
      %v2326 = vpop.f32.mrf.mxu0
      %v2327 = vadd.f32 %v1998, %v2326
      %v2328 = vpop.f32.mrf.mxu0
      %v2329 = vadd.f32 %v2000, %v2328
      %2330 = vmatmul.bf16.gmra.mxu0 %v1602
      %v2331 = vpop.f32.mrf.mxu0
      %v2332 = vadd.f32 %v2003, %v2331
      %v2333 = vpop.f32.mrf.mxu0
      %v2334 = vadd.f32 %v2005, %v2333
      %2335 = vmatmul.bf16.gmra.mxu0 %v1604
      %v2336 = vpop.f32.mrf.mxu0
      %v2337 = vadd.f32 %v2008, %v2336
      %v2338 = vpop.f32.mrf.mxu0
      %v2339 = vadd.f32 %v2010, %v2338
      %2340 = vmatmul.bf16.gmra.mxu0 %v1606
      %v2341 = vpop.f32.mrf.mxu0
      %v2342 = vadd.f32 %v2013, %v2341
      %v2343 = vpop.f32.mrf.mxu0
      %v2344 = vadd.f32 %v2015, %v2343
      %2345 = vmatmul.bf16.gmra.mxu0 %v1608
      %v2346 = vpop.f32.mrf.mxu0
      %v2347 = vadd.f32 %v2018, %v2346
      %v2348 = vpop.f32.mrf.mxu0
      %v2349 = vadd.f32 %v2020, %v2348
      %2350 = vmatmul.bf16.gmra.mxu0 %v1610
      %v2351 = vpop.f32.mrf.mxu0
      %v2352 = vadd.f32 %v2023, %v2351
      %v2353 = vpop.f32.mrf.mxu0
      %v2354 = vadd.f32 %v2025, %v2353
      %2355 = vmatmul.bf16.gmra.mxu0 %v1612
      %v2356 = vpop.f32.mrf.mxu0
      %v2357 = vadd.f32 %v2028, %v2356
      %v2358 = vpop.f32.mrf.mxu0
      %v2359 = vadd.f32 %v2030, %v2358
      %2360 = vmatmul.bf16.gmra.mxu0 %v1614
      %v2361 = vpop.f32.mrf.mxu0
      %v2362 = vadd.f32 %v2033, %v2361
      %v2363 = vpop.f32.mrf.mxu0
      %v2364 = vadd.f32 %v2035, %v2363
      %2365 = vmatmul.bf16.gmra.mxu0 %v1616
      %v2366 = vpop.f32.mrf.mxu0
      %v2367 = vadd.f32 %v2038, %v2366
      %v2368 = vpop.f32.mrf.mxu0
      %v2369 = vadd.f32 %v2040, %v2368
      %2370 = vmatmul.bf16.gmra.mxu0 %v1618
      %v2371 = vpop.f32.mrf.mxu0
      %v2372 = vadd.f32 %v2043, %v2371
      %v2373 = vpop.f32.mrf.mxu0
      %v2374 = vadd.f32 %v2045, %v2373
      %2375 = vmatmul.bf16.gmra.mxu0 %v1620
      %v2376 = vpop.f32.mrf.mxu0
      %v2377 = vadd.f32 %v2048, %v2376
      %v2378 = vpop.f32.mrf.mxu0
      %v2379 = vadd.f32 %v2050, %v2378
      %2380 = vmatmul.bf16.gmra.mxu0 %v1622
      %v2381 = vpop.f32.mrf.mxu0
      %v2382 = vadd.f32 %v2053, %v2381
      %v2383 = vpop.f32.mrf.mxu0
      %v2384 = vadd.f32 %v2055, %v2383
      %2385 = vmatmul.bf16.gmra.mxu0 %v1624
      %v2386 = vpop.f32.mrf.mxu0
      %v2387 = vadd.f32 %v2058, %v2386
      %v2388 = vpop.f32.mrf.mxu0
      %v2389 = vadd.f32 %v2060, %v2388
      %2390 = vmatmul.bf16.gmra.mxu0 %v1626
      %v2391 = vpop.f32.mrf.mxu0
      %v2392 = vadd.f32 %v2063, %v2391
      %v2393 = vpop.f32.mrf.mxu0
      %v2394 = vadd.f32 %v2065, %v2393
      %2395 = vmatmul.bf16.gmra.mxu0 %v1628
      %v2396 = vpop.f32.mrf.mxu0
      %v2397 = vadd.f32 %v2068, %v2396
      %v2398 = vpop.f32.mrf.mxu0
      %v2399 = vadd.f32 %v2070, %v2398
      %2400 = vmatmul.bf16.gmra.mxu0 %v1630
      %v2401 = vpop.f32.mrf.mxu0
      %v2402 = vadd.f32 %v2073, %v2401
      %v2403 = vpop.f32.mrf.mxu0
      %v2404 = vadd.f32 %v2075, %v2403
      %2405 = vmatmul.bf16.gmra.mxu0 %v1632
      %v2406 = vpop.f32.mrf.mxu0
      %v2407 = vadd.f32 %v2078, %v2406
      %v2408 = vpop.f32.mrf.mxu0
      %v2409 = vadd.f32 %v2080, %v2408
      %2410 = vmatmul.bf16.gmra.mxu0 %v1634
      %v2411 = vpop.f32.mrf.mxu0
      %v2412 = vadd.f32 %v2083, %v2411
      %v2413 = vpop.f32.mrf.mxu0
      %v2414 = vadd.f32 %v2085, %v2413
      %2415 = vmatmul.bf16.gmra.mxu0 %v1636
      %v2416 = vpop.f32.mrf.mxu0
      %v2417 = vadd.f32 %v2088, %v2416
      %v2418 = vpop.f32.mrf.mxu0
      %v2419 = vadd.f32 %v2090, %v2418
      %2420 = vmatmul.bf16.gmra.mxu0 %v1638
      %v2421 = vpop.f32.mrf.mxu0
      %v2422 = vadd.f32 %v2093, %v2421
      %v2423 = vpop.f32.mrf.mxu0
      %v2424 = vadd.f32 %v2095, %v2423
      %2425 = vmatmul.bf16.gmra.mxu0 %v1640
      %v2426 = vpop.f32.mrf.mxu0
      %v2427 = vadd.f32 %v2098, %v2426
      %v2428 = vpop.f32.mrf.mxu0
      %v2429 = vadd.f32 %v2100, %v2428
      %2430 = vmatmul.bf16.gmra.mxu0 %v1642
      %v2431 = vpop.f32.mrf.mxu0
      %v2432 = vadd.f32 %v2103, %v2431
      %v2433 = vpop.f32.mrf.mxu0
      %v2434 = vadd.f32 %v2105, %v2433
      %2435 = vmatmul.bf16.gmra.mxu0 %v1644
      %v2436 = vpop.f32.mrf.mxu0
      %v2437 = vadd.f32 %v2108, %v2436
      %v2438 = vpop.f32.mrf.mxu0
      %v2439 = vadd.f32 %v2110, %v2438
      %2440 = vmatmul.bf16.gmra.mxu0 %v1646
      %v2441 = vpop.f32.mrf.mxu0
      %v2442 = vadd.f32 %v2113, %v2441
      %v2443 = vpop.f32.mrf.mxu0
      %v2444 = vadd.f32 %v2115, %v2443
      %2445 = vmatmul.bf16.gmra.mxu0 %v1648
      %v2446 = vpop.f32.mrf.mxu0
      %v2447 = vadd.f32 %v2118, %v2446
      %v2448 = vpop.f32.mrf.mxu0
      %v2449 = vadd.f32 %v2120, %v2448
      %2450 = vmatmul.bf16.gmra.mxu0 %v1650
      %v2451 = vpop.f32.mrf.mxu0
      %v2452 = vadd.f32 %v2123, %v2451
      %v2453 = vpop.f32.mrf.mxu0
      %v2454 = vadd.f32 %v2125, %v2453
      %2455 = vmatmul.bf16.gmra.mxu0 %v1652
      %v2456 = vpop.f32.mrf.mxu0
      %v2457 = vadd.f32 %v2128, %v2456
      %v2458 = vpop.f32.mrf.mxu0
      %v2459 = vadd.f32 %v2130, %v2458
      %2460 = vmatmul.bf16.gmra.mxu0 %v1654
      %v2461 = vpop.f32.mrf.mxu0
      %v2462 = vadd.f32 %v2133, %v2461
      %v2463 = vpop.f32.mrf.mxu0
      %v2464 = vadd.f32 %v2135, %v2463
      %2465 = vmatmul.bf16.gmra.mxu0 %v1656
      %v2466 = vpop.f32.mrf.mxu0
      %v2467 = vadd.f32 %v2138, %v2466
      %v2468 = vpop.f32.mrf.mxu0
      %v2469 = vadd.f32 %v2140, %v2468
      %2470 = vmatmul.bf16.gmra.mxu0 %v1658
      %v2471 = vpop.f32.mrf.mxu0
      %v2472 = vadd.f32 %v2143, %v2471
      %v2473 = vpop.f32.mrf.mxu0
      %v2474 = vadd.f32 %v2145, %v2473
      %2475 = vmatmul.bf16.gmra.mxu0 %v1660
      %v2476 = vpop.f32.mrf.mxu0
      %v2477 = vadd.f32 %v2148, %v2476
      %v2478 = vpop.f32.mrf.mxu0
      %v2479 = vadd.f32 %v2150, %v2478
      %2480 = vmatmul.bf16.gmra.mxu0 %v1662
      %v2481 = vpop.f32.mrf.mxu0
      %v2482 = vadd.f32 %v2153, %v2481
      %v2483 = vpop.f32.mrf.mxu0
      %v2484 = vadd.f32 %v2155, %v2483
      %2485 = vmatmul.bf16.gmra.mxu0 %v1664
      %v2486 = vpop.f32.mrf.mxu0
      %v2487 = vadd.f32 %v2158, %v2486
      %v2488 = vpop.f32.mrf.mxu0
      %v2489 = vadd.f32 %v2160, %v2488
      %2490 = vmatmul.bf16.gmra.mxu0 %v1666
      %v2491 = vpop.f32.mrf.mxu0
      %v2492 = vadd.f32 %v2163, %v2491
      %v2493 = vpop.f32.mrf.mxu0
      %v2494 = vadd.f32 %v2165, %v2493
      %2495 = vmatmul.bf16.gmra.mxu0 %v1668
      %v2496 = vpop.f32.mrf.mxu0
      %v2497 = vadd.f32 %v2168, %v2496
      %v2498 = vpop.f32.mrf.mxu0
      %v2499 = vadd.f32 %v2170, %v2498
      %2500 = vmatmul.bf16.gmra.mxu0 %v1670
      %v2501 = vpop.f32.mrf.mxu0
      %v2502 = vadd.f32 %v2173, %v2501
      %v2503 = vpop.f32.mrf.mxu0
      %v2504 = vadd.f32 %v2175, %v2503
      %2505 = vmatmul.bf16.gmra.mxu0 %v1672
      %v2506 = vpop.f32.mrf.mxu0
      %v2507 = vadd.f32 %v2178, %v2506
      %v2508 = vpop.f32.mrf.mxu0
      %v2509 = vadd.f32 %v2180, %v2508
      %2510 = vmatmul.bf16.gmra.mxu0 %v1674
      %v2511 = vpop.f32.mrf.mxu0
      %v2512 = vadd.f32 %v2183, %v2511
      %v2513 = vpop.f32.mrf.mxu0
      %v2514 = vadd.f32 %v2185, %v2513
      %2515 = vmatmul.bf16.gmra.mxu0 %v1676
      %v2516 = vpop.f32.mrf.mxu0
      %v2517 = vadd.f32 %v2188, %v2516
      %v2518 = vpop.f32.mrf.mxu0
      %v2519 = vadd.f32 %v2190, %v2518
      %2520 = vmatmul.bf16.gmra.mxu0 %v1678
      %v2521 = vpop.f32.mrf.mxu0
      %v2522 = vadd.f32 %v2193, %v2521
      %v2523 = vpop.f32.mrf.mxu0
      %v2524 = vadd.f32 %v2195, %v2523
      %2525 = vmatmul.bf16.gmra.mxu0 %v1680
      %v2526 = vpop.f32.mrf.mxu0
      %v2527 = vadd.f32 %v2198, %v2526
      %v2528 = vpop.f32.mrf.mxu0
      %v2529 = vadd.f32 %v2200, %v2528
      %2530 = vdwg.mxu0
      %2531 = vmatpush.bf16.msra.mxu0 %v1824
      %2532 = vmatpush.bf16.msra.mxu0 %v1822
      %2533 = vmatpush.bf16.msra.mxu0 %v1820
      %2534 = vmatpush.bf16.msra.mxu0 %v1818
      %2535 = vmatpush.bf16.msra.mxu0 %v1816
      %2536 = vmatpush.bf16.msra.mxu0 %v1814
      %2537 = vmatpush.bf16.msra.mxu0 %v1812
      %2538 = vmatpush.bf16.msra.mxu0 %v1810
      %2539 = vmatmul.bf16.gmra.mxu0 %v1553
      %v2540 = vpop.f32.mrf.mxu0
      %v2541 = vadd.f32 0.0, %v2540
      %v2542 = vpop.f32.mrf.mxu0
      %v2543 = vadd.f32 0.0, %v2542
      %2544 = vmatmul.bf16.gmra.mxu0 %v1555
      %v2545 = vpop.f32.mrf.mxu0
      %v2546 = vadd.f32 0.0, %v2545
      %v2547 = vpop.f32.mrf.mxu0
      %v2548 = vadd.f32 0.0, %v2547
      %2549 = vmatmul.bf16.gmra.mxu0 %v1557
      %v2550 = vpop.f32.mrf.mxu0
      %v2551 = vadd.f32 0.0, %v2550
      %v2552 = vpop.f32.mrf.mxu0
      %v2553 = vadd.f32 0.0, %v2552
      %2554 = vmatmul.bf16.gmra.mxu0 %v1559
      %v2555 = vpop.f32.mrf.mxu0
      %v2556 = vadd.f32 0.0, %v2555
      %v2557 = vpop.f32.mrf.mxu0
      %v2558 = vadd.f32 0.0, %v2557
      %2559 = vmatmul.bf16.gmra.mxu0 %v1561
      %v2560 = vpop.f32.mrf.mxu0
      %v2561 = vadd.f32 0.0, %v2560
      %v2562 = vpop.f32.mrf.mxu0
      %v2563 = vadd.f32 0.0, %v2562
      %2564 = vmatmul.bf16.gmra.mxu0 %v1563
      %v2565 = vpop.f32.mrf.mxu0
      %v2566 = vadd.f32 0.0, %v2565
      %v2567 = vpop.f32.mrf.mxu0
      %v2568 = vadd.f32 0.0, %v2567
      %2569 = vmatmul.bf16.gmra.mxu0 %v1565
      %v2570 = vpop.f32.mrf.mxu0
      %v2571 = vadd.f32 0.0, %v2570
      %v2572 = vpop.f32.mrf.mxu0
      %v2573 = vadd.f32 0.0, %v2572
      %2574 = vmatmul.bf16.gmra.mxu0 %v1567
      %v2575 = vpop.f32.mrf.mxu0
      %v2576 = vadd.f32 0.0, %v2575
      %v2577 = vpop.f32.mrf.mxu0
      %v2578 = vadd.f32 0.0, %v2577
      %2579 = vmatmul.bf16.gmra.mxu0 %v1569
      %v2580 = vpop.f32.mrf.mxu0
      %v2581 = vadd.f32 0.0, %v2580
      %v2582 = vpop.f32.mrf.mxu0
      %v2583 = vadd.f32 0.0, %v2582
      %2584 = vmatmul.bf16.gmra.mxu0 %v1571
      %v2585 = vpop.f32.mrf.mxu0
      %v2586 = vadd.f32 0.0, %v2585
      %v2587 = vpop.f32.mrf.mxu0
      %v2588 = vadd.f32 0.0, %v2587
      %2589 = vmatmul.bf16.gmra.mxu0 %v1573
      %v2590 = vpop.f32.mrf.mxu0
      %v2591 = vadd.f32 0.0, %v2590
      %v2592 = vpop.f32.mrf.mxu0
      %v2593 = vadd.f32 0.0, %v2592
      %2594 = vmatmul.bf16.gmra.mxu0 %v1575
      %v2595 = vpop.f32.mrf.mxu0
      %v2596 = vadd.f32 0.0, %v2595
      %v2597 = vpop.f32.mrf.mxu0
      %v2598 = vadd.f32 0.0, %v2597
      %2599 = vmatmul.bf16.gmra.mxu0 %v1577
      %v2600 = vpop.f32.mrf.mxu0
      %v2601 = vadd.f32 0.0, %v2600
      %v2602 = vpop.f32.mrf.mxu0
      %v2603 = vadd.f32 0.0, %v2602
      %2604 = vmatmul.bf16.gmra.mxu0 %v1579
      %v2605 = vpop.f32.mrf.mxu0
      %v2606 = vadd.f32 0.0, %v2605
      %v2607 = vpop.f32.mrf.mxu0
      %v2608 = vadd.f32 0.0, %v2607
      %2609 = vmatmul.bf16.gmra.mxu0 %v1581
      %v2610 = vpop.f32.mrf.mxu0
      %v2611 = vadd.f32 0.0, %v2610
      %v2612 = vpop.f32.mrf.mxu0
      %v2613 = vadd.f32 0.0, %v2612
      %2614 = vmatmul.bf16.gmra.mxu0 %v1583
      %v2615 = vpop.f32.mrf.mxu0
      %v2616 = vadd.f32 0.0, %v2615
      %v2617 = vpop.f32.mrf.mxu0
      %v2618 = vadd.f32 0.0, %v2617
      %2619 = vmatmul.bf16.gmra.mxu0 %v1585
      %v2620 = vpop.f32.mrf.mxu0
      %v2621 = vadd.f32 0.0, %v2620
      %v2622 = vpop.f32.mrf.mxu0
      %v2623 = vadd.f32 0.0, %v2622
      %2624 = vmatmul.bf16.gmra.mxu0 %v1587
      %v2625 = vpop.f32.mrf.mxu0
      %v2626 = vadd.f32 0.0, %v2625
      %v2627 = vpop.f32.mrf.mxu0
      %v2628 = vadd.f32 0.0, %v2627
      %2629 = vmatmul.bf16.gmra.mxu0 %v1589
      %v2630 = vpop.f32.mrf.mxu0
      %v2631 = vadd.f32 0.0, %v2630
      %v2632 = vpop.f32.mrf.mxu0
      %v2633 = vadd.f32 0.0, %v2632
      %2634 = vmatmul.bf16.gmra.mxu0 %v1591
      %v2635 = vpop.f32.mrf.mxu0
      %v2636 = vadd.f32 0.0, %v2635
      %v2637 = vpop.f32.mrf.mxu0
      %v2638 = vadd.f32 0.0, %v2637
      %2639 = vmatmul.bf16.gmra.mxu0 %v1593
      %v2640 = vpop.f32.mrf.mxu0
      %v2641 = vadd.f32 0.0, %v2640
      %v2642 = vpop.f32.mrf.mxu0
      %v2643 = vadd.f32 0.0, %v2642
      %2644 = vmatmul.bf16.gmra.mxu0 %v1595
      %v2645 = vpop.f32.mrf.mxu0
      %v2646 = vadd.f32 0.0, %v2645
      %v2647 = vpop.f32.mrf.mxu0
      %v2648 = vadd.f32 0.0, %v2647
      %2649 = vmatmul.bf16.gmra.mxu0 %v1597
      %v2650 = vpop.f32.mrf.mxu0
      %v2651 = vadd.f32 0.0, %v2650
      %v2652 = vpop.f32.mrf.mxu0
      %v2653 = vadd.f32 0.0, %v2652
      %2654 = vmatmul.bf16.gmra.mxu0 %v1599
      %v2655 = vpop.f32.mrf.mxu0
      %v2656 = vadd.f32 0.0, %v2655
      %v2657 = vpop.f32.mrf.mxu0
      %v2658 = vadd.f32 0.0, %v2657
      %2659 = vmatmul.bf16.gmra.mxu0 %v1601
      %v2660 = vpop.f32.mrf.mxu0
      %v2661 = vadd.f32 0.0, %v2660
      %v2662 = vpop.f32.mrf.mxu0
      %v2663 = vadd.f32 0.0, %v2662
      %2664 = vmatmul.bf16.gmra.mxu0 %v1603
      %v2665 = vpop.f32.mrf.mxu0
      %v2666 = vadd.f32 0.0, %v2665
      %v2667 = vpop.f32.mrf.mxu0
      %v2668 = vadd.f32 0.0, %v2667
      %2669 = vmatmul.bf16.gmra.mxu0 %v1605
      %v2670 = vpop.f32.mrf.mxu0
      %v2671 = vadd.f32 0.0, %v2670
      %v2672 = vpop.f32.mrf.mxu0
      %v2673 = vadd.f32 0.0, %v2672
      %2674 = vmatmul.bf16.gmra.mxu0 %v1607
      %v2675 = vpop.f32.mrf.mxu0
      %v2676 = vadd.f32 0.0, %v2675
      %v2677 = vpop.f32.mrf.mxu0
      %v2678 = vadd.f32 0.0, %v2677
      %2679 = vmatmul.bf16.gmra.mxu0 %v1609
      %v2680 = vpop.f32.mrf.mxu0
      %v2681 = vadd.f32 0.0, %v2680
      %v2682 = vpop.f32.mrf.mxu0
      %v2683 = vadd.f32 0.0, %v2682
      %2684 = vmatmul.bf16.gmra.mxu0 %v1611
      %v2685 = vpop.f32.mrf.mxu0
      %v2686 = vadd.f32 0.0, %v2685
      %v2687 = vpop.f32.mrf.mxu0
      %v2688 = vadd.f32 0.0, %v2687
      %2689 = vmatmul.bf16.gmra.mxu0 %v1613
      %v2690 = vpop.f32.mrf.mxu0
      %v2691 = vadd.f32 0.0, %v2690
      %v2692 = vpop.f32.mrf.mxu0
      %v2693 = vadd.f32 0.0, %v2692
      %2694 = vmatmul.bf16.gmra.mxu0 %v1615
      %v2695 = vpop.f32.mrf.mxu0
      %v2696 = vadd.f32 0.0, %v2695
      %v2697 = vpop.f32.mrf.mxu0
      %v2698 = vadd.f32 0.0, %v2697
      %2699 = vmatmul.bf16.gmra.mxu0 %v1617
      %v2700 = vpop.f32.mrf.mxu0
      %v2701 = vadd.f32 0.0, %v2700
      %v2702 = vpop.f32.mrf.mxu0
      %v2703 = vadd.f32 0.0, %v2702
      %2704 = vmatmul.bf16.gmra.mxu0 %v1619
      %v2705 = vpop.f32.mrf.mxu0
      %v2706 = vadd.f32 0.0, %v2705
      %v2707 = vpop.f32.mrf.mxu0
      %v2708 = vadd.f32 0.0, %v2707
      %2709 = vmatmul.bf16.gmra.mxu0 %v1621
      %v2710 = vpop.f32.mrf.mxu0
      %v2711 = vadd.f32 0.0, %v2710
      %v2712 = vpop.f32.mrf.mxu0
      %v2713 = vadd.f32 0.0, %v2712
      %2714 = vmatmul.bf16.gmra.mxu0 %v1623
      %v2715 = vpop.f32.mrf.mxu0
      %v2716 = vadd.f32 0.0, %v2715
      %v2717 = vpop.f32.mrf.mxu0
      %v2718 = vadd.f32 0.0, %v2717
      %2719 = vmatmul.bf16.gmra.mxu0 %v1625
      %v2720 = vpop.f32.mrf.mxu0
      %v2721 = vadd.f32 0.0, %v2720
      %v2722 = vpop.f32.mrf.mxu0
      %v2723 = vadd.f32 0.0, %v2722
      %2724 = vmatmul.bf16.gmra.mxu0 %v1627
      %v2725 = vpop.f32.mrf.mxu0
      %v2726 = vadd.f32 0.0, %v2725
      %v2727 = vpop.f32.mrf.mxu0
      %v2728 = vadd.f32 0.0, %v2727
      %2729 = vmatmul.bf16.gmra.mxu0 %v1629
      %v2730 = vpop.f32.mrf.mxu0
      %v2731 = vadd.f32 0.0, %v2730
      %v2732 = vpop.f32.mrf.mxu0
      %v2733 = vadd.f32 0.0, %v2732
      %2734 = vmatmul.bf16.gmra.mxu0 %v1631
      %v2735 = vpop.f32.mrf.mxu0
      %v2736 = vadd.f32 0.0, %v2735
      %v2737 = vpop.f32.mrf.mxu0
      %v2738 = vadd.f32 0.0, %v2737
      %2739 = vmatmul.bf16.gmra.mxu0 %v1633
      %v2740 = vpop.f32.mrf.mxu0
      %v2741 = vadd.f32 0.0, %v2740
      %v2742 = vpop.f32.mrf.mxu0
      %v2743 = vadd.f32 0.0, %v2742
      %2744 = vmatmul.bf16.gmra.mxu0 %v1635
      %v2745 = vpop.f32.mrf.mxu0
      %v2746 = vadd.f32 0.0, %v2745
      %v2747 = vpop.f32.mrf.mxu0
      %v2748 = vadd.f32 0.0, %v2747
      %2749 = vmatmul.bf16.gmra.mxu0 %v1637
      %v2750 = vpop.f32.mrf.mxu0
      %v2751 = vadd.f32 0.0, %v2750
      %v2752 = vpop.f32.mrf.mxu0
      %v2753 = vadd.f32 0.0, %v2752
      %2754 = vmatmul.bf16.gmra.mxu0 %v1639
      %v2755 = vpop.f32.mrf.mxu0
      %v2756 = vadd.f32 0.0, %v2755
      %v2757 = vpop.f32.mrf.mxu0
      %v2758 = vadd.f32 0.0, %v2757
      %2759 = vmatmul.bf16.gmra.mxu0 %v1641
      %v2760 = vpop.f32.mrf.mxu0
      %v2761 = vadd.f32 0.0, %v2760
      %v2762 = vpop.f32.mrf.mxu0
      %v2763 = vadd.f32 0.0, %v2762
      %2764 = vmatmul.bf16.gmra.mxu0 %v1643
      %v2765 = vpop.f32.mrf.mxu0
      %v2766 = vadd.f32 0.0, %v2765
      %v2767 = vpop.f32.mrf.mxu0
      %v2768 = vadd.f32 0.0, %v2767
      %2769 = vmatmul.bf16.gmra.mxu0 %v1645
      %v2770 = vpop.f32.mrf.mxu0
      %v2771 = vadd.f32 0.0, %v2770
      %v2772 = vpop.f32.mrf.mxu0
      %v2773 = vadd.f32 0.0, %v2772
      %2774 = vmatmul.bf16.gmra.mxu0 %v1647
      %v2775 = vpop.f32.mrf.mxu0
      %v2776 = vadd.f32 0.0, %v2775
      %v2777 = vpop.f32.mrf.mxu0
      %v2778 = vadd.f32 0.0, %v2777
      %2779 = vmatmul.bf16.gmra.mxu0 %v1649
      %v2780 = vpop.f32.mrf.mxu0
      %v2781 = vadd.f32 0.0, %v2780
      %v2782 = vpop.f32.mrf.mxu0
      %v2783 = vadd.f32 0.0, %v2782
      %2784 = vmatmul.bf16.gmra.mxu0 %v1651
      %v2785 = vpop.f32.mrf.mxu0
      %v2786 = vadd.f32 0.0, %v2785
      %v2787 = vpop.f32.mrf.mxu0
      %v2788 = vadd.f32 0.0, %v2787
      %2789 = vmatmul.bf16.gmra.mxu0 %v1653
      %v2790 = vpop.f32.mrf.mxu0
      %v2791 = vadd.f32 0.0, %v2790
      %v2792 = vpop.f32.mrf.mxu0
      %v2793 = vadd.f32 0.0, %v2792
      %2794 = vmatmul.bf16.gmra.mxu0 %v1655
      %v2795 = vpop.f32.mrf.mxu0
      %v2796 = vadd.f32 0.0, %v2795
      %v2797 = vpop.f32.mrf.mxu0
      %v2798 = vadd.f32 0.0, %v2797
      %2799 = vmatmul.bf16.gmra.mxu0 %v1657
      %v2800 = vpop.f32.mrf.mxu0
      %v2801 = vadd.f32 0.0, %v2800
      %v2802 = vpop.f32.mrf.mxu0
      %v2803 = vadd.f32 0.0, %v2802
      %2804 = vmatmul.bf16.gmra.mxu0 %v1659
      %v2805 = vpop.f32.mrf.mxu0
      %v2806 = vadd.f32 0.0, %v2805
      %v2807 = vpop.f32.mrf.mxu0
      %v2808 = vadd.f32 0.0, %v2807
      %2809 = vmatmul.bf16.gmra.mxu0 %v1661
      %v2810 = vpop.f32.mrf.mxu0
      %v2811 = vadd.f32 0.0, %v2810
      %v2812 = vpop.f32.mrf.mxu0
      %v2813 = vadd.f32 0.0, %v2812
      %2814 = vmatmul.bf16.gmra.mxu0 %v1663
      %v2815 = vpop.f32.mrf.mxu0
      %v2816 = vadd.f32 0.0, %v2815
      %v2817 = vpop.f32.mrf.mxu0
      %v2818 = vadd.f32 0.0, %v2817
      %2819 = vmatmul.bf16.gmra.mxu0 %v1665
      %v2820 = vpop.f32.mrf.mxu0
      %v2821 = vadd.f32 0.0, %v2820
      %v2822 = vpop.f32.mrf.mxu0
      %v2823 = vadd.f32 0.0, %v2822
      %2824 = vmatmul.bf16.gmra.mxu0 %v1667
      %v2825 = vpop.f32.mrf.mxu0
      %v2826 = vadd.f32 0.0, %v2825
      %v2827 = vpop.f32.mrf.mxu0
      %v2828 = vadd.f32 0.0, %v2827
      %2829 = vmatmul.bf16.gmra.mxu0 %v1669
      %v2830 = vpop.f32.mrf.mxu0
      %v2831 = vadd.f32 0.0, %v2830
      %v2832 = vpop.f32.mrf.mxu0
      %v2833 = vadd.f32 0.0, %v2832
      %2834 = vmatmul.bf16.gmra.mxu0 %v1671
      %v2835 = vpop.f32.mrf.mxu0
      %v2836 = vadd.f32 0.0, %v2835
      %v2837 = vpop.f32.mrf.mxu0
      %v2838 = vadd.f32 0.0, %v2837
      %2839 = vmatmul.bf16.gmra.mxu0 %v1673
      %v2840 = vpop.f32.mrf.mxu0
      %v2841 = vadd.f32 0.0, %v2840
      %v2842 = vpop.f32.mrf.mxu0
      %v2843 = vadd.f32 0.0, %v2842
      %2844 = vmatmul.bf16.gmra.mxu0 %v1675
      %v2845 = vpop.f32.mrf.mxu0
      %v2846 = vadd.f32 0.0, %v2845
      %v2847 = vpop.f32.mrf.mxu0
      %v2848 = vadd.f32 0.0, %v2847
      %2849 = vmatmul.bf16.gmra.mxu0 %v1677
      %v2850 = vpop.f32.mrf.mxu0
      %v2851 = vadd.f32 0.0, %v2850
      %v2852 = vpop.f32.mrf.mxu0
      %v2853 = vadd.f32 0.0, %v2852
      %2854 = vmatmul.bf16.gmra.mxu0 %v1679
      %v2855 = vpop.f32.mrf.mxu0
      %v2856 = vadd.f32 0.0, %v2855
      %v2857 = vpop.f32.mrf.mxu0
      %v2858 = vadd.f32 0.0, %v2857
      %2859 = vdwg.mxu0
      %2860 = vmatpush.bf16.msra.mxu0 %v1840
      %2861 = vmatpush.bf16.msra.mxu0 %v1838
      %2862 = vmatpush.bf16.msra.mxu0 %v1836
      %2863 = vmatpush.bf16.msra.mxu0 %v1834
      %2864 = vmatpush.bf16.msra.mxu0 %v1832
      %2865 = vmatpush.bf16.msra.mxu0 %v1830
      %2866 = vmatpush.bf16.msra.mxu0 %v1828
      %2867 = vmatpush.bf16.msra.mxu0 %v1826
      %2868 = vmatmul.bf16.gmra.mxu0 %v1554
      %v2869 = vpop.f32.mrf.mxu0
      %v2870 = vadd.f32 %v2541, %v2869
      %v2871 = vpop.f32.mrf.mxu0
      %v2872 = vadd.f32 %v2543, %v2871
      %2873 = vmatmul.bf16.gmra.mxu0 %v1556
      %v2874 = vpop.f32.mrf.mxu0
      %v2875 = vadd.f32 %v2546, %v2874
      %v2876 = vpop.f32.mrf.mxu0
      %v2877 = vadd.f32 %v2548, %v2876
      %2878 = vmatmul.bf16.gmra.mxu0 %v1558
      %v2879 = vpop.f32.mrf.mxu0
      %v2880 = vadd.f32 %v2551, %v2879
      %v2881 = vpop.f32.mrf.mxu0
      %v2882 = vadd.f32 %v2553, %v2881
      %2883 = vmatmul.bf16.gmra.mxu0 %v1560
      %v2884 = vpop.f32.mrf.mxu0
      %v2885 = vadd.f32 %v2556, %v2884
      %v2886 = vpop.f32.mrf.mxu0
      %v2887 = vadd.f32 %v2558, %v2886
      %2888 = vmatmul.bf16.gmra.mxu0 %v1562
      %v2889 = vpop.f32.mrf.mxu0
      %v2890 = vadd.f32 %v2561, %v2889
      %v2891 = vpop.f32.mrf.mxu0
      %v2892 = vadd.f32 %v2563, %v2891
      %2893 = vmatmul.bf16.gmra.mxu0 %v1564
      %v2894 = vpop.f32.mrf.mxu0
      %v2895 = vadd.f32 %v2566, %v2894
      %v2896 = vpop.f32.mrf.mxu0
      %v2897 = vadd.f32 %v2568, %v2896
      %2898 = vmatmul.bf16.gmra.mxu0 %v1566
      %v2899 = vpop.f32.mrf.mxu0
      %v2900 = vadd.f32 %v2571, %v2899
      %v2901 = vpop.f32.mrf.mxu0
      %v2902 = vadd.f32 %v2573, %v2901
      %2903 = vmatmul.bf16.gmra.mxu0 %v1568
      %v2904 = vpop.f32.mrf.mxu0
      %v2905 = vadd.f32 %v2576, %v2904
      %v2906 = vpop.f32.mrf.mxu0
      %v2907 = vadd.f32 %v2578, %v2906
      %2908 = vmatmul.bf16.gmra.mxu0 %v1570
      %v2909 = vpop.f32.mrf.mxu0
      %v2910 = vadd.f32 %v2581, %v2909
      %v2911 = vpop.f32.mrf.mxu0
      %v2912 = vadd.f32 %v2583, %v2911
      %2913 = vmatmul.bf16.gmra.mxu0 %v1572
      %v2914 = vpop.f32.mrf.mxu0
      %v2915 = vadd.f32 %v2586, %v2914
      %v2916 = vpop.f32.mrf.mxu0
      %v2917 = vadd.f32 %v2588, %v2916
      %2918 = vmatmul.bf16.gmra.mxu0 %v1574
      %v2919 = vpop.f32.mrf.mxu0
      %v2920 = vadd.f32 %v2591, %v2919
      %v2921 = vpop.f32.mrf.mxu0
      %v2922 = vadd.f32 %v2593, %v2921
      %2923 = vmatmul.bf16.gmra.mxu0 %v1576
      %v2924 = vpop.f32.mrf.mxu0
      %v2925 = vadd.f32 %v2596, %v2924
      %v2926 = vpop.f32.mrf.mxu0
      %v2927 = vadd.f32 %v2598, %v2926
      %2928 = vmatmul.bf16.gmra.mxu0 %v1578
      %v2929 = vpop.f32.mrf.mxu0
      %v2930 = vadd.f32 %v2601, %v2929
      %v2931 = vpop.f32.mrf.mxu0
      %v2932 = vadd.f32 %v2603, %v2931
      %2933 = vmatmul.bf16.gmra.mxu0 %v1580
      %v2934 = vpop.f32.mrf.mxu0
      %v2935 = vadd.f32 %v2606, %v2934
      %v2936 = vpop.f32.mrf.mxu0
      %v2937 = vadd.f32 %v2608, %v2936
      %2938 = vmatmul.bf16.gmra.mxu0 %v1582
      %v2939 = vpop.f32.mrf.mxu0
      %v2940 = vadd.f32 %v2611, %v2939
      %v2941 = vpop.f32.mrf.mxu0
      %v2942 = vadd.f32 %v2613, %v2941
      %2943 = vmatmul.bf16.gmra.mxu0 %v1584
      %v2944 = vpop.f32.mrf.mxu0
      %v2945 = vadd.f32 %v2616, %v2944
      %v2946 = vpop.f32.mrf.mxu0
      %v2947 = vadd.f32 %v2618, %v2946
      %2948 = vmatmul.bf16.gmra.mxu0 %v1586
      %v2949 = vpop.f32.mrf.mxu0
      %v2950 = vadd.f32 %v2621, %v2949
      %v2951 = vpop.f32.mrf.mxu0
      %v2952 = vadd.f32 %v2623, %v2951
      %2953 = vmatmul.bf16.gmra.mxu0 %v1588
      %v2954 = vpop.f32.mrf.mxu0
      %v2955 = vadd.f32 %v2626, %v2954
      %v2956 = vpop.f32.mrf.mxu0
      %v2957 = vadd.f32 %v2628, %v2956
      %2958 = vmatmul.bf16.gmra.mxu0 %v1590
      %v2959 = vpop.f32.mrf.mxu0
      %v2960 = vadd.f32 %v2631, %v2959
      %v2961 = vpop.f32.mrf.mxu0
      %v2962 = vadd.f32 %v2633, %v2961
      %2963 = vmatmul.bf16.gmra.mxu0 %v1592
      %v2964 = vpop.f32.mrf.mxu0
      %v2965 = vadd.f32 %v2636, %v2964
      %v2966 = vpop.f32.mrf.mxu0
      %v2967 = vadd.f32 %v2638, %v2966
      %2968 = vmatmul.bf16.gmra.mxu0 %v1594
      %v2969 = vpop.f32.mrf.mxu0
      %v2970 = vadd.f32 %v2641, %v2969
      %v2971 = vpop.f32.mrf.mxu0
      %v2972 = vadd.f32 %v2643, %v2971
      %2973 = vmatmul.bf16.gmra.mxu0 %v1596
      %v2974 = vpop.f32.mrf.mxu0
      %v2975 = vadd.f32 %v2646, %v2974
      %v2976 = vpop.f32.mrf.mxu0
      %v2977 = vadd.f32 %v2648, %v2976
      %2978 = vmatmul.bf16.gmra.mxu0 %v1598
      %v2979 = vpop.f32.mrf.mxu0
      %v2980 = vadd.f32 %v2651, %v2979
      %v2981 = vpop.f32.mrf.mxu0
      %v2982 = vadd.f32 %v2653, %v2981
      %2983 = vmatmul.bf16.gmra.mxu0 %v1600
      %v2984 = vpop.f32.mrf.mxu0
      %v2985 = vadd.f32 %v2656, %v2984
      %v2986 = vpop.f32.mrf.mxu0
      %v2987 = vadd.f32 %v2658, %v2986
      %2988 = vmatmul.bf16.gmra.mxu0 %v1602
      %v2989 = vpop.f32.mrf.mxu0
      %v2990 = vadd.f32 %v2661, %v2989
      %v2991 = vpop.f32.mrf.mxu0
      %v2992 = vadd.f32 %v2663, %v2991
      %2993 = vmatmul.bf16.gmra.mxu0 %v1604
      %v2994 = vpop.f32.mrf.mxu0
      %v2995 = vadd.f32 %v2666, %v2994
      %v2996 = vpop.f32.mrf.mxu0
      %v2997 = vadd.f32 %v2668, %v2996
      %2998 = vmatmul.bf16.gmra.mxu0 %v1606
      %v2999 = vpop.f32.mrf.mxu0
      %v3000 = vadd.f32 %v2671, %v2999
      %v3001 = vpop.f32.mrf.mxu0
      %v3002 = vadd.f32 %v2673, %v3001
      %3003 = vmatmul.bf16.gmra.mxu0 %v1608
      %v3004 = vpop.f32.mrf.mxu0
      %v3005 = vadd.f32 %v2676, %v3004
      %v3006 = vpop.f32.mrf.mxu0
      %v3007 = vadd.f32 %v2678, %v3006
      %3008 = vmatmul.bf16.gmra.mxu0 %v1610
      %v3009 = vpop.f32.mrf.mxu0
      %v3010 = vadd.f32 %v2681, %v3009
      %v3011 = vpop.f32.mrf.mxu0
      %v3012 = vadd.f32 %v2683, %v3011
      %3013 = vmatmul.bf16.gmra.mxu0 %v1612
      %v3014 = vpop.f32.mrf.mxu0
      %v3015 = vadd.f32 %v2686, %v3014
      %v3016 = vpop.f32.mrf.mxu0
      %v3017 = vadd.f32 %v2688, %v3016
      %3018 = vmatmul.bf16.gmra.mxu0 %v1614
      %v3019 = vpop.f32.mrf.mxu0
      %v3020 = vadd.f32 %v2691, %v3019
      %v3021 = vpop.f32.mrf.mxu0
      %v3022 = vadd.f32 %v2693, %v3021
      %3023 = vmatmul.bf16.gmra.mxu0 %v1616
      %v3024 = vpop.f32.mrf.mxu0
      %v3025 = vadd.f32 %v2696, %v3024
      %v3026 = vpop.f32.mrf.mxu0
      %v3027 = vadd.f32 %v2698, %v3026
      %3028 = vmatmul.bf16.gmra.mxu0 %v1618
      %v3029 = vpop.f32.mrf.mxu0
      %v3030 = vadd.f32 %v2701, %v3029
      %v3031 = vpop.f32.mrf.mxu0
      %v3032 = vadd.f32 %v2703, %v3031
      %3033 = vmatmul.bf16.gmra.mxu0 %v1620
      %v3034 = vpop.f32.mrf.mxu0
      %v3035 = vadd.f32 %v2706, %v3034
      %v3036 = vpop.f32.mrf.mxu0
      %v3037 = vadd.f32 %v2708, %v3036
      %3038 = vmatmul.bf16.gmra.mxu0 %v1622
      %v3039 = vpop.f32.mrf.mxu0
      %v3040 = vadd.f32 %v2711, %v3039
      %v3041 = vpop.f32.mrf.mxu0
      %v3042 = vadd.f32 %v2713, %v3041
      %3043 = vmatmul.bf16.gmra.mxu0 %v1624
      %v3044 = vpop.f32.mrf.mxu0
      %v3045 = vadd.f32 %v2716, %v3044
      %v3046 = vpop.f32.mrf.mxu0
      %v3047 = vadd.f32 %v2718, %v3046
      %3048 = vmatmul.bf16.gmra.mxu0 %v1626
      %v3049 = vpop.f32.mrf.mxu0
      %v3050 = vadd.f32 %v2721, %v3049
      %v3051 = vpop.f32.mrf.mxu0
      %v3052 = vadd.f32 %v2723, %v3051
      %3053 = vmatmul.bf16.gmra.mxu0 %v1628
      %v3054 = vpop.f32.mrf.mxu0
      %v3055 = vadd.f32 %v2726, %v3054
      %v3056 = vpop.f32.mrf.mxu0
      %v3057 = vadd.f32 %v2728, %v3056
      %3058 = vmatmul.bf16.gmra.mxu0 %v1630
      %v3059 = vpop.f32.mrf.mxu0
      %v3060 = vadd.f32 %v2731, %v3059
      %v3061 = vpop.f32.mrf.mxu0
      %v3062 = vadd.f32 %v2733, %v3061
      %3063 = vmatmul.bf16.gmra.mxu0 %v1632
      %v3064 = vpop.f32.mrf.mxu0
      %v3065 = vadd.f32 %v2736, %v3064
      %v3066 = vpop.f32.mrf.mxu0
      %v3067 = vadd.f32 %v2738, %v3066
      %3068 = vmatmul.bf16.gmra.mxu0 %v1634
      %v3069 = vpop.f32.mrf.mxu0
      %v3070 = vadd.f32 %v2741, %v3069
      %v3071 = vpop.f32.mrf.mxu0
      %v3072 = vadd.f32 %v2743, %v3071
      %3073 = vmatmul.bf16.gmra.mxu0 %v1636
      %v3074 = vpop.f32.mrf.mxu0
      %v3075 = vadd.f32 %v2746, %v3074
      %v3076 = vpop.f32.mrf.mxu0
      %v3077 = vadd.f32 %v2748, %v3076
      %3078 = vmatmul.bf16.gmra.mxu0 %v1638
      %v3079 = vpop.f32.mrf.mxu0
      %v3080 = vadd.f32 %v2751, %v3079
      %v3081 = vpop.f32.mrf.mxu0
      %v3082 = vadd.f32 %v2753, %v3081
      %3083 = vmatmul.bf16.gmra.mxu0 %v1640
      %v3084 = vpop.f32.mrf.mxu0
      %v3085 = vadd.f32 %v2756, %v3084
      %v3086 = vpop.f32.mrf.mxu0
      %v3087 = vadd.f32 %v2758, %v3086
      %3088 = vmatmul.bf16.gmra.mxu0 %v1642
      %v3089 = vpop.f32.mrf.mxu0
      %v3090 = vadd.f32 %v2761, %v3089
      %v3091 = vpop.f32.mrf.mxu0
      %v3092 = vadd.f32 %v2763, %v3091
      %3093 = vmatmul.bf16.gmra.mxu0 %v1644
      %v3094 = vpop.f32.mrf.mxu0
      %v3095 = vadd.f32 %v2766, %v3094
      %v3096 = vpop.f32.mrf.mxu0
      %v3097 = vadd.f32 %v2768, %v3096
      %3098 = vmatmul.bf16.gmra.mxu0 %v1646
      %v3099 = vpop.f32.mrf.mxu0
      %v3100 = vadd.f32 %v2771, %v3099
      %v3101 = vpop.f32.mrf.mxu0
      %v3102 = vadd.f32 %v2773, %v3101
      %3103 = vmatmul.bf16.gmra.mxu0 %v1648
      %v3104 = vpop.f32.mrf.mxu0
      %v3105 = vadd.f32 %v2776, %v3104
      %v3106 = vpop.f32.mrf.mxu0
      %v3107 = vadd.f32 %v2778, %v3106
      %3108 = vmatmul.bf16.gmra.mxu0 %v1650
      %v3109 = vpop.f32.mrf.mxu0
      %v3110 = vadd.f32 %v2781, %v3109
      %v3111 = vpop.f32.mrf.mxu0
      %v3112 = vadd.f32 %v2783, %v3111
      %3113 = vmatmul.bf16.gmra.mxu0 %v1652
      %v3114 = vpop.f32.mrf.mxu0
      %v3115 = vadd.f32 %v2786, %v3114
      %v3116 = vpop.f32.mrf.mxu0
      %v3117 = vadd.f32 %v2788, %v3116
      %3118 = vmatmul.bf16.gmra.mxu0 %v1654
      %v3119 = vpop.f32.mrf.mxu0
      %v3120 = vadd.f32 %v2791, %v3119
      %v3121 = vpop.f32.mrf.mxu0
      %v3122 = vadd.f32 %v2793, %v3121
      %3123 = vmatmul.bf16.gmra.mxu0 %v1656
      %v3124 = vpop.f32.mrf.mxu0
      %v3125 = vadd.f32 %v2796, %v3124
      %v3126 = vpop.f32.mrf.mxu0
      %v3127 = vadd.f32 %v2798, %v3126
      %3128 = vmatmul.bf16.gmra.mxu0 %v1658
      %v3129 = vpop.f32.mrf.mxu0
      %v3130 = vadd.f32 %v2801, %v3129
      %v3131 = vpop.f32.mrf.mxu0
      %v3132 = vadd.f32 %v2803, %v3131
      %3133 = vmatmul.bf16.gmra.mxu0 %v1660
      %v3134 = vpop.f32.mrf.mxu0
      %v3135 = vadd.f32 %v2806, %v3134
      %v3136 = vpop.f32.mrf.mxu0
      %v3137 = vadd.f32 %v2808, %v3136
      %3138 = vmatmul.bf16.gmra.mxu0 %v1662
      %v3139 = vpop.f32.mrf.mxu0
      %v3140 = vadd.f32 %v2811, %v3139
      %v3141 = vpop.f32.mrf.mxu0
      %v3142 = vadd.f32 %v2813, %v3141
      %3143 = vmatmul.bf16.gmra.mxu0 %v1664
      %v3144 = vpop.f32.mrf.mxu0
      %v3145 = vadd.f32 %v2816, %v3144
      %v3146 = vpop.f32.mrf.mxu0
      %v3147 = vadd.f32 %v2818, %v3146
      %3148 = vmatmul.bf16.gmra.mxu0 %v1666
      %v3149 = vpop.f32.mrf.mxu0
      %v3150 = vadd.f32 %v2821, %v3149
      %v3151 = vpop.f32.mrf.mxu0
      %v3152 = vadd.f32 %v2823, %v3151
      %3153 = vmatmul.bf16.gmra.mxu0 %v1668
      %v3154 = vpop.f32.mrf.mxu0
      %v3155 = vadd.f32 %v2826, %v3154
      %v3156 = vpop.f32.mrf.mxu0
      %v3157 = vadd.f32 %v2828, %v3156
      %3158 = vmatmul.bf16.gmra.mxu0 %v1670
      %v3159 = vpop.f32.mrf.mxu0
      %v3160 = vadd.f32 %v2831, %v3159
      %v3161 = vpop.f32.mrf.mxu0
      %v3162 = vadd.f32 %v2833, %v3161
      %3163 = vmatmul.bf16.gmra.mxu0 %v1672
      %v3164 = vpop.f32.mrf.mxu0
      %v3165 = vadd.f32 %v2836, %v3164
      %v3166 = vpop.f32.mrf.mxu0
      %v3167 = vadd.f32 %v2838, %v3166
      %3168 = vmatmul.bf16.gmra.mxu0 %v1674
      %v3169 = vpop.f32.mrf.mxu0
      %v3170 = vadd.f32 %v2841, %v3169
      %v3171 = vpop.f32.mrf.mxu0
      %v3172 = vadd.f32 %v2843, %v3171
      %3173 = vmatmul.bf16.gmra.mxu0 %v1676
      %v3174 = vpop.f32.mrf.mxu0
      %v3175 = vadd.f32 %v2846, %v3174
      %v3176 = vpop.f32.mrf.mxu0
      %v3177 = vadd.f32 %v2848, %v3176
      %3178 = vmatmul.bf16.gmra.mxu0 %v1678
      %v3179 = vpop.f32.mrf.mxu0
      %v3180 = vadd.f32 %v2851, %v3179
      %v3181 = vpop.f32.mrf.mxu0
      %v3182 = vadd.f32 %v2853, %v3181
      %3183 = vmatmul.bf16.gmra.mxu0 %v1680
      %v3184 = vpop.f32.mrf.mxu0
      %v3185 = vadd.f32 %v2856, %v3184
      %v3186 = vpop.f32.mrf.mxu0
      %v3187 = vadd.f32 %v2858, %v3186
      %3188 = vdwg.mxu0
      %v3189 = vmax.f32 %v2212, 0.0
      %v3190 = vmax.f32 %v2870, 0.0
      %v3191 = vmax.f32 %v2214, 0.0
      %v3192 = vmax.f32 %v2872, 0.0
      %v3193 = vmax.f32 %v2217, 0.0
      %v3194 = vmax.f32 %v2875, 0.0
      %v3195 = vmax.f32 %v2219, 0.0
      %v3196 = vmax.f32 %v2877, 0.0
      %v3197 = vmax.f32 %v2222, 0.0
      %v3198 = vmax.f32 %v2880, 0.0
      %v3199 = vmax.f32 %v2224, 0.0
      %v3200 = vmax.f32 %v2882, 0.0
      %v3201 = vmax.f32 %v2227, 0.0
      %v3202 = vmax.f32 %v2885, 0.0
      %v3203 = vmax.f32 %v2229, 0.0
      %v3204 = vmax.f32 %v2887, 0.0
      %v3205 = vmax.f32 %v2232, 0.0
      %v3206 = vmax.f32 %v2890, 0.0
      %v3207 = vmax.f32 %v2234, 0.0
      %v3208 = vmax.f32 %v2892, 0.0
      %v3209 = vmax.f32 %v2237, 0.0
      %v3210 = vmax.f32 %v2895, 0.0
      %v3211 = vmax.f32 %v2239, 0.0
      %v3212 = vmax.f32 %v2897, 0.0
      %v3213 = vmax.f32 %v2242, 0.0
      %v3214 = vmax.f32 %v2900, 0.0
      %v3215 = vmax.f32 %v2244, 0.0
      %v3216 = vmax.f32 %v2902, 0.0
      %v3217 = vmax.f32 %v2247, 0.0
      %v3218 = vmax.f32 %v2905, 0.0
      %v3219 = vmax.f32 %v2249, 0.0
      %v3220 = vmax.f32 %v2907, 0.0
      %v3221 = vmax.f32 %v2252, 0.0
      %v3222 = vmax.f32 %v2910, 0.0
      %v3223 = vmax.f32 %v2254, 0.0
      %v3224 = vmax.f32 %v2912, 0.0
      %v3225 = vmax.f32 %v2257, 0.0
      %v3226 = vmax.f32 %v2915, 0.0
      %v3227 = vmax.f32 %v2259, 0.0
      %v3228 = vmax.f32 %v2917, 0.0
      %v3229 = vmax.f32 %v2262, 0.0
      %v3230 = vmax.f32 %v2920, 0.0
      %v3231 = vmax.f32 %v2264, 0.0
      %v3232 = vmax.f32 %v2922, 0.0
      %v3233 = vmax.f32 %v2267, 0.0
      %v3234 = vmax.f32 %v2925, 0.0
      %v3235 = vmax.f32 %v2269, 0.0
      %v3236 = vmax.f32 %v2927, 0.0
      %v3237 = vmax.f32 %v2272, 0.0
      %v3238 = vmax.f32 %v2930, 0.0
      %v3239 = vmax.f32 %v2274, 0.0
      %v3240 = vmax.f32 %v2932, 0.0
      %v3241 = vmax.f32 %v2277, 0.0
      %v3242 = vmax.f32 %v2935, 0.0
      %v3243 = vmax.f32 %v2279, 0.0
      %v3244 = vmax.f32 %v2937, 0.0
      %v3245 = vmax.f32 %v2282, 0.0
      %v3246 = vmax.f32 %v2940, 0.0
      %v3247 = vmax.f32 %v2284, 0.0
      %v3248 = vmax.f32 %v2942, 0.0
      %v3249 = vmax.f32 %v2287, 0.0
      %v3250 = vmax.f32 %v2945, 0.0
      %v3251 = vmax.f32 %v2289, 0.0
      %v3252 = vmax.f32 %v2947, 0.0
      %v3253 = vmax.f32 %v2292, 0.0
      %v3254 = vmax.f32 %v2950, 0.0
      %v3255 = vmax.f32 %v2294, 0.0
      %v3256 = vmax.f32 %v2952, 0.0
      %v3257 = vmax.f32 %v2297, 0.0
      %v3258 = vmax.f32 %v2955, 0.0
      %v3259 = vmax.f32 %v2299, 0.0
      %v3260 = vmax.f32 %v2957, 0.0
      %v3261 = vmax.f32 %v2302, 0.0
      %v3262 = vmax.f32 %v2960, 0.0
      %v3263 = vmax.f32 %v2304, 0.0
      %v3264 = vmax.f32 %v2962, 0.0
      %v3265 = vmax.f32 %v2307, 0.0
      %v3266 = vmax.f32 %v2965, 0.0
      %v3267 = vmax.f32 %v2309, 0.0
      %v3268 = vmax.f32 %v2967, 0.0
      %v3269 = vmax.f32 %v2312, 0.0
      %v3270 = vmax.f32 %v2970, 0.0
      %v3271 = vmax.f32 %v2314, 0.0
      %v3272 = vmax.f32 %v2972, 0.0
      %v3273 = vmax.f32 %v2317, 0.0
      %v3274 = vmax.f32 %v2975, 0.0
      %v3275 = vmax.f32 %v2319, 0.0
      %v3276 = vmax.f32 %v2977, 0.0
      %v3277 = vmax.f32 %v2322, 0.0
      %v3278 = vmax.f32 %v2980, 0.0
      %v3279 = vmax.f32 %v2324, 0.0
      %v3280 = vmax.f32 %v2982, 0.0
      %v3281 = vmax.f32 %v2327, 0.0
      %v3282 = vmax.f32 %v2985, 0.0
      %v3283 = vmax.f32 %v2329, 0.0
      %v3284 = vmax.f32 %v2987, 0.0
      %v3285 = vmax.f32 %v2332, 0.0
      %v3286 = vmax.f32 %v2990, 0.0
      %v3287 = vmax.f32 %v2334, 0.0
      %v3288 = vmax.f32 %v2992, 0.0
      %v3289 = vmax.f32 %v2337, 0.0
      %v3290 = vmax.f32 %v2995, 0.0
      %v3291 = vmax.f32 %v2339, 0.0
      %v3292 = vmax.f32 %v2997, 0.0
      %v3293 = vmax.f32 %v2342, 0.0
      %v3294 = vmax.f32 %v3000, 0.0
      %v3295 = vmax.f32 %v2344, 0.0
      %v3296 = vmax.f32 %v3002, 0.0
      %v3297 = vmax.f32 %v2347, 0.0
      %v3298 = vmax.f32 %v3005, 0.0
      %v3299 = vmax.f32 %v2349, 0.0
      %v3300 = vmax.f32 %v3007, 0.0
      %v3301 = vmax.f32 %v2352, 0.0
      %v3302 = vmax.f32 %v3010, 0.0
      %v3303 = vmax.f32 %v2354, 0.0
      %v3304 = vmax.f32 %v3012, 0.0
      %v3305 = vmax.f32 %v2357, 0.0
      %v3306 = vmax.f32 %v3015, 0.0
      %v3307 = vmax.f32 %v2359, 0.0
      %v3308 = vmax.f32 %v3017, 0.0
      %v3309 = vmax.f32 %v2362, 0.0
      %v3310 = vmax.f32 %v3020, 0.0
      %v3311 = vmax.f32 %v2364, 0.0
      %v3312 = vmax.f32 %v3022, 0.0
      %v3313 = vmax.f32 %v2367, 0.0
      %v3314 = vmax.f32 %v3025, 0.0
      %v3315 = vmax.f32 %v2369, 0.0
      %v3316 = vmax.f32 %v3027, 0.0
      %v3317 = vmax.f32 %v2372, 0.0
      %v3318 = vmax.f32 %v3030, 0.0
      %v3319 = vmax.f32 %v2374, 0.0
      %v3320 = vmax.f32 %v3032, 0.0
      %v3321 = vmax.f32 %v2377, 0.0
      %v3322 = vmax.f32 %v3035, 0.0
      %v3323 = vmax.f32 %v2379, 0.0
      %v3324 = vmax.f32 %v3037, 0.0
      %v3325 = vmax.f32 %v2382, 0.0
      %v3326 = vmax.f32 %v3040, 0.0
      %v3327 = vmax.f32 %v2384, 0.0
      %v3328 = vmax.f32 %v3042, 0.0
      %v3329 = vmax.f32 %v2387, 0.0
      %v3330 = vmax.f32 %v3045, 0.0
      %v3331 = vmax.f32 %v2389, 0.0
      %v3332 = vmax.f32 %v3047, 0.0
      %v3333 = vmax.f32 %v2392, 0.0
      %v3334 = vmax.f32 %v3050, 0.0
      %v3335 = vmax.f32 %v2394, 0.0
      %v3336 = vmax.f32 %v3052, 0.0
      %v3337 = vmax.f32 %v2397, 0.0
      %v3338 = vmax.f32 %v3055, 0.0
      %v3339 = vmax.f32 %v2399, 0.0
      %v3340 = vmax.f32 %v3057, 0.0
      %v3341 = vmax.f32 %v2402, 0.0
      %v3342 = vmax.f32 %v3060, 0.0
      %v3343 = vmax.f32 %v2404, 0.0
      %v3344 = vmax.f32 %v3062, 0.0
      %v3345 = vmax.f32 %v2407, 0.0
      %v3346 = vmax.f32 %v3065, 0.0
      %v3347 = vmax.f32 %v2409, 0.0
      %v3348 = vmax.f32 %v3067, 0.0
      %v3349 = vmax.f32 %v2412, 0.0
      %v3350 = vmax.f32 %v3070, 0.0
      %v3351 = vmax.f32 %v2414, 0.0
      %v3352 = vmax.f32 %v3072, 0.0
      %v3353 = vmax.f32 %v2417, 0.0
      %v3354 = vmax.f32 %v3075, 0.0
      %v3355 = vmax.f32 %v2419, 0.0
      %v3356 = vmax.f32 %v3077, 0.0
      %v3357 = vmax.f32 %v2422, 0.0
      %v3358 = vmax.f32 %v3080, 0.0
      %v3359 = vmax.f32 %v2424, 0.0
      %v3360 = vmax.f32 %v3082, 0.0
      %v3361 = vmax.f32 %v2427, 0.0
      %v3362 = vmax.f32 %v3085, 0.0
      %v3363 = vmax.f32 %v2429, 0.0
      %v3364 = vmax.f32 %v3087, 0.0
      %v3365 = vmax.f32 %v2432, 0.0
      %v3366 = vmax.f32 %v3090, 0.0
      %v3367 = vmax.f32 %v2434, 0.0
      %v3368 = vmax.f32 %v3092, 0.0
      %v3369 = vmax.f32 %v2437, 0.0
      %v3370 = vmax.f32 %v3095, 0.0
      %v3371 = vmax.f32 %v2439, 0.0
      %v3372 = vmax.f32 %v3097, 0.0
      %v3373 = vmax.f32 %v2442, 0.0
      %v3374 = vmax.f32 %v3100, 0.0
      %v3375 = vmax.f32 %v2444, 0.0
      %v3376 = vmax.f32 %v3102, 0.0
      %v3377 = vmax.f32 %v2447, 0.0
      %v3378 = vmax.f32 %v3105, 0.0
      %v3379 = vmax.f32 %v2449, 0.0
      %v3380 = vmax.f32 %v3107, 0.0
      %v3381 = vmax.f32 %v2452, 0.0
      %v3382 = vmax.f32 %v3110, 0.0
      %v3383 = vmax.f32 %v2454, 0.0
      %v3384 = vmax.f32 %v3112, 0.0
      %v3385 = vmax.f32 %v2457, 0.0
      %v3386 = vmax.f32 %v3115, 0.0
      %v3387 = vmax.f32 %v2459, 0.0
      %v3388 = vmax.f32 %v3117, 0.0
      %v3389 = vmax.f32 %v2462, 0.0
      %v3390 = vmax.f32 %v3120, 0.0
      %v3391 = vmax.f32 %v2464, 0.0
      %v3392 = vmax.f32 %v3122, 0.0
      %v3393 = vmax.f32 %v2467, 0.0
      %v3394 = vmax.f32 %v3125, 0.0
      %v3395 = vmax.f32 %v2469, 0.0
      %v3396 = vmax.f32 %v3127, 0.0
      %v3397 = vmax.f32 %v2472, 0.0
      %v3398 = vmax.f32 %v3130, 0.0
      %v3399 = vmax.f32 %v2474, 0.0
      %v3400 = vmax.f32 %v3132, 0.0
      %v3401 = vmax.f32 %v2477, 0.0
      %v3402 = vmax.f32 %v3135, 0.0
      %v3403 = vmax.f32 %v2479, 0.0
      %v3404 = vmax.f32 %v3137, 0.0
      %v3405 = vmax.f32 %v2482, 0.0
      %v3406 = vmax.f32 %v3140, 0.0
      %v3407 = vmax.f32 %v2484, 0.0
      %v3408 = vmax.f32 %v3142, 0.0
      %v3409 = vmax.f32 %v2487, 0.0
      %v3410 = vmax.f32 %v3145, 0.0
      %v3411 = vmax.f32 %v2489, 0.0
      %v3412 = vmax.f32 %v3147, 0.0
      %v3413 = vmax.f32 %v2492, 0.0
      %v3414 = vmax.f32 %v3150, 0.0
      %v3415 = vmax.f32 %v2494, 0.0
      %v3416 = vmax.f32 %v3152, 0.0
      %v3417 = vmax.f32 %v2497, 0.0
      %v3418 = vmax.f32 %v3155, 0.0
      %v3419 = vmax.f32 %v2499, 0.0
      %v3420 = vmax.f32 %v3157, 0.0
      %v3421 = vmax.f32 %v2502, 0.0
      %v3422 = vmax.f32 %v3160, 0.0
      %v3423 = vmax.f32 %v2504, 0.0
      %v3424 = vmax.f32 %v3162, 0.0
      %v3425 = vmax.f32 %v2507, 0.0
      %v3426 = vmax.f32 %v3165, 0.0
      %v3427 = vmax.f32 %v2509, 0.0
      %v3428 = vmax.f32 %v3167, 0.0
      %v3429 = vmax.f32 %v2512, 0.0
      %v3430 = vmax.f32 %v3170, 0.0
      %v3431 = vmax.f32 %v2514, 0.0
      %v3432 = vmax.f32 %v3172, 0.0
      %v3433 = vmax.f32 %v2517, 0.0
      %v3434 = vmax.f32 %v3175, 0.0
      %v3435 = vmax.f32 %v2519, 0.0
      %v3436 = vmax.f32 %v3177, 0.0
      %v3437 = vmax.f32 %v2522, 0.0
      %v3438 = vmax.f32 %v3180, 0.0
      %v3439 = vmax.f32 %v2524, 0.0
      %v3440 = vmax.f32 %v3182, 0.0
      %v3441 = vmax.f32 %v2527, 0.0
      %v3442 = vmax.f32 %v3185, 0.0
      %v3443 = vmax.f32 %v2529, 0.0
      %v3444 = vmax.f32 %v3187, 0.0
      %v3445 = vpack.c.bf16 %v3191, %v3189
      %v3446 = vpack.c.bf16 %v3192, %v3190
      %v3447 = vpack.c.bf16 %v3195, %v3193
      %v3448 = vpack.c.bf16 %v3196, %v3194
      %v3449 = vpack.c.bf16 %v3199, %v3197
      %v3450 = vpack.c.bf16 %v3200, %v3198
      %v3451 = vpack.c.bf16 %v3203, %v3201
      %v3452 = vpack.c.bf16 %v3204, %v3202
      %v3453 = vpack.c.bf16 %v3207, %v3205
      %v3454 = vpack.c.bf16 %v3208, %v3206
      %v3455 = vpack.c.bf16 %v3211, %v3209
      %v3456 = vpack.c.bf16 %v3212, %v3210
      %v3457 = vpack.c.bf16 %v3215, %v3213
      %v3458 = vpack.c.bf16 %v3216, %v3214
      %v3459 = vpack.c.bf16 %v3219, %v3217
      %v3460 = vpack.c.bf16 %v3220, %v3218
      %v3461 = vpack.c.bf16 %v3223, %v3221
      %v3462 = vpack.c.bf16 %v3224, %v3222
      %v3463 = vpack.c.bf16 %v3227, %v3225
      %v3464 = vpack.c.bf16 %v3228, %v3226
      %v3465 = vpack.c.bf16 %v3231, %v3229
      %v3466 = vpack.c.bf16 %v3232, %v3230
      %v3467 = vpack.c.bf16 %v3235, %v3233
      %v3468 = vpack.c.bf16 %v3236, %v3234
      %v3469 = vpack.c.bf16 %v3239, %v3237
      %v3470 = vpack.c.bf16 %v3240, %v3238
      %v3471 = vpack.c.bf16 %v3243, %v3241
      %v3472 = vpack.c.bf16 %v3244, %v3242
      %v3473 = vpack.c.bf16 %v3247, %v3245
      %v3474 = vpack.c.bf16 %v3248, %v3246
      %v3475 = vpack.c.bf16 %v3251, %v3249
      %v3476 = vpack.c.bf16 %v3252, %v3250
      %v3477 = vpack.c.bf16 %v3255, %v3253
      %v3478 = vpack.c.bf16 %v3256, %v3254
      %v3479 = vpack.c.bf16 %v3259, %v3257
      %v3480 = vpack.c.bf16 %v3260, %v3258
      %v3481 = vpack.c.bf16 %v3263, %v3261
      %v3482 = vpack.c.bf16 %v3264, %v3262
      %v3483 = vpack.c.bf16 %v3267, %v3265
      %v3484 = vpack.c.bf16 %v3268, %v3266
      %v3485 = vpack.c.bf16 %v3271, %v3269
      %v3486 = vpack.c.bf16 %v3272, %v3270
      %v3487 = vpack.c.bf16 %v3275, %v3273
      %v3488 = vpack.c.bf16 %v3276, %v3274
      %v3489 = vpack.c.bf16 %v3279, %v3277
      %v3490 = vpack.c.bf16 %v3280, %v3278
      %v3491 = vpack.c.bf16 %v3283, %v3281
      %v3492 = vpack.c.bf16 %v3284, %v3282
      %v3493 = vpack.c.bf16 %v3287, %v3285
      %v3494 = vpack.c.bf16 %v3288, %v3286
      %v3495 = vpack.c.bf16 %v3291, %v3289
      %v3496 = vpack.c.bf16 %v3292, %v3290
      %v3497 = vpack.c.bf16 %v3295, %v3293
      %v3498 = vpack.c.bf16 %v3296, %v3294
      %v3499 = vpack.c.bf16 %v3299, %v3297
      %v3500 = vpack.c.bf16 %v3300, %v3298
      %v3501 = vpack.c.bf16 %v3303, %v3301
      %v3502 = vpack.c.bf16 %v3304, %v3302
      %v3503 = vpack.c.bf16 %v3307, %v3305
      %v3504 = vpack.c.bf16 %v3308, %v3306
      %v3505 = vpack.c.bf16 %v3311, %v3309
      %v3506 = vpack.c.bf16 %v3312, %v3310
      %v3507 = vpack.c.bf16 %v3315, %v3313
      %v3508 = vpack.c.bf16 %v3316, %v3314
      %v3509 = vpack.c.bf16 %v3319, %v3317
      %v3510 = vpack.c.bf16 %v3320, %v3318
      %v3511 = vpack.c.bf16 %v3323, %v3321
      %v3512 = vpack.c.bf16 %v3324, %v3322
      %v3513 = vpack.c.bf16 %v3327, %v3325
      %v3514 = vpack.c.bf16 %v3328, %v3326
      %v3515 = vpack.c.bf16 %v3331, %v3329
      %v3516 = vpack.c.bf16 %v3332, %v3330
      %v3517 = vpack.c.bf16 %v3335, %v3333
      %v3518 = vpack.c.bf16 %v3336, %v3334
      %v3519 = vpack.c.bf16 %v3339, %v3337
      %v3520 = vpack.c.bf16 %v3340, %v3338
      %v3521 = vpack.c.bf16 %v3343, %v3341
      %v3522 = vpack.c.bf16 %v3344, %v3342
      %v3523 = vpack.c.bf16 %v3347, %v3345
      %v3524 = vpack.c.bf16 %v3348, %v3346
      %v3525 = vpack.c.bf16 %v3351, %v3349
      %v3526 = vpack.c.bf16 %v3352, %v3350
      %v3527 = vpack.c.bf16 %v3355, %v3353
      %v3528 = vpack.c.bf16 %v3356, %v3354
      %v3529 = vpack.c.bf16 %v3359, %v3357
      %v3530 = vpack.c.bf16 %v3360, %v3358
      %v3531 = vpack.c.bf16 %v3363, %v3361
      %v3532 = vpack.c.bf16 %v3364, %v3362
      %v3533 = vpack.c.bf16 %v3367, %v3365
      %v3534 = vpack.c.bf16 %v3368, %v3366
      %v3535 = vpack.c.bf16 %v3371, %v3369
      %v3536 = vpack.c.bf16 %v3372, %v3370
      %v3537 = vpack.c.bf16 %v3375, %v3373
      %v3538 = vpack.c.bf16 %v3376, %v3374
      %v3539 = vpack.c.bf16 %v3379, %v3377
      %v3540 = vpack.c.bf16 %v3380, %v3378
      %v3541 = vpack.c.bf16 %v3383, %v3381
      %v3542 = vpack.c.bf16 %v3384, %v3382
      %v3543 = vpack.c.bf16 %v3387, %v3385
      %v3544 = vpack.c.bf16 %v3388, %v3386
      %v3545 = vpack.c.bf16 %v3391, %v3389
      %v3546 = vpack.c.bf16 %v3392, %v3390
      %v3547 = vpack.c.bf16 %v3395, %v3393
      %v3548 = vpack.c.bf16 %v3396, %v3394
      %v3549 = vpack.c.bf16 %v3399, %v3397
      %v3550 = vpack.c.bf16 %v3400, %v3398
      %v3551 = vpack.c.bf16 %v3403, %v3401
      %v3552 = vpack.c.bf16 %v3404, %v3402
      %v3553 = vpack.c.bf16 %v3407, %v3405
      %v3554 = vpack.c.bf16 %v3408, %v3406
      %v3555 = vpack.c.bf16 %v3411, %v3409
      %v3556 = vpack.c.bf16 %v3412, %v3410
      %v3557 = vpack.c.bf16 %v3415, %v3413
      %v3558 = vpack.c.bf16 %v3416, %v3414
      %v3559 = vpack.c.bf16 %v3419, %v3417
      %v3560 = vpack.c.bf16 %v3420, %v3418
      %v3561 = vpack.c.bf16 %v3423, %v3421
      %v3562 = vpack.c.bf16 %v3424, %v3422
      %v3563 = vpack.c.bf16 %v3427, %v3425
      %v3564 = vpack.c.bf16 %v3428, %v3426
      %v3565 = vpack.c.bf16 %v3431, %v3429
      %v3566 = vpack.c.bf16 %v3432, %v3430
      %v3567 = vpack.c.bf16 %v3435, %v3433
      %v3568 = vpack.c.bf16 %v3436, %v3434
      %v3569 = vpack.c.bf16 %v3439, %v3437
      %v3570 = vpack.c.bf16 %v3440, %v3438
      %v3571 = vpack.c.bf16 %v3443, %v3441
      %v3572 = vpack.c.bf16 %v3444, %v3442
      %v3573 = vld [vmem:[%s3] sm:$0xff]
      %v3574 = vld [vmem:[%s3 + $0x8] sm:$0xff]
      %v3575 = vld [vmem:[%s3 + $0x10] sm:$0xff]
      %v3576 = vld [vmem:[%s3 + $0x18] sm:$0xff]
      %v3577 = vld [vmem:[%s3 + $0x20] sm:$0xff]
      %v3578 = vld [vmem:[%s3 + $0x28] sm:$0xff]
      %v3579 = vld [vmem:[%s3 + $0x30] sm:$0xff]
      %v3580 = vld [vmem:[%s3 + $0x38] sm:$0xff]
      %v3581 = vld [vmem:[%s3 + $0x40] sm:$0xff]
      %v3582 = vld [vmem:[%s3 + $0x48] sm:$0xff]
      %v3583 = vld [vmem:[%s3 + $0x50] sm:$0xff]
      %v3584 = vld [vmem:[%s3 + $0x58] sm:$0xff]
      %v3585 = vld [vmem:[%s3 + $0x60] sm:$0xff]
      %v3586 = vld [vmem:[%s3 + $0x68] sm:$0xff]
      %v3587 = vld [vmem:[%s3 + $0x70] sm:$0xff]
      %v3588 = vld [vmem:[%s3 + $0x78] sm:$0xff]
      %v3589 = vld [vmem:[%s3 + $0x80] sm:$0xff]
      %v3590 = vld [vmem:[%s3 + $0x88] sm:$0xff]
      %v3591 = vld [vmem:[%s3 + $0x90] sm:$0xff]
      %v3592 = vld [vmem:[%s3 + $0x98] sm:$0xff]
      %v3593 = vld [vmem:[%s3 + $0xa0] sm:$0xff]
      %v3594 = vld [vmem:[%s3 + $0xa8] sm:$0xff]
      %v3595 = vld [vmem:[%s3 + $0xb0] sm:$0xff]
      %v3596 = vld [vmem:[%s3 + $0xb8] sm:$0xff]
      %v3597 = vld [vmem:[%s3 + $0xc0] sm:$0xff]
      %v3598 = vld [vmem:[%s3 + $0xc8] sm:$0xff]
      %v3599 = vld [vmem:[%s3 + $0xd0] sm:$0xff]
      %v3600 = vld [vmem:[%s3 + $0xd8] sm:$0xff]
      %v3601 = vld [vmem:[%s3 + $0xe0] sm:$0xff]
      %v3602 = vld [vmem:[%s3 + $0xe8] sm:$0xff]
      %v3603 = vld [vmem:[%s3 + $0xf0] sm:$0xff]
      %v3604 = vld [vmem:[%s3 + $0xf8] sm:$0xff]
      %v3637 = vunpack.c.l.b16 %v3573
      %v3638 = vunpack.c.h.b16 %v3573
      %v3639 = vunpack.c.l.b16 %v3574
      %v3640 = vunpack.c.h.b16 %v3574
      %v3641 = vunpack.c.l.b16 %v3575
      %v3642 = vunpack.c.h.b16 %v3575
      %v3643 = vunpack.c.l.b16 %v3576
      %v3644 = vunpack.c.h.b16 %v3576
      %v3645 = vunpack.c.l.b16 %v3577
      %v3646 = vunpack.c.h.b16 %v3577
      %v3647 = vunpack.c.l.b16 %v3578
      %v3648 = vunpack.c.h.b16 %v3578
      %v3649 = vunpack.c.l.b16 %v3579
      %v3650 = vunpack.c.h.b16 %v3579
      %v3651 = vunpack.c.l.b16 %v3580
      %v3652 = vunpack.c.h.b16 %v3580
      %v3653 = vunpack.c.l.b16 %v3581
      %v3654 = vunpack.c.h.b16 %v3581
      %v3655 = vunpack.c.l.b16 %v3582
      %v3656 = vunpack.c.h.b16 %v3582
      %v3657 = vunpack.c.l.b16 %v3583
      %v3658 = vunpack.c.h.b16 %v3583
      %v3659 = vunpack.c.l.b16 %v3584
      %v3660 = vunpack.c.h.b16 %v3584
      %v3661 = vunpack.c.l.b16 %v3585
      %v3662 = vunpack.c.h.b16 %v3585
      %v3663 = vunpack.c.l.b16 %v3586
      %v3664 = vunpack.c.h.b16 %v3586
      %v3665 = vunpack.c.l.b16 %v3587
      %v3666 = vunpack.c.h.b16 %v3587
      %v3667 = vunpack.c.l.b16 %v3588
      %v3668 = vunpack.c.h.b16 %v3588
      %v3669 = vunpack.c.l.b16 %v3589
      %v3670 = vunpack.c.h.b16 %v3589
      %v3671 = vunpack.c.l.b16 %v3590
      %v3672 = vunpack.c.h.b16 %v3590
      %v3673 = vunpack.c.l.b16 %v3591
      %v3674 = vunpack.c.h.b16 %v3591
      %v3675 = vunpack.c.l.b16 %v3592
      %v3676 = vunpack.c.h.b16 %v3592
      %v3677 = vunpack.c.l.b16 %v3593
      %v3678 = vunpack.c.h.b16 %v3593
      %v3679 = vunpack.c.l.b16 %v3594
      %v3680 = vunpack.c.h.b16 %v3594
      %v3681 = vunpack.c.l.b16 %v3595
      %v3682 = vunpack.c.h.b16 %v3595
      %v3683 = vunpack.c.l.b16 %v3596
      %v3684 = vunpack.c.h.b16 %v3596
      %v3685 = vunpack.c.l.b16 %v3597
      %v3686 = vunpack.c.h.b16 %v3597
      %v3687 = vunpack.c.l.b16 %v3598
      %v3688 = vunpack.c.h.b16 %v3598
      %v3689 = vunpack.c.l.b16 %v3599
      %v3690 = vunpack.c.h.b16 %v3599
      %v3691 = vunpack.c.l.b16 %v3600
      %v3692 = vunpack.c.h.b16 %v3600
      %v3693 = vunpack.c.l.b16 %v3601
      %v3694 = vunpack.c.h.b16 %v3601
      %v3695 = vunpack.c.l.b16 %v3602
      %v3696 = vunpack.c.h.b16 %v3602
      %v3697 = vunpack.c.l.b16 %v3603
      %v3698 = vunpack.c.h.b16 %v3603
      %v3699 = vunpack.c.l.b16 %v3604
      %v3700 = vunpack.c.h.b16 %v3604
      %v3701 = vpack.c.b16 %v3639, %v3637
      %v3702 = vpack.c.b16 %v3640, %v3638
      %v3703 = vpack.c.b16 %v3643, %v3641
      %v3704 = vpack.c.b16 %v3644, %v3642
      %v3705 = vpack.c.b16 %v3647, %v3645
      %v3706 = vpack.c.b16 %v3648, %v3646
      %v3707 = vpack.c.b16 %v3651, %v3649
      %v3708 = vpack.c.b16 %v3652, %v3650
      %v3709 = vpack.c.b16 %v3655, %v3653
      %v3710 = vpack.c.b16 %v3656, %v3654
      %v3711 = vpack.c.b16 %v3659, %v3657
      %v3712 = vpack.c.b16 %v3660, %v3658
      %v3713 = vpack.c.b16 %v3663, %v3661
      %v3714 = vpack.c.b16 %v3664, %v3662
      %v3715 = vpack.c.b16 %v3667, %v3665
      %v3716 = vpack.c.b16 %v3668, %v3666
      %v3717 = vpack.c.b16 %v3671, %v3669
      %v3718 = vpack.c.b16 %v3672, %v3670
      %v3719 = vpack.c.b16 %v3675, %v3673
      %v3720 = vpack.c.b16 %v3676, %v3674
      %v3721 = vpack.c.b16 %v3679, %v3677
      %v3722 = vpack.c.b16 %v3680, %v3678
      %v3723 = vpack.c.b16 %v3683, %v3681
      %v3724 = vpack.c.b16 %v3684, %v3682
      %v3725 = vpack.c.b16 %v3687, %v3685
      %v3726 = vpack.c.b16 %v3688, %v3686
      %v3727 = vpack.c.b16 %v3691, %v3689
      %v3728 = vpack.c.b16 %v3692, %v3690
      %v3729 = vpack.c.b16 %v3695, %v3693
      %v3730 = vpack.c.b16 %v3696, %v3694
      %v3731 = vpack.c.b16 %v3699, %v3697
      %v3732 = vpack.c.b16 %v3700, %v3698
      %3765 = vmatpush.bf16.msra.mxu0 %v3715
      %3766 = vmatpush.bf16.msra.mxu0 %v3713
      %3767 = vmatpush.bf16.msra.mxu0 %v3711
      %3768 = vmatpush.bf16.msra.mxu0 %v3709
      %3769 = vmatpush.bf16.msra.mxu0 %v3707
      %3770 = vmatpush.bf16.msra.mxu0 %v3705
      %3771 = vmatpush.bf16.msra.mxu0 %v3703
      %3772 = vmatpush.bf16.msra.mxu0 %v3701
      %3773 = vmatmul.bf16.gmra.mxu0 %v3445
      %v3774 = vpop.f32.mrf.mxu0
      %v3775 = vadd.f32 0.0, %v3774
      %v3776 = vpop.f32.mrf.mxu0
      %v3777 = vadd.f32 0.0, %v3776
      %3778 = vmatmul.bf16.gmra.mxu0 %v3447
      %v3779 = vpop.f32.mrf.mxu0
      %v3780 = vadd.f32 0.0, %v3779
      %v3781 = vpop.f32.mrf.mxu0
      %v3782 = vadd.f32 0.0, %v3781
      %3783 = vmatmul.bf16.gmra.mxu0 %v3449
      %v3784 = vpop.f32.mrf.mxu0
      %v3785 = vadd.f32 0.0, %v3784
      %v3786 = vpop.f32.mrf.mxu0
      %v3787 = vadd.f32 0.0, %v3786
      %3788 = vmatmul.bf16.gmra.mxu0 %v3451
      %v3789 = vpop.f32.mrf.mxu0
      %v3790 = vadd.f32 0.0, %v3789
      %v3791 = vpop.f32.mrf.mxu0
      %v3792 = vadd.f32 0.0, %v3791
      %3793 = vmatmul.bf16.gmra.mxu0 %v3453
      %v3794 = vpop.f32.mrf.mxu0
      %v3795 = vadd.f32 0.0, %v3794
      %v3796 = vpop.f32.mrf.mxu0
      %v3797 = vadd.f32 0.0, %v3796
      %3798 = vmatmul.bf16.gmra.mxu0 %v3455
      %v3799 = vpop.f32.mrf.mxu0
      %v3800 = vadd.f32 0.0, %v3799
      %v3801 = vpop.f32.mrf.mxu0
      %v3802 = vadd.f32 0.0, %v3801
      %3803 = vmatmul.bf16.gmra.mxu0 %v3457
      %v3804 = vpop.f32.mrf.mxu0
      %v3805 = vadd.f32 0.0, %v3804
      %v3806 = vpop.f32.mrf.mxu0
      %v3807 = vadd.f32 0.0, %v3806
      %3808 = vmatmul.bf16.gmra.mxu0 %v3459
      %v3809 = vpop.f32.mrf.mxu0
      %v3810 = vadd.f32 0.0, %v3809
      %v3811 = vpop.f32.mrf.mxu0
      %v3812 = vadd.f32 0.0, %v3811
      %3813 = vmatmul.bf16.gmra.mxu0 %v3461
      %v3814 = vpop.f32.mrf.mxu0
      %v3815 = vadd.f32 0.0, %v3814
      %v3816 = vpop.f32.mrf.mxu0
      %v3817 = vadd.f32 0.0, %v3816
      %3818 = vmatmul.bf16.gmra.mxu0 %v3463
      %v3819 = vpop.f32.mrf.mxu0
      %v3820 = vadd.f32 0.0, %v3819
      %v3821 = vpop.f32.mrf.mxu0
      %v3822 = vadd.f32 0.0, %v3821
      %3823 = vmatmul.bf16.gmra.mxu0 %v3465
      %v3824 = vpop.f32.mrf.mxu0
      %v3825 = vadd.f32 0.0, %v3824
      %v3826 = vpop.f32.mrf.mxu0
      %v3827 = vadd.f32 0.0, %v3826
      %3828 = vmatmul.bf16.gmra.mxu0 %v3467
      %v3829 = vpop.f32.mrf.mxu0
      %v3830 = vadd.f32 0.0, %v3829
      %v3831 = vpop.f32.mrf.mxu0
      %v3832 = vadd.f32 0.0, %v3831
      %3833 = vmatmul.bf16.gmra.mxu0 %v3469
      %v3834 = vpop.f32.mrf.mxu0
      %v3835 = vadd.f32 0.0, %v3834
      %v3836 = vpop.f32.mrf.mxu0
      %v3837 = vadd.f32 0.0, %v3836
      %3838 = vmatmul.bf16.gmra.mxu0 %v3471
      %v3839 = vpop.f32.mrf.mxu0
      %v3840 = vadd.f32 0.0, %v3839
      %v3841 = vpop.f32.mrf.mxu0
      %v3842 = vadd.f32 0.0, %v3841
      %3843 = vmatmul.bf16.gmra.mxu0 %v3473
      %v3844 = vpop.f32.mrf.mxu0
      %v3845 = vadd.f32 0.0, %v3844
      %v3846 = vpop.f32.mrf.mxu0
      %v3847 = vadd.f32 0.0, %v3846
      %3848 = vmatmul.bf16.gmra.mxu0 %v3475
      %v3849 = vpop.f32.mrf.mxu0
      %v3850 = vadd.f32 0.0, %v3849
      %v3851 = vpop.f32.mrf.mxu0
      %v3852 = vadd.f32 0.0, %v3851
      %3853 = vmatmul.bf16.gmra.mxu0 %v3477
      %v3854 = vpop.f32.mrf.mxu0
      %v3855 = vadd.f32 0.0, %v3854
      %v3856 = vpop.f32.mrf.mxu0
      %v3857 = vadd.f32 0.0, %v3856
      %3858 = vmatmul.bf16.gmra.mxu0 %v3479
      %v3859 = vpop.f32.mrf.mxu0
      %v3860 = vadd.f32 0.0, %v3859
      %v3861 = vpop.f32.mrf.mxu0
      %v3862 = vadd.f32 0.0, %v3861
      %3863 = vmatmul.bf16.gmra.mxu0 %v3481
      %v3864 = vpop.f32.mrf.mxu0
      %v3865 = vadd.f32 0.0, %v3864
      %v3866 = vpop.f32.mrf.mxu0
      %v3867 = vadd.f32 0.0, %v3866
      %3868 = vmatmul.bf16.gmra.mxu0 %v3483
      %v3869 = vpop.f32.mrf.mxu0
      %v3870 = vadd.f32 0.0, %v3869
      %v3871 = vpop.f32.mrf.mxu0
      %v3872 = vadd.f32 0.0, %v3871
      %3873 = vmatmul.bf16.gmra.mxu0 %v3485
      %v3874 = vpop.f32.mrf.mxu0
      %v3875 = vadd.f32 0.0, %v3874
      %v3876 = vpop.f32.mrf.mxu0
      %v3877 = vadd.f32 0.0, %v3876
      %3878 = vmatmul.bf16.gmra.mxu0 %v3487
      %v3879 = vpop.f32.mrf.mxu0
      %v3880 = vadd.f32 0.0, %v3879
      %v3881 = vpop.f32.mrf.mxu0
      %v3882 = vadd.f32 0.0, %v3881
      %3883 = vmatmul.bf16.gmra.mxu0 %v3489
      %v3884 = vpop.f32.mrf.mxu0
      %v3885 = vadd.f32 0.0, %v3884
      %v3886 = vpop.f32.mrf.mxu0
      %v3887 = vadd.f32 0.0, %v3886
      %3888 = vmatmul.bf16.gmra.mxu0 %v3491
      %v3889 = vpop.f32.mrf.mxu0
      %v3890 = vadd.f32 0.0, %v3889
      %v3891 = vpop.f32.mrf.mxu0
      %v3892 = vadd.f32 0.0, %v3891
      %3893 = vmatmul.bf16.gmra.mxu0 %v3493
      %v3894 = vpop.f32.mrf.mxu0
      %v3895 = vadd.f32 0.0, %v3894
      %v3896 = vpop.f32.mrf.mxu0
      %v3897 = vadd.f32 0.0, %v3896
      %3898 = vmatmul.bf16.gmra.mxu0 %v3495
      %v3899 = vpop.f32.mrf.mxu0
      %v3900 = vadd.f32 0.0, %v3899
      %v3901 = vpop.f32.mrf.mxu0
      %v3902 = vadd.f32 0.0, %v3901
      %3903 = vmatmul.bf16.gmra.mxu0 %v3497
      %v3904 = vpop.f32.mrf.mxu0
      %v3905 = vadd.f32 0.0, %v3904
      %v3906 = vpop.f32.mrf.mxu0
      %v3907 = vadd.f32 0.0, %v3906
      %3908 = vmatmul.bf16.gmra.mxu0 %v3499
      %v3909 = vpop.f32.mrf.mxu0
      %v3910 = vadd.f32 0.0, %v3909
      %v3911 = vpop.f32.mrf.mxu0
      %v3912 = vadd.f32 0.0, %v3911
      %3913 = vmatmul.bf16.gmra.mxu0 %v3501
      %v3914 = vpop.f32.mrf.mxu0
      %v3915 = vadd.f32 0.0, %v3914
      %v3916 = vpop.f32.mrf.mxu0
      %v3917 = vadd.f32 0.0, %v3916
      %3918 = vmatmul.bf16.gmra.mxu0 %v3503
      %v3919 = vpop.f32.mrf.mxu0
      %v3920 = vadd.f32 0.0, %v3919
      %v3921 = vpop.f32.mrf.mxu0
      %v3922 = vadd.f32 0.0, %v3921
      %3923 = vmatmul.bf16.gmra.mxu0 %v3505
      %v3924 = vpop.f32.mrf.mxu0
      %v3925 = vadd.f32 0.0, %v3924
      %v3926 = vpop.f32.mrf.mxu0
      %v3927 = vadd.f32 0.0, %v3926
      %3928 = vmatmul.bf16.gmra.mxu0 %v3507
      %v3929 = vpop.f32.mrf.mxu0
      %v3930 = vadd.f32 0.0, %v3929
      %v3931 = vpop.f32.mrf.mxu0
      %v3932 = vadd.f32 0.0, %v3931
      %3933 = vmatmul.bf16.gmra.mxu0 %v3509
      %v3934 = vpop.f32.mrf.mxu0
      %v3935 = vadd.f32 0.0, %v3934
      %v3936 = vpop.f32.mrf.mxu0
      %v3937 = vadd.f32 0.0, %v3936
      %3938 = vmatmul.bf16.gmra.mxu0 %v3511
      %v3939 = vpop.f32.mrf.mxu0
      %v3940 = vadd.f32 0.0, %v3939
      %v3941 = vpop.f32.mrf.mxu0
      %v3942 = vadd.f32 0.0, %v3941
      %3943 = vmatmul.bf16.gmra.mxu0 %v3513
      %v3944 = vpop.f32.mrf.mxu0
      %v3945 = vadd.f32 0.0, %v3944
      %v3946 = vpop.f32.mrf.mxu0
      %v3947 = vadd.f32 0.0, %v3946
      %3948 = vmatmul.bf16.gmra.mxu0 %v3515
      %v3949 = vpop.f32.mrf.mxu0
      %v3950 = vadd.f32 0.0, %v3949
      %v3951 = vpop.f32.mrf.mxu0
      %v3952 = vadd.f32 0.0, %v3951
      %3953 = vmatmul.bf16.gmra.mxu0 %v3517
      %v3954 = vpop.f32.mrf.mxu0
      %v3955 = vadd.f32 0.0, %v3954
      %v3956 = vpop.f32.mrf.mxu0
      %v3957 = vadd.f32 0.0, %v3956
      %3958 = vmatmul.bf16.gmra.mxu0 %v3519
      %v3959 = vpop.f32.mrf.mxu0
      %v3960 = vadd.f32 0.0, %v3959
      %v3961 = vpop.f32.mrf.mxu0
      %v3962 = vadd.f32 0.0, %v3961
      %3963 = vmatmul.bf16.gmra.mxu0 %v3521
      %v3964 = vpop.f32.mrf.mxu0
      %v3965 = vadd.f32 0.0, %v3964
      %v3966 = vpop.f32.mrf.mxu0
      %v3967 = vadd.f32 0.0, %v3966
      %3968 = vmatmul.bf16.gmra.mxu0 %v3523
      %v3969 = vpop.f32.mrf.mxu0
      %v3970 = vadd.f32 0.0, %v3969
      %v3971 = vpop.f32.mrf.mxu0
      %v3972 = vadd.f32 0.0, %v3971
      %3973 = vmatmul.bf16.gmra.mxu0 %v3525
      %v3974 = vpop.f32.mrf.mxu0
      %v3975 = vadd.f32 0.0, %v3974
      %v3976 = vpop.f32.mrf.mxu0
      %v3977 = vadd.f32 0.0, %v3976
      %3978 = vmatmul.bf16.gmra.mxu0 %v3527
      %v3979 = vpop.f32.mrf.mxu0
      %v3980 = vadd.f32 0.0, %v3979
      %v3981 = vpop.f32.mrf.mxu0
      %v3982 = vadd.f32 0.0, %v3981
      %3983 = vmatmul.bf16.gmra.mxu0 %v3529
      %v3984 = vpop.f32.mrf.mxu0
      %v3985 = vadd.f32 0.0, %v3984
      %v3986 = vpop.f32.mrf.mxu0
      %v3987 = vadd.f32 0.0, %v3986
      %3988 = vmatmul.bf16.gmra.mxu0 %v3531
      %v3989 = vpop.f32.mrf.mxu0
      %v3990 = vadd.f32 0.0, %v3989
      %v3991 = vpop.f32.mrf.mxu0
      %v3992 = vadd.f32 0.0, %v3991
      %3993 = vmatmul.bf16.gmra.mxu0 %v3533
      %v3994 = vpop.f32.mrf.mxu0
      %v3995 = vadd.f32 0.0, %v3994
      %v3996 = vpop.f32.mrf.mxu0
      %v3997 = vadd.f32 0.0, %v3996
      %3998 = vmatmul.bf16.gmra.mxu0 %v3535
      %v3999 = vpop.f32.mrf.mxu0
      %v4000 = vadd.f32 0.0, %v3999
      %v4001 = vpop.f32.mrf.mxu0
      %v4002 = vadd.f32 0.0, %v4001
      %4003 = vmatmul.bf16.gmra.mxu0 %v3537
      %v4004 = vpop.f32.mrf.mxu0
      %v4005 = vadd.f32 0.0, %v4004
      %v4006 = vpop.f32.mrf.mxu0
      %v4007 = vadd.f32 0.0, %v4006
      %4008 = vmatmul.bf16.gmra.mxu0 %v3539
      %v4009 = vpop.f32.mrf.mxu0
      %v4010 = vadd.f32 0.0, %v4009
      %v4011 = vpop.f32.mrf.mxu0
      %v4012 = vadd.f32 0.0, %v4011
      %4013 = vmatmul.bf16.gmra.mxu0 %v3541
      %v4014 = vpop.f32.mrf.mxu0
      %v4015 = vadd.f32 0.0, %v4014
      %v4016 = vpop.f32.mrf.mxu0
      %v4017 = vadd.f32 0.0, %v4016
      %4018 = vmatmul.bf16.gmra.mxu0 %v3543
      %v4019 = vpop.f32.mrf.mxu0
      %v4020 = vadd.f32 0.0, %v4019
      %v4021 = vpop.f32.mrf.mxu0
      %v4022 = vadd.f32 0.0, %v4021
      %4023 = vmatmul.bf16.gmra.mxu0 %v3545
      %v4024 = vpop.f32.mrf.mxu0
      %v4025 = vadd.f32 0.0, %v4024
      %v4026 = vpop.f32.mrf.mxu0
      %v4027 = vadd.f32 0.0, %v4026
      %4028 = vmatmul.bf16.gmra.mxu0 %v3547
      %v4029 = vpop.f32.mrf.mxu0
      %v4030 = vadd.f32 0.0, %v4029
      %v4031 = vpop.f32.mrf.mxu0
      %v4032 = vadd.f32 0.0, %v4031
      %4033 = vmatmul.bf16.gmra.mxu0 %v3549
      %v4034 = vpop.f32.mrf.mxu0
      %v4035 = vadd.f32 0.0, %v4034
      %v4036 = vpop.f32.mrf.mxu0
      %v4037 = vadd.f32 0.0, %v4036
      %4038 = vmatmul.bf16.gmra.mxu0 %v3551
      %v4039 = vpop.f32.mrf.mxu0
      %v4040 = vadd.f32 0.0, %v4039
      %v4041 = vpop.f32.mrf.mxu0
      %v4042 = vadd.f32 0.0, %v4041
      %4043 = vmatmul.bf16.gmra.mxu0 %v3553
      %v4044 = vpop.f32.mrf.mxu0
      %v4045 = vadd.f32 0.0, %v4044
      %v4046 = vpop.f32.mrf.mxu0
      %v4047 = vadd.f32 0.0, %v4046
      %4048 = vmatmul.bf16.gmra.mxu0 %v3555
      %v4049 = vpop.f32.mrf.mxu0
      %v4050 = vadd.f32 0.0, %v4049
      %v4051 = vpop.f32.mrf.mxu0
      %v4052 = vadd.f32 0.0, %v4051
      %4053 = vmatmul.bf16.gmra.mxu0 %v3557
      %v4054 = vpop.f32.mrf.mxu0
      %v4055 = vadd.f32 0.0, %v4054
      %v4056 = vpop.f32.mrf.mxu0
      %v4057 = vadd.f32 0.0, %v4056
      %4058 = vmatmul.bf16.gmra.mxu0 %v3559
      %v4059 = vpop.f32.mrf.mxu0
      %v4060 = vadd.f32 0.0, %v4059
      %v4061 = vpop.f32.mrf.mxu0
      %v4062 = vadd.f32 0.0, %v4061
      %4063 = vmatmul.bf16.gmra.mxu0 %v3561
      %v4064 = vpop.f32.mrf.mxu0
      %v4065 = vadd.f32 0.0, %v4064
      %v4066 = vpop.f32.mrf.mxu0
      %v4067 = vadd.f32 0.0, %v4066
      %4068 = vmatmul.bf16.gmra.mxu0 %v3563
      %v4069 = vpop.f32.mrf.mxu0
      %v4070 = vadd.f32 0.0, %v4069
      %v4071 = vpop.f32.mrf.mxu0
      %v4072 = vadd.f32 0.0, %v4071
      %4073 = vmatmul.bf16.gmra.mxu0 %v3565
      %v4074 = vpop.f32.mrf.mxu0
      %v4075 = vadd.f32 0.0, %v4074
      %v4076 = vpop.f32.mrf.mxu0
      %v4077 = vadd.f32 0.0, %v4076
      %4078 = vmatmul.bf16.gmra.mxu0 %v3567
      %v4079 = vpop.f32.mrf.mxu0
      %v4080 = vadd.f32 0.0, %v4079
      %v4081 = vpop.f32.mrf.mxu0
      %v4082 = vadd.f32 0.0, %v4081
      %4083 = vmatmul.bf16.gmra.mxu0 %v3569
      %v4084 = vpop.f32.mrf.mxu0
      %v4085 = vadd.f32 0.0, %v4084
      %v4086 = vpop.f32.mrf.mxu0
      %v4087 = vadd.f32 0.0, %v4086
      %4088 = vmatmul.bf16.gmra.mxu0 %v3571
      %v4089 = vpop.f32.mrf.mxu0
      %v4090 = vadd.f32 0.0, %v4089
      %v4091 = vpop.f32.mrf.mxu0
      %v4092 = vadd.f32 0.0, %v4091
      %4093 = vdwg.mxu0
      %4094 = vmatpush.bf16.msra.mxu0 %v3731
      %4095 = vmatpush.bf16.msra.mxu0 %v3729
      %4096 = vmatpush.bf16.msra.mxu0 %v3727
      %4097 = vmatpush.bf16.msra.mxu0 %v3725
      %4098 = vmatpush.bf16.msra.mxu0 %v3723
      %4099 = vmatpush.bf16.msra.mxu0 %v3721
      %4100 = vmatpush.bf16.msra.mxu0 %v3719
      %4101 = vmatpush.bf16.msra.mxu0 %v3717
      %4102 = vmatmul.bf16.gmra.mxu0 %v3446
      %v4103 = vpop.f32.mrf.mxu0
      %v4104 = vadd.f32 %v3775, %v4103
      %v4105 = vpop.f32.mrf.mxu0
      %v4106 = vadd.f32 %v3777, %v4105
      %4107 = vmatmul.bf16.gmra.mxu0 %v3448
      %v4108 = vpop.f32.mrf.mxu0
      %v4109 = vadd.f32 %v3780, %v4108
      %v4110 = vpop.f32.mrf.mxu0
      %v4111 = vadd.f32 %v3782, %v4110
      %4112 = vmatmul.bf16.gmra.mxu0 %v3450
      %v4113 = vpop.f32.mrf.mxu0
      %v4114 = vadd.f32 %v3785, %v4113
      %v4115 = vpop.f32.mrf.mxu0
      %v4116 = vadd.f32 %v3787, %v4115
      %4117 = vmatmul.bf16.gmra.mxu0 %v3452
      %v4118 = vpop.f32.mrf.mxu0
      %v4119 = vadd.f32 %v3790, %v4118
      %v4120 = vpop.f32.mrf.mxu0
      %v4121 = vadd.f32 %v3792, %v4120
      %4122 = vmatmul.bf16.gmra.mxu0 %v3454
      %v4123 = vpop.f32.mrf.mxu0
      %v4124 = vadd.f32 %v3795, %v4123
      %v4125 = vpop.f32.mrf.mxu0
      %v4126 = vadd.f32 %v3797, %v4125
      %4127 = vmatmul.bf16.gmra.mxu0 %v3456
      %v4128 = vpop.f32.mrf.mxu0
      %v4129 = vadd.f32 %v3800, %v4128
      %v4130 = vpop.f32.mrf.mxu0
      %v4131 = vadd.f32 %v3802, %v4130
      %4132 = vmatmul.bf16.gmra.mxu0 %v3458
      %v4133 = vpop.f32.mrf.mxu0
      %v4134 = vadd.f32 %v3805, %v4133
      %v4135 = vpop.f32.mrf.mxu0
      %v4136 = vadd.f32 %v3807, %v4135
      %4137 = vmatmul.bf16.gmra.mxu0 %v3460
      %v4138 = vpop.f32.mrf.mxu0
      %v4139 = vadd.f32 %v3810, %v4138
      %v4140 = vpop.f32.mrf.mxu0
      %v4141 = vadd.f32 %v3812, %v4140
      %4142 = vmatmul.bf16.gmra.mxu0 %v3462
      %v4143 = vpop.f32.mrf.mxu0
      %v4144 = vadd.f32 %v3815, %v4143
      %v4145 = vpop.f32.mrf.mxu0
      %v4146 = vadd.f32 %v3817, %v4145
      %4147 = vmatmul.bf16.gmra.mxu0 %v3464
      %v4148 = vpop.f32.mrf.mxu0
      %v4149 = vadd.f32 %v3820, %v4148
      %v4150 = vpop.f32.mrf.mxu0
      %v4151 = vadd.f32 %v3822, %v4150
      %4152 = vmatmul.bf16.gmra.mxu0 %v3466
      %v4153 = vpop.f32.mrf.mxu0
      %v4154 = vadd.f32 %v3825, %v4153
      %v4155 = vpop.f32.mrf.mxu0
      %v4156 = vadd.f32 %v3827, %v4155
      %4157 = vmatmul.bf16.gmra.mxu0 %v3468
      %v4158 = vpop.f32.mrf.mxu0
      %v4159 = vadd.f32 %v3830, %v4158
      %v4160 = vpop.f32.mrf.mxu0
      %v4161 = vadd.f32 %v3832, %v4160
      %4162 = vmatmul.bf16.gmra.mxu0 %v3470
      %v4163 = vpop.f32.mrf.mxu0
      %v4164 = vadd.f32 %v3835, %v4163
      %v4165 = vpop.f32.mrf.mxu0
      %v4166 = vadd.f32 %v3837, %v4165
      %4167 = vmatmul.bf16.gmra.mxu0 %v3472
      %v4168 = vpop.f32.mrf.mxu0
      %v4169 = vadd.f32 %v3840, %v4168
      %v4170 = vpop.f32.mrf.mxu0
      %v4171 = vadd.f32 %v3842, %v4170
      %4172 = vmatmul.bf16.gmra.mxu0 %v3474
      %v4173 = vpop.f32.mrf.mxu0
      %v4174 = vadd.f32 %v3845, %v4173
      %v4175 = vpop.f32.mrf.mxu0
      %v4176 = vadd.f32 %v3847, %v4175
      %4177 = vmatmul.bf16.gmra.mxu0 %v3476
      %v4178 = vpop.f32.mrf.mxu0
      %v4179 = vadd.f32 %v3850, %v4178
      %v4180 = vpop.f32.mrf.mxu0
      %v4181 = vadd.f32 %v3852, %v4180
      %4182 = vmatmul.bf16.gmra.mxu0 %v3478
      %v4183 = vpop.f32.mrf.mxu0
      %v4184 = vadd.f32 %v3855, %v4183
      %v4185 = vpop.f32.mrf.mxu0
      %v4186 = vadd.f32 %v3857, %v4185
      %4187 = vmatmul.bf16.gmra.mxu0 %v3480
      %v4188 = vpop.f32.mrf.mxu0
      %v4189 = vadd.f32 %v3860, %v4188
      %v4190 = vpop.f32.mrf.mxu0
      %v4191 = vadd.f32 %v3862, %v4190
      %4192 = vmatmul.bf16.gmra.mxu0 %v3482
      %v4193 = vpop.f32.mrf.mxu0
      %v4194 = vadd.f32 %v3865, %v4193
      %v4195 = vpop.f32.mrf.mxu0
      %v4196 = vadd.f32 %v3867, %v4195
      %4197 = vmatmul.bf16.gmra.mxu0 %v3484
      %v4198 = vpop.f32.mrf.mxu0
      %v4199 = vadd.f32 %v3870, %v4198
      %v4200 = vpop.f32.mrf.mxu0
      %v4201 = vadd.f32 %v3872, %v4200
      %4202 = vmatmul.bf16.gmra.mxu0 %v3486
      %v4203 = vpop.f32.mrf.mxu0
      %v4204 = vadd.f32 %v3875, %v4203
      %v4205 = vpop.f32.mrf.mxu0
      %v4206 = vadd.f32 %v3877, %v4205
      %4207 = vmatmul.bf16.gmra.mxu0 %v3488
      %v4208 = vpop.f32.mrf.mxu0
      %v4209 = vadd.f32 %v3880, %v4208
      %v4210 = vpop.f32.mrf.mxu0
      %v4211 = vadd.f32 %v3882, %v4210
      %4212 = vmatmul.bf16.gmra.mxu0 %v3490
      %v4213 = vpop.f32.mrf.mxu0
      %v4214 = vadd.f32 %v3885, %v4213
      %v4215 = vpop.f32.mrf.mxu0
      %v4216 = vadd.f32 %v3887, %v4215
      %4217 = vmatmul.bf16.gmra.mxu0 %v3492
      %v4218 = vpop.f32.mrf.mxu0
      %v4219 = vadd.f32 %v3890, %v4218
      %v4220 = vpop.f32.mrf.mxu0
      %v4221 = vadd.f32 %v3892, %v4220
      %4222 = vmatmul.bf16.gmra.mxu0 %v3494
      %v4223 = vpop.f32.mrf.mxu0
      %v4224 = vadd.f32 %v3895, %v4223
      %v4225 = vpop.f32.mrf.mxu0
      %v4226 = vadd.f32 %v3897, %v4225
      %4227 = vmatmul.bf16.gmra.mxu0 %v3496
      %v4228 = vpop.f32.mrf.mxu0
      %v4229 = vadd.f32 %v3900, %v4228
      %v4230 = vpop.f32.mrf.mxu0
      %v4231 = vadd.f32 %v3902, %v4230
      %4232 = vmatmul.bf16.gmra.mxu0 %v3498
      %v4233 = vpop.f32.mrf.mxu0
      %v4234 = vadd.f32 %v3905, %v4233
      %v4235 = vpop.f32.mrf.mxu0
      %v4236 = vadd.f32 %v3907, %v4235
      %4237 = vmatmul.bf16.gmra.mxu0 %v3500
      %v4238 = vpop.f32.mrf.mxu0
      %v4239 = vadd.f32 %v3910, %v4238
      %v4240 = vpop.f32.mrf.mxu0
      %v4241 = vadd.f32 %v3912, %v4240
      %4242 = vmatmul.bf16.gmra.mxu0 %v3502
      %v4243 = vpop.f32.mrf.mxu0
      %v4244 = vadd.f32 %v3915, %v4243
      %v4245 = vpop.f32.mrf.mxu0
      %v4246 = vadd.f32 %v3917, %v4245
      %4247 = vmatmul.bf16.gmra.mxu0 %v3504
      %v4248 = vpop.f32.mrf.mxu0
      %v4249 = vadd.f32 %v3920, %v4248
      %v4250 = vpop.f32.mrf.mxu0
      %v4251 = vadd.f32 %v3922, %v4250
      %4252 = vmatmul.bf16.gmra.mxu0 %v3506
      %v4253 = vpop.f32.mrf.mxu0
      %v4254 = vadd.f32 %v3925, %v4253
      %v4255 = vpop.f32.mrf.mxu0
      %v4256 = vadd.f32 %v3927, %v4255
      %4257 = vmatmul.bf16.gmra.mxu0 %v3508
      %v4258 = vpop.f32.mrf.mxu0
      %v4259 = vadd.f32 %v3930, %v4258
      %v4260 = vpop.f32.mrf.mxu0
      %v4261 = vadd.f32 %v3932, %v4260
      %4262 = vmatmul.bf16.gmra.mxu0 %v3510
      %v4263 = vpop.f32.mrf.mxu0
      %v4264 = vadd.f32 %v3935, %v4263
      %v4265 = vpop.f32.mrf.mxu0
      %v4266 = vadd.f32 %v3937, %v4265
      %4267 = vmatmul.bf16.gmra.mxu0 %v3512
      %v4268 = vpop.f32.mrf.mxu0
      %v4269 = vadd.f32 %v3940, %v4268
      %v4270 = vpop.f32.mrf.mxu0
      %v4271 = vadd.f32 %v3942, %v4270
      %4272 = vmatmul.bf16.gmra.mxu0 %v3514
      %v4273 = vpop.f32.mrf.mxu0
      %v4274 = vadd.f32 %v3945, %v4273
      %v4275 = vpop.f32.mrf.mxu0
      %v4276 = vadd.f32 %v3947, %v4275
      %4277 = vmatmul.bf16.gmra.mxu0 %v3516
      %v4278 = vpop.f32.mrf.mxu0
      %v4279 = vadd.f32 %v3950, %v4278
      %v4280 = vpop.f32.mrf.mxu0
      %v4281 = vadd.f32 %v3952, %v4280
      %4282 = vmatmul.bf16.gmra.mxu0 %v3518
      %v4283 = vpop.f32.mrf.mxu0
      %v4284 = vadd.f32 %v3955, %v4283
      %v4285 = vpop.f32.mrf.mxu0
      %v4286 = vadd.f32 %v3957, %v4285
      %4287 = vmatmul.bf16.gmra.mxu0 %v3520
      %v4288 = vpop.f32.mrf.mxu0
      %v4289 = vadd.f32 %v3960, %v4288
      %v4290 = vpop.f32.mrf.mxu0
      %v4291 = vadd.f32 %v3962, %v4290
      %4292 = vmatmul.bf16.gmra.mxu0 %v3522
      %v4293 = vpop.f32.mrf.mxu0
      %v4294 = vadd.f32 %v3965, %v4293
      %v4295 = vpop.f32.mrf.mxu0
      %v4296 = vadd.f32 %v3967, %v4295
      %4297 = vmatmul.bf16.gmra.mxu0 %v3524
      %v4298 = vpop.f32.mrf.mxu0
      %v4299 = vadd.f32 %v3970, %v4298
      %v4300 = vpop.f32.mrf.mxu0
      %v4301 = vadd.f32 %v3972, %v4300
      %4302 = vmatmul.bf16.gmra.mxu0 %v3526
      %v4303 = vpop.f32.mrf.mxu0
      %v4304 = vadd.f32 %v3975, %v4303
      %v4305 = vpop.f32.mrf.mxu0
      %v4306 = vadd.f32 %v3977, %v4305
      %4307 = vmatmul.bf16.gmra.mxu0 %v3528
      %v4308 = vpop.f32.mrf.mxu0
      %v4309 = vadd.f32 %v3980, %v4308
      %v4310 = vpop.f32.mrf.mxu0
      %v4311 = vadd.f32 %v3982, %v4310
      %4312 = vmatmul.bf16.gmra.mxu0 %v3530
      %v4313 = vpop.f32.mrf.mxu0
      %v4314 = vadd.f32 %v3985, %v4313
      %v4315 = vpop.f32.mrf.mxu0
      %v4316 = vadd.f32 %v3987, %v4315
      %4317 = vmatmul.bf16.gmra.mxu0 %v3532
      %v4318 = vpop.f32.mrf.mxu0
      %v4319 = vadd.f32 %v3990, %v4318
      %v4320 = vpop.f32.mrf.mxu0
      %v4321 = vadd.f32 %v3992, %v4320
      %4322 = vmatmul.bf16.gmra.mxu0 %v3534
      %v4323 = vpop.f32.mrf.mxu0
      %v4324 = vadd.f32 %v3995, %v4323
      %v4325 = vpop.f32.mrf.mxu0
      %v4326 = vadd.f32 %v3997, %v4325
      %4327 = vmatmul.bf16.gmra.mxu0 %v3536
      %v4328 = vpop.f32.mrf.mxu0
      %v4329 = vadd.f32 %v4000, %v4328
      %v4330 = vpop.f32.mrf.mxu0
      %v4331 = vadd.f32 %v4002, %v4330
      %4332 = vmatmul.bf16.gmra.mxu0 %v3538
      %v4333 = vpop.f32.mrf.mxu0
      %v4334 = vadd.f32 %v4005, %v4333
      %v4335 = vpop.f32.mrf.mxu0
      %v4336 = vadd.f32 %v4007, %v4335
      %4337 = vmatmul.bf16.gmra.mxu0 %v3540
      %v4338 = vpop.f32.mrf.mxu0
      %v4339 = vadd.f32 %v4010, %v4338
      %v4340 = vpop.f32.mrf.mxu0
      %v4341 = vadd.f32 %v4012, %v4340
      %4342 = vmatmul.bf16.gmra.mxu0 %v3542
      %v4343 = vpop.f32.mrf.mxu0
      %v4344 = vadd.f32 %v4015, %v4343
      %v4345 = vpop.f32.mrf.mxu0
      %v4346 = vadd.f32 %v4017, %v4345
      %4347 = vmatmul.bf16.gmra.mxu0 %v3544
      %v4348 = vpop.f32.mrf.mxu0
      %v4349 = vadd.f32 %v4020, %v4348
      %v4350 = vpop.f32.mrf.mxu0
      %v4351 = vadd.f32 %v4022, %v4350
      %4352 = vmatmul.bf16.gmra.mxu0 %v3546
      %v4353 = vpop.f32.mrf.mxu0
      %v4354 = vadd.f32 %v4025, %v4353
      %v4355 = vpop.f32.mrf.mxu0
      %v4356 = vadd.f32 %v4027, %v4355
      %4357 = vmatmul.bf16.gmra.mxu0 %v3548
      %v4358 = vpop.f32.mrf.mxu0
      %v4359 = vadd.f32 %v4030, %v4358
      %v4360 = vpop.f32.mrf.mxu0
      %v4361 = vadd.f32 %v4032, %v4360
      %4362 = vmatmul.bf16.gmra.mxu0 %v3550
      %v4363 = vpop.f32.mrf.mxu0
      %v4364 = vadd.f32 %v4035, %v4363
      %v4365 = vpop.f32.mrf.mxu0
      %v4366 = vadd.f32 %v4037, %v4365
      %4367 = vmatmul.bf16.gmra.mxu0 %v3552
      %v4368 = vpop.f32.mrf.mxu0
      %v4369 = vadd.f32 %v4040, %v4368
      %v4370 = vpop.f32.mrf.mxu0
      %v4371 = vadd.f32 %v4042, %v4370
      %4372 = vmatmul.bf16.gmra.mxu0 %v3554
      %v4373 = vpop.f32.mrf.mxu0
      %v4374 = vadd.f32 %v4045, %v4373
      %v4375 = vpop.f32.mrf.mxu0
      %v4376 = vadd.f32 %v4047, %v4375
      %4377 = vmatmul.bf16.gmra.mxu0 %v3556
      %v4378 = vpop.f32.mrf.mxu0
      %v4379 = vadd.f32 %v4050, %v4378
      %v4380 = vpop.f32.mrf.mxu0
      %v4381 = vadd.f32 %v4052, %v4380
      %4382 = vmatmul.bf16.gmra.mxu0 %v3558
      %v4383 = vpop.f32.mrf.mxu0
      %v4384 = vadd.f32 %v4055, %v4383
      %v4385 = vpop.f32.mrf.mxu0
      %v4386 = vadd.f32 %v4057, %v4385
      %4387 = vmatmul.bf16.gmra.mxu0 %v3560
      %v4388 = vpop.f32.mrf.mxu0
      %v4389 = vadd.f32 %v4060, %v4388
      %v4390 = vpop.f32.mrf.mxu0
      %v4391 = vadd.f32 %v4062, %v4390
      %4392 = vmatmul.bf16.gmra.mxu0 %v3562
      %v4393 = vpop.f32.mrf.mxu0
      %v4394 = vadd.f32 %v4065, %v4393
      %v4395 = vpop.f32.mrf.mxu0
      %v4396 = vadd.f32 %v4067, %v4395
      %4397 = vmatmul.bf16.gmra.mxu0 %v3564
      %v4398 = vpop.f32.mrf.mxu0
      %v4399 = vadd.f32 %v4070, %v4398
      %v4400 = vpop.f32.mrf.mxu0
      %v4401 = vadd.f32 %v4072, %v4400
      %4402 = vmatmul.bf16.gmra.mxu0 %v3566
      %v4403 = vpop.f32.mrf.mxu0
      %v4404 = vadd.f32 %v4075, %v4403
      %v4405 = vpop.f32.mrf.mxu0
      %v4406 = vadd.f32 %v4077, %v4405
      %4407 = vmatmul.bf16.gmra.mxu0 %v3568
      %v4408 = vpop.f32.mrf.mxu0
      %v4409 = vadd.f32 %v4080, %v4408
      %v4410 = vpop.f32.mrf.mxu0
      %v4411 = vadd.f32 %v4082, %v4410
      %4412 = vmatmul.bf16.gmra.mxu0 %v3570
      %v4413 = vpop.f32.mrf.mxu0
      %v4414 = vadd.f32 %v4085, %v4413
      %v4415 = vpop.f32.mrf.mxu0
      %v4416 = vadd.f32 %v4087, %v4415
      %4417 = vmatmul.bf16.gmra.mxu0 %v3572
      %v4418 = vpop.f32.mrf.mxu0
      %v4419 = vadd.f32 %v4090, %v4418
      %v4420 = vpop.f32.mrf.mxu0
      %v4421 = vadd.f32 %v4092, %v4420
      %4422 = vdwg.mxu0
      %4423 = vmatpush.bf16.msra.mxu0 %v3716
      %4424 = vmatpush.bf16.msra.mxu0 %v3714
      %4425 = vmatpush.bf16.msra.mxu0 %v3712
      %4426 = vmatpush.bf16.msra.mxu0 %v3710
      %4427 = vmatpush.bf16.msra.mxu0 %v3708
      %4428 = vmatpush.bf16.msra.mxu0 %v3706
      %4429 = vmatpush.bf16.msra.mxu0 %v3704
      %4430 = vmatpush.bf16.msra.mxu0 %v3702
      %4431 = vmatmul.bf16.gmra.mxu0 %v3445
      %v4432 = vpop.f32.mrf.mxu0
      %v4433 = vadd.f32 0.0, %v4432
      %v4434 = vpop.f32.mrf.mxu0
      %v4435 = vadd.f32 0.0, %v4434
      %4436 = vmatmul.bf16.gmra.mxu0 %v3447
      %v4437 = vpop.f32.mrf.mxu0
      %v4438 = vadd.f32 0.0, %v4437
      %v4439 = vpop.f32.mrf.mxu0
      %v4440 = vadd.f32 0.0, %v4439
      %4441 = vmatmul.bf16.gmra.mxu0 %v3449
      %v4442 = vpop.f32.mrf.mxu0
      %v4443 = vadd.f32 0.0, %v4442
      %v4444 = vpop.f32.mrf.mxu0
      %v4445 = vadd.f32 0.0, %v4444
      %4446 = vmatmul.bf16.gmra.mxu0 %v3451
      %v4447 = vpop.f32.mrf.mxu0
      %v4448 = vadd.f32 0.0, %v4447
      %v4449 = vpop.f32.mrf.mxu0
      %v4450 = vadd.f32 0.0, %v4449
      %4451 = vmatmul.bf16.gmra.mxu0 %v3453
      %v4452 = vpop.f32.mrf.mxu0
      %v4453 = vadd.f32 0.0, %v4452
      %v4454 = vpop.f32.mrf.mxu0
      %v4455 = vadd.f32 0.0, %v4454
      %4456 = vmatmul.bf16.gmra.mxu0 %v3455
      %v4457 = vpop.f32.mrf.mxu0
      %v4458 = vadd.f32 0.0, %v4457
      %v4459 = vpop.f32.mrf.mxu0
      %v4460 = vadd.f32 0.0, %v4459
      %4461 = vmatmul.bf16.gmra.mxu0 %v3457
      %v4462 = vpop.f32.mrf.mxu0
      %v4463 = vadd.f32 0.0, %v4462
      %v4464 = vpop.f32.mrf.mxu0
      %v4465 = vadd.f32 0.0, %v4464
      %4466 = vmatmul.bf16.gmra.mxu0 %v3459
      %v4467 = vpop.f32.mrf.mxu0
      %v4468 = vadd.f32 0.0, %v4467
      %v4469 = vpop.f32.mrf.mxu0
      %v4470 = vadd.f32 0.0, %v4469
      %4471 = vmatmul.bf16.gmra.mxu0 %v3461
      %v4472 = vpop.f32.mrf.mxu0
      %v4473 = vadd.f32 0.0, %v4472
      %v4474 = vpop.f32.mrf.mxu0
      %v4475 = vadd.f32 0.0, %v4474
      %4476 = vmatmul.bf16.gmra.mxu0 %v3463
      %v4477 = vpop.f32.mrf.mxu0
      %v4478 = vadd.f32 0.0, %v4477
      %v4479 = vpop.f32.mrf.mxu0
      %v4480 = vadd.f32 0.0, %v4479
      %4481 = vmatmul.bf16.gmra.mxu0 %v3465
      %v4482 = vpop.f32.mrf.mxu0
      %v4483 = vadd.f32 0.0, %v4482
      %v4484 = vpop.f32.mrf.mxu0
      %v4485 = vadd.f32 0.0, %v4484
      %4486 = vmatmul.bf16.gmra.mxu0 %v3467
      %v4487 = vpop.f32.mrf.mxu0
      %v4488 = vadd.f32 0.0, %v4487
      %v4489 = vpop.f32.mrf.mxu0
      %v4490 = vadd.f32 0.0, %v4489
      %4491 = vmatmul.bf16.gmra.mxu0 %v3469
      %v4492 = vpop.f32.mrf.mxu0
      %v4493 = vadd.f32 0.0, %v4492
      %v4494 = vpop.f32.mrf.mxu0
      %v4495 = vadd.f32 0.0, %v4494
      %4496 = vmatmul.bf16.gmra.mxu0 %v3471
      %v4497 = vpop.f32.mrf.mxu0
      %v4498 = vadd.f32 0.0, %v4497
      %v4499 = vpop.f32.mrf.mxu0
      %v4500 = vadd.f32 0.0, %v4499
      %4501 = vmatmul.bf16.gmra.mxu0 %v3473
      %v4502 = vpop.f32.mrf.mxu0
      %v4503 = vadd.f32 0.0, %v4502
      %v4504 = vpop.f32.mrf.mxu0
      %v4505 = vadd.f32 0.0, %v4504
      %4506 = vmatmul.bf16.gmra.mxu0 %v3475
      %v4507 = vpop.f32.mrf.mxu0
      %v4508 = vadd.f32 0.0, %v4507
      %v4509 = vpop.f32.mrf.mxu0
      %v4510 = vadd.f32 0.0, %v4509
      %4511 = vmatmul.bf16.gmra.mxu0 %v3477
      %v4512 = vpop.f32.mrf.mxu0
      %v4513 = vadd.f32 0.0, %v4512
      %v4514 = vpop.f32.mrf.mxu0
      %v4515 = vadd.f32 0.0, %v4514
      %4516 = vmatmul.bf16.gmra.mxu0 %v3479
      %v4517 = vpop.f32.mrf.mxu0
      %v4518 = vadd.f32 0.0, %v4517
      %v4519 = vpop.f32.mrf.mxu0
      %v4520 = vadd.f32 0.0, %v4519
      %4521 = vmatmul.bf16.gmra.mxu0 %v3481
      %v4522 = vpop.f32.mrf.mxu0
      %v4523 = vadd.f32 0.0, %v4522
      %v4524 = vpop.f32.mrf.mxu0
      %v4525 = vadd.f32 0.0, %v4524
      %4526 = vmatmul.bf16.gmra.mxu0 %v3483
      %v4527 = vpop.f32.mrf.mxu0
      %v4528 = vadd.f32 0.0, %v4527
      %v4529 = vpop.f32.mrf.mxu0
      %v4530 = vadd.f32 0.0, %v4529
      %4531 = vmatmul.bf16.gmra.mxu0 %v3485
      %v4532 = vpop.f32.mrf.mxu0
      %v4533 = vadd.f32 0.0, %v4532
      %v4534 = vpop.f32.mrf.mxu0
      %v4535 = vadd.f32 0.0, %v4534
      %4536 = vmatmul.bf16.gmra.mxu0 %v3487
      %v4537 = vpop.f32.mrf.mxu0
      %v4538 = vadd.f32 0.0, %v4537
      %v4539 = vpop.f32.mrf.mxu0
      %v4540 = vadd.f32 0.0, %v4539
      %4541 = vmatmul.bf16.gmra.mxu0 %v3489
      %v4542 = vpop.f32.mrf.mxu0
      %v4543 = vadd.f32 0.0, %v4542
      %v4544 = vpop.f32.mrf.mxu0
      %v4545 = vadd.f32 0.0, %v4544
      %4546 = vmatmul.bf16.gmra.mxu0 %v3491
      %v4547 = vpop.f32.mrf.mxu0
      %v4548 = vadd.f32 0.0, %v4547
      %v4549 = vpop.f32.mrf.mxu0
      %v4550 = vadd.f32 0.0, %v4549
      %4551 = vmatmul.bf16.gmra.mxu0 %v3493
      %v4552 = vpop.f32.mrf.mxu0
      %v4553 = vadd.f32 0.0, %v4552
      %v4554 = vpop.f32.mrf.mxu0
      %v4555 = vadd.f32 0.0, %v4554
      %4556 = vmatmul.bf16.gmra.mxu0 %v3495
      %v4557 = vpop.f32.mrf.mxu0
      %v4558 = vadd.f32 0.0, %v4557
      %v4559 = vpop.f32.mrf.mxu0
      %v4560 = vadd.f32 0.0, %v4559
      %4561 = vmatmul.bf16.gmra.mxu0 %v3497
      %v4562 = vpop.f32.mrf.mxu0
      %v4563 = vadd.f32 0.0, %v4562
      %v4564 = vpop.f32.mrf.mxu0
      %v4565 = vadd.f32 0.0, %v4564
      %4566 = vmatmul.bf16.gmra.mxu0 %v3499
      %v4567 = vpop.f32.mrf.mxu0
      %v4568 = vadd.f32 0.0, %v4567
      %v4569 = vpop.f32.mrf.mxu0
      %v4570 = vadd.f32 0.0, %v4569
      %4571 = vmatmul.bf16.gmra.mxu0 %v3501
      %v4572 = vpop.f32.mrf.mxu0
      %v4573 = vadd.f32 0.0, %v4572
      %v4574 = vpop.f32.mrf.mxu0
      %v4575 = vadd.f32 0.0, %v4574
      %4576 = vmatmul.bf16.gmra.mxu0 %v3503
      %v4577 = vpop.f32.mrf.mxu0
      %v4578 = vadd.f32 0.0, %v4577
      %v4579 = vpop.f32.mrf.mxu0
      %v4580 = vadd.f32 0.0, %v4579
      %4581 = vmatmul.bf16.gmra.mxu0 %v3505
      %v4582 = vpop.f32.mrf.mxu0
      %v4583 = vadd.f32 0.0, %v4582
      %v4584 = vpop.f32.mrf.mxu0
      %v4585 = vadd.f32 0.0, %v4584
      %4586 = vmatmul.bf16.gmra.mxu0 %v3507
      %v4587 = vpop.f32.mrf.mxu0
      %v4588 = vadd.f32 0.0, %v4587
      %v4589 = vpop.f32.mrf.mxu0
      %v4590 = vadd.f32 0.0, %v4589
      %4591 = vmatmul.bf16.gmra.mxu0 %v3509
      %v4592 = vpop.f32.mrf.mxu0
      %v4593 = vadd.f32 0.0, %v4592
      %v4594 = vpop.f32.mrf.mxu0
      %v4595 = vadd.f32 0.0, %v4594
      %4596 = vmatmul.bf16.gmra.mxu0 %v3511
      %v4597 = vpop.f32.mrf.mxu0
      %v4598 = vadd.f32 0.0, %v4597
      %v4599 = vpop.f32.mrf.mxu0
      %v4600 = vadd.f32 0.0, %v4599
      %4601 = vmatmul.bf16.gmra.mxu0 %v3513
      %v4602 = vpop.f32.mrf.mxu0
      %v4603 = vadd.f32 0.0, %v4602
      %v4604 = vpop.f32.mrf.mxu0
      %v4605 = vadd.f32 0.0, %v4604
      %4606 = vmatmul.bf16.gmra.mxu0 %v3515
      %v4607 = vpop.f32.mrf.mxu0
      %v4608 = vadd.f32 0.0, %v4607
      %v4609 = vpop.f32.mrf.mxu0
      %v4610 = vadd.f32 0.0, %v4609
      %4611 = vmatmul.bf16.gmra.mxu0 %v3517
      %v4612 = vpop.f32.mrf.mxu0
      %v4613 = vadd.f32 0.0, %v4612
      %v4614 = vpop.f32.mrf.mxu0
      %v4615 = vadd.f32 0.0, %v4614
      %4616 = vmatmul.bf16.gmra.mxu0 %v3519
      %v4617 = vpop.f32.mrf.mxu0
      %v4618 = vadd.f32 0.0, %v4617
      %v4619 = vpop.f32.mrf.mxu0
      %v4620 = vadd.f32 0.0, %v4619
      %4621 = vmatmul.bf16.gmra.mxu0 %v3521
      %v4622 = vpop.f32.mrf.mxu0
      %v4623 = vadd.f32 0.0, %v4622
      %v4624 = vpop.f32.mrf.mxu0
      %v4625 = vadd.f32 0.0, %v4624
      %4626 = vmatmul.bf16.gmra.mxu0 %v3523
      %v4627 = vpop.f32.mrf.mxu0
      %v4628 = vadd.f32 0.0, %v4627
      %v4629 = vpop.f32.mrf.mxu0
      %v4630 = vadd.f32 0.0, %v4629
      %4631 = vmatmul.bf16.gmra.mxu0 %v3525
      %v4632 = vpop.f32.mrf.mxu0
      %v4633 = vadd.f32 0.0, %v4632
      %v4634 = vpop.f32.mrf.mxu0
      %v4635 = vadd.f32 0.0, %v4634
      %4636 = vmatmul.bf16.gmra.mxu0 %v3527
      %v4637 = vpop.f32.mrf.mxu0
      %v4638 = vadd.f32 0.0, %v4637
      %v4639 = vpop.f32.mrf.mxu0
      %v4640 = vadd.f32 0.0, %v4639
      %4641 = vmatmul.bf16.gmra.mxu0 %v3529
      %v4642 = vpop.f32.mrf.mxu0
      %v4643 = vadd.f32 0.0, %v4642
      %v4644 = vpop.f32.mrf.mxu0
      %v4645 = vadd.f32 0.0, %v4644
      %4646 = vmatmul.bf16.gmra.mxu0 %v3531
      %v4647 = vpop.f32.mrf.mxu0
      %v4648 = vadd.f32 0.0, %v4647
      %v4649 = vpop.f32.mrf.mxu0
      %v4650 = vadd.f32 0.0, %v4649
      %4651 = vmatmul.bf16.gmra.mxu0 %v3533
      %v4652 = vpop.f32.mrf.mxu0
      %v4653 = vadd.f32 0.0, %v4652
      %v4654 = vpop.f32.mrf.mxu0
      %v4655 = vadd.f32 0.0, %v4654
      %4656 = vmatmul.bf16.gmra.mxu0 %v3535
      %v4657 = vpop.f32.mrf.mxu0
      %v4658 = vadd.f32 0.0, %v4657
      %v4659 = vpop.f32.mrf.mxu0
      %v4660 = vadd.f32 0.0, %v4659
      %4661 = vmatmul.bf16.gmra.mxu0 %v3537
      %v4662 = vpop.f32.mrf.mxu0
      %v4663 = vadd.f32 0.0, %v4662
      %v4664 = vpop.f32.mrf.mxu0
      %v4665 = vadd.f32 0.0, %v4664
      %4666 = vmatmul.bf16.gmra.mxu0 %v3539
      %v4667 = vpop.f32.mrf.mxu0
      %v4668 = vadd.f32 0.0, %v4667
      %v4669 = vpop.f32.mrf.mxu0
      %v4670 = vadd.f32 0.0, %v4669
      %4671 = vmatmul.bf16.gmra.mxu0 %v3541
      %v4672 = vpop.f32.mrf.mxu0
      %v4673 = vadd.f32 0.0, %v4672
      %v4674 = vpop.f32.mrf.mxu0
      %v4675 = vadd.f32 0.0, %v4674
      %4676 = vmatmul.bf16.gmra.mxu0 %v3543
      %v4677 = vpop.f32.mrf.mxu0
      %v4678 = vadd.f32 0.0, %v4677
      %v4679 = vpop.f32.mrf.mxu0
      %v4680 = vadd.f32 0.0, %v4679
      %4681 = vmatmul.bf16.gmra.mxu0 %v3545
      %v4682 = vpop.f32.mrf.mxu0
      %v4683 = vadd.f32 0.0, %v4682
      %v4684 = vpop.f32.mrf.mxu0
      %v4685 = vadd.f32 0.0, %v4684
      %4686 = vmatmul.bf16.gmra.mxu0 %v3547
      %v4687 = vpop.f32.mrf.mxu0
      %v4688 = vadd.f32 0.0, %v4687
      %v4689 = vpop.f32.mrf.mxu0
      %v4690 = vadd.f32 0.0, %v4689
      %4691 = vmatmul.bf16.gmra.mxu0 %v3549
      %v4692 = vpop.f32.mrf.mxu0
      %v4693 = vadd.f32 0.0, %v4692
      %v4694 = vpop.f32.mrf.mxu0
      %v4695 = vadd.f32 0.0, %v4694
      %4696 = vmatmul.bf16.gmra.mxu0 %v3551
      %v4697 = vpop.f32.mrf.mxu0
      %v4698 = vadd.f32 0.0, %v4697
      %v4699 = vpop.f32.mrf.mxu0
      %v4700 = vadd.f32 0.0, %v4699
      %4701 = vmatmul.bf16.gmra.mxu0 %v3553
      %v4702 = vpop.f32.mrf.mxu0
      %v4703 = vadd.f32 0.0, %v4702
      %v4704 = vpop.f32.mrf.mxu0
      %v4705 = vadd.f32 0.0, %v4704
      %4706 = vmatmul.bf16.gmra.mxu0 %v3555
      %v4707 = vpop.f32.mrf.mxu0
      %v4708 = vadd.f32 0.0, %v4707
      %v4709 = vpop.f32.mrf.mxu0
      %v4710 = vadd.f32 0.0, %v4709
      %4711 = vmatmul.bf16.gmra.mxu0 %v3557
      %v4712 = vpop.f32.mrf.mxu0
      %v4713 = vadd.f32 0.0, %v4712
      %v4714 = vpop.f32.mrf.mxu0
      %v4715 = vadd.f32 0.0, %v4714
      %4716 = vmatmul.bf16.gmra.mxu0 %v3559
      %v4717 = vpop.f32.mrf.mxu0
      %v4718 = vadd.f32 0.0, %v4717
      %v4719 = vpop.f32.mrf.mxu0
      %v4720 = vadd.f32 0.0, %v4719
      %4721 = vmatmul.bf16.gmra.mxu0 %v3561
      %v4722 = vpop.f32.mrf.mxu0
      %v4723 = vadd.f32 0.0, %v4722
      %v4724 = vpop.f32.mrf.mxu0
      %v4725 = vadd.f32 0.0, %v4724
      %4726 = vmatmul.bf16.gmra.mxu0 %v3563
      %v4727 = vpop.f32.mrf.mxu0
      %v4728 = vadd.f32 0.0, %v4727
      %v4729 = vpop.f32.mrf.mxu0
      %v4730 = vadd.f32 0.0, %v4729
      %4731 = vmatmul.bf16.gmra.mxu0 %v3565
      %v4732 = vpop.f32.mrf.mxu0
      %v4733 = vadd.f32 0.0, %v4732
      %v4734 = vpop.f32.mrf.mxu0
      %v4735 = vadd.f32 0.0, %v4734
      %4736 = vmatmul.bf16.gmra.mxu0 %v3567
      %v4737 = vpop.f32.mrf.mxu0
      %v4738 = vadd.f32 0.0, %v4737
      %v4739 = vpop.f32.mrf.mxu0
      %v4740 = vadd.f32 0.0, %v4739
      %4741 = vmatmul.bf16.gmra.mxu0 %v3569
      %v4742 = vpop.f32.mrf.mxu0
      %v4743 = vadd.f32 0.0, %v4742
      %v4744 = vpop.f32.mrf.mxu0
      %v4745 = vadd.f32 0.0, %v4744
      %4746 = vmatmul.bf16.gmra.mxu0 %v3571
      %v4747 = vpop.f32.mrf.mxu0
      %v4748 = vadd.f32 0.0, %v4747
      %v4749 = vpop.f32.mrf.mxu0
      %v4750 = vadd.f32 0.0, %v4749
      %4751 = vdwg.mxu0
      %4752 = vmatpush.bf16.msra.mxu0 %v3732
      %4753 = vmatpush.bf16.msra.mxu0 %v3730
      %4754 = vmatpush.bf16.msra.mxu0 %v3728
      %4755 = vmatpush.bf16.msra.mxu0 %v3726
      %4756 = vmatpush.bf16.msra.mxu0 %v3724
      %4757 = vmatpush.bf16.msra.mxu0 %v3722
      %4758 = vmatpush.bf16.msra.mxu0 %v3720
      %4759 = vmatpush.bf16.msra.mxu0 %v3718
      %4760 = vmatmul.bf16.gmra.mxu0 %v3446
      %v4761 = vpop.f32.mrf.mxu0
      %v4762 = vadd.f32 %v4433, %v4761
      %v4763 = vpop.f32.mrf.mxu0
      %v4764 = vadd.f32 %v4435, %v4763
      %4765 = vmatmul.bf16.gmra.mxu0 %v3448
      %v4766 = vpop.f32.mrf.mxu0
      %v4767 = vadd.f32 %v4438, %v4766
      %v4768 = vpop.f32.mrf.mxu0
      %v4769 = vadd.f32 %v4440, %v4768
      %4770 = vmatmul.bf16.gmra.mxu0 %v3450
      %v4771 = vpop.f32.mrf.mxu0
      %v4772 = vadd.f32 %v4443, %v4771
      %v4773 = vpop.f32.mrf.mxu0
      %v4774 = vadd.f32 %v4445, %v4773
      %4775 = vmatmul.bf16.gmra.mxu0 %v3452
      %v4776 = vpop.f32.mrf.mxu0
      %v4777 = vadd.f32 %v4448, %v4776
      %v4778 = vpop.f32.mrf.mxu0
      %v4779 = vadd.f32 %v4450, %v4778
      %4780 = vmatmul.bf16.gmra.mxu0 %v3454
      %v4781 = vpop.f32.mrf.mxu0
      %v4782 = vadd.f32 %v4453, %v4781
      %v4783 = vpop.f32.mrf.mxu0
      %v4784 = vadd.f32 %v4455, %v4783
      %4785 = vmatmul.bf16.gmra.mxu0 %v3456
      %v4786 = vpop.f32.mrf.mxu0
      %v4787 = vadd.f32 %v4458, %v4786
      %v4788 = vpop.f32.mrf.mxu0
      %v4789 = vadd.f32 %v4460, %v4788
      %4790 = vmatmul.bf16.gmra.mxu0 %v3458
      %v4791 = vpop.f32.mrf.mxu0
      %v4792 = vadd.f32 %v4463, %v4791
      %v4793 = vpop.f32.mrf.mxu0
      %v4794 = vadd.f32 %v4465, %v4793
      %4795 = vmatmul.bf16.gmra.mxu0 %v3460
      %v4796 = vpop.f32.mrf.mxu0
      %v4797 = vadd.f32 %v4468, %v4796
      %v4798 = vpop.f32.mrf.mxu0
      %v4799 = vadd.f32 %v4470, %v4798
      %4800 = vmatmul.bf16.gmra.mxu0 %v3462
      %v4801 = vpop.f32.mrf.mxu0
      %v4802 = vadd.f32 %v4473, %v4801
      %v4803 = vpop.f32.mrf.mxu0
      %v4804 = vadd.f32 %v4475, %v4803
      %4805 = vmatmul.bf16.gmra.mxu0 %v3464
      %v4806 = vpop.f32.mrf.mxu0
      %v4807 = vadd.f32 %v4478, %v4806
      %v4808 = vpop.f32.mrf.mxu0
      %v4809 = vadd.f32 %v4480, %v4808
      %4810 = vmatmul.bf16.gmra.mxu0 %v3466
      %v4811 = vpop.f32.mrf.mxu0
      %v4812 = vadd.f32 %v4483, %v4811
      %v4813 = vpop.f32.mrf.mxu0
      %v4814 = vadd.f32 %v4485, %v4813
      %4815 = vmatmul.bf16.gmra.mxu0 %v3468
      %v4816 = vpop.f32.mrf.mxu0
      %v4817 = vadd.f32 %v4488, %v4816
      %v4818 = vpop.f32.mrf.mxu0
      %v4819 = vadd.f32 %v4490, %v4818
      %4820 = vmatmul.bf16.gmra.mxu0 %v3470
      %v4821 = vpop.f32.mrf.mxu0
      %v4822 = vadd.f32 %v4493, %v4821
      %v4823 = vpop.f32.mrf.mxu0
      %v4824 = vadd.f32 %v4495, %v4823
      %4825 = vmatmul.bf16.gmra.mxu0 %v3472
      %v4826 = vpop.f32.mrf.mxu0
      %v4827 = vadd.f32 %v4498, %v4826
      %v4828 = vpop.f32.mrf.mxu0
      %v4829 = vadd.f32 %v4500, %v4828
      %4830 = vmatmul.bf16.gmra.mxu0 %v3474
      %v4831 = vpop.f32.mrf.mxu0
      %v4832 = vadd.f32 %v4503, %v4831
      %v4833 = vpop.f32.mrf.mxu0
      %v4834 = vadd.f32 %v4505, %v4833
      %4835 = vmatmul.bf16.gmra.mxu0 %v3476
      %v4836 = vpop.f32.mrf.mxu0
      %v4837 = vadd.f32 %v4508, %v4836
      %v4838 = vpop.f32.mrf.mxu0
      %v4839 = vadd.f32 %v4510, %v4838
      %4840 = vmatmul.bf16.gmra.mxu0 %v3478
      %v4841 = vpop.f32.mrf.mxu0
      %v4842 = vadd.f32 %v4513, %v4841
      %v4843 = vpop.f32.mrf.mxu0
      %v4844 = vadd.f32 %v4515, %v4843
      %4845 = vmatmul.bf16.gmra.mxu0 %v3480
      %v4846 = vpop.f32.mrf.mxu0
      %v4847 = vadd.f32 %v4518, %v4846
      %v4848 = vpop.f32.mrf.mxu0
      %v4849 = vadd.f32 %v4520, %v4848
      %4850 = vmatmul.bf16.gmra.mxu0 %v3482
      %v4851 = vpop.f32.mrf.mxu0
      %v4852 = vadd.f32 %v4523, %v4851
      %v4853 = vpop.f32.mrf.mxu0
      %v4854 = vadd.f32 %v4525, %v4853
      %4855 = vmatmul.bf16.gmra.mxu0 %v3484
      %v4856 = vpop.f32.mrf.mxu0
      %v4857 = vadd.f32 %v4528, %v4856
      %v4858 = vpop.f32.mrf.mxu0
      %v4859 = vadd.f32 %v4530, %v4858
      %4860 = vmatmul.bf16.gmra.mxu0 %v3486
      %v4861 = vpop.f32.mrf.mxu0
      %v4862 = vadd.f32 %v4533, %v4861
      %v4863 = vpop.f32.mrf.mxu0
      %v4864 = vadd.f32 %v4535, %v4863
      %4865 = vmatmul.bf16.gmra.mxu0 %v3488
      %v4866 = vpop.f32.mrf.mxu0
      %v4867 = vadd.f32 %v4538, %v4866
      %v4868 = vpop.f32.mrf.mxu0
      %v4869 = vadd.f32 %v4540, %v4868
      %4870 = vmatmul.bf16.gmra.mxu0 %v3490
      %v4871 = vpop.f32.mrf.mxu0
      %v4872 = vadd.f32 %v4543, %v4871
      %v4873 = vpop.f32.mrf.mxu0
      %v4874 = vadd.f32 %v4545, %v4873
      %4875 = vmatmul.bf16.gmra.mxu0 %v3492
      %v4876 = vpop.f32.mrf.mxu0
      %v4877 = vadd.f32 %v4548, %v4876
      %v4878 = vpop.f32.mrf.mxu0
      %v4879 = vadd.f32 %v4550, %v4878
      %4880 = vmatmul.bf16.gmra.mxu0 %v3494
      %v4881 = vpop.f32.mrf.mxu0
      %v4882 = vadd.f32 %v4553, %v4881
      %v4883 = vpop.f32.mrf.mxu0
      %v4884 = vadd.f32 %v4555, %v4883
      %4885 = vmatmul.bf16.gmra.mxu0 %v3496
      %v4886 = vpop.f32.mrf.mxu0
      %v4887 = vadd.f32 %v4558, %v4886
      %v4888 = vpop.f32.mrf.mxu0
      %v4889 = vadd.f32 %v4560, %v4888
      %4890 = vmatmul.bf16.gmra.mxu0 %v3498
      %v4891 = vpop.f32.mrf.mxu0
      %v4892 = vadd.f32 %v4563, %v4891
      %v4893 = vpop.f32.mrf.mxu0
      %v4894 = vadd.f32 %v4565, %v4893
      %4895 = vmatmul.bf16.gmra.mxu0 %v3500
      %v4896 = vpop.f32.mrf.mxu0
      %v4897 = vadd.f32 %v4568, %v4896
      %v4898 = vpop.f32.mrf.mxu0
      %v4899 = vadd.f32 %v4570, %v4898
      %4900 = vmatmul.bf16.gmra.mxu0 %v3502
      %v4901 = vpop.f32.mrf.mxu0
      %v4902 = vadd.f32 %v4573, %v4901
      %v4903 = vpop.f32.mrf.mxu0
      %v4904 = vadd.f32 %v4575, %v4903
      %4905 = vmatmul.bf16.gmra.mxu0 %v3504
      %v4906 = vpop.f32.mrf.mxu0
      %v4907 = vadd.f32 %v4578, %v4906
      %v4908 = vpop.f32.mrf.mxu0
      %v4909 = vadd.f32 %v4580, %v4908
      %4910 = vmatmul.bf16.gmra.mxu0 %v3506
      %v4911 = vpop.f32.mrf.mxu0
      %v4912 = vadd.f32 %v4583, %v4911
      %v4913 = vpop.f32.mrf.mxu0
      %v4914 = vadd.f32 %v4585, %v4913
      %4915 = vmatmul.bf16.gmra.mxu0 %v3508
      %v4916 = vpop.f32.mrf.mxu0
      %v4917 = vadd.f32 %v4588, %v4916
      %v4918 = vpop.f32.mrf.mxu0
      %v4919 = vadd.f32 %v4590, %v4918
      %4920 = vmatmul.bf16.gmra.mxu0 %v3510
      %v4921 = vpop.f32.mrf.mxu0
      %v4922 = vadd.f32 %v4593, %v4921
      %v4923 = vpop.f32.mrf.mxu0
      %v4924 = vadd.f32 %v4595, %v4923
      %4925 = vmatmul.bf16.gmra.mxu0 %v3512
      %v4926 = vpop.f32.mrf.mxu0
      %v4927 = vadd.f32 %v4598, %v4926
      %v4928 = vpop.f32.mrf.mxu0
      %v4929 = vadd.f32 %v4600, %v4928
      %4930 = vmatmul.bf16.gmra.mxu0 %v3514
      %v4931 = vpop.f32.mrf.mxu0
      %v4932 = vadd.f32 %v4603, %v4931
      %v4933 = vpop.f32.mrf.mxu0
      %v4934 = vadd.f32 %v4605, %v4933
      %4935 = vmatmul.bf16.gmra.mxu0 %v3516
      %v4936 = vpop.f32.mrf.mxu0
      %v4937 = vadd.f32 %v4608, %v4936
      %v4938 = vpop.f32.mrf.mxu0
      %v4939 = vadd.f32 %v4610, %v4938
      %4940 = vmatmul.bf16.gmra.mxu0 %v3518
      %v4941 = vpop.f32.mrf.mxu0
      %v4942 = vadd.f32 %v4613, %v4941
      %v4943 = vpop.f32.mrf.mxu0
      %v4944 = vadd.f32 %v4615, %v4943
      %4945 = vmatmul.bf16.gmra.mxu0 %v3520
      %v4946 = vpop.f32.mrf.mxu0
      %v4947 = vadd.f32 %v4618, %v4946
      %v4948 = vpop.f32.mrf.mxu0
      %v4949 = vadd.f32 %v4620, %v4948
      %4950 = vmatmul.bf16.gmra.mxu0 %v3522
      %v4951 = vpop.f32.mrf.mxu0
      %v4952 = vadd.f32 %v4623, %v4951
      %v4953 = vpop.f32.mrf.mxu0
      %v4954 = vadd.f32 %v4625, %v4953
      %4955 = vmatmul.bf16.gmra.mxu0 %v3524
      %v4956 = vpop.f32.mrf.mxu0
      %v4957 = vadd.f32 %v4628, %v4956
      %v4958 = vpop.f32.mrf.mxu0
      %v4959 = vadd.f32 %v4630, %v4958
      %4960 = vmatmul.bf16.gmra.mxu0 %v3526
      %v4961 = vpop.f32.mrf.mxu0
      %v4962 = vadd.f32 %v4633, %v4961
      %v4963 = vpop.f32.mrf.mxu0
      %v4964 = vadd.f32 %v4635, %v4963
      %4965 = vmatmul.bf16.gmra.mxu0 %v3528
      %v4966 = vpop.f32.mrf.mxu0
      %v4967 = vadd.f32 %v4638, %v4966
      %v4968 = vpop.f32.mrf.mxu0
      %v4969 = vadd.f32 %v4640, %v4968
      %4970 = vmatmul.bf16.gmra.mxu0 %v3530
      %v4971 = vpop.f32.mrf.mxu0
      %v4972 = vadd.f32 %v4643, %v4971
      %v4973 = vpop.f32.mrf.mxu0
      %v4974 = vadd.f32 %v4645, %v4973
      %4975 = vmatmul.bf16.gmra.mxu0 %v3532
      %v4976 = vpop.f32.mrf.mxu0
      %v4977 = vadd.f32 %v4648, %v4976
      %v4978 = vpop.f32.mrf.mxu0
      %v4979 = vadd.f32 %v4650, %v4978
      %4980 = vmatmul.bf16.gmra.mxu0 %v3534
      %v4981 = vpop.f32.mrf.mxu0
      %v4982 = vadd.f32 %v4653, %v4981
      %v4983 = vpop.f32.mrf.mxu0
      %v4984 = vadd.f32 %v4655, %v4983
      %4985 = vmatmul.bf16.gmra.mxu0 %v3536
      %v4986 = vpop.f32.mrf.mxu0
      %v4987 = vadd.f32 %v4658, %v4986
      %v4988 = vpop.f32.mrf.mxu0
      %v4989 = vadd.f32 %v4660, %v4988
      %4990 = vmatmul.bf16.gmra.mxu0 %v3538
      %v4991 = vpop.f32.mrf.mxu0
      %v4992 = vadd.f32 %v4663, %v4991
      %v4993 = vpop.f32.mrf.mxu0
      %v4994 = vadd.f32 %v4665, %v4993
      %4995 = vmatmul.bf16.gmra.mxu0 %v3540
      %v4996 = vpop.f32.mrf.mxu0
      %v4997 = vadd.f32 %v4668, %v4996
      %v4998 = vpop.f32.mrf.mxu0
      %v4999 = vadd.f32 %v4670, %v4998
      %5000 = vmatmul.bf16.gmra.mxu0 %v3542
      %v5001 = vpop.f32.mrf.mxu0
      %v5002 = vadd.f32 %v4673, %v5001
      %v5003 = vpop.f32.mrf.mxu0
      %v5004 = vadd.f32 %v4675, %v5003
      %5005 = vmatmul.bf16.gmra.mxu0 %v3544
      %v5006 = vpop.f32.mrf.mxu0
      %v5007 = vadd.f32 %v4678, %v5006
      %v5008 = vpop.f32.mrf.mxu0
      %v5009 = vadd.f32 %v4680, %v5008
      %5010 = vmatmul.bf16.gmra.mxu0 %v3546
      %v5011 = vpop.f32.mrf.mxu0
      %v5012 = vadd.f32 %v4683, %v5011
      %v5013 = vpop.f32.mrf.mxu0
      %v5014 = vadd.f32 %v4685, %v5013
      %5015 = vmatmul.bf16.gmra.mxu0 %v3548
      %v5016 = vpop.f32.mrf.mxu0
      %v5017 = vadd.f32 %v4688, %v5016
      %v5018 = vpop.f32.mrf.mxu0
      %v5019 = vadd.f32 %v4690, %v5018
      %5020 = vmatmul.bf16.gmra.mxu0 %v3550
      %v5021 = vpop.f32.mrf.mxu0
      %v5022 = vadd.f32 %v4693, %v5021
      %v5023 = vpop.f32.mrf.mxu0
      %v5024 = vadd.f32 %v4695, %v5023
      %5025 = vmatmul.bf16.gmra.mxu0 %v3552
      %v5026 = vpop.f32.mrf.mxu0
      %v5027 = vadd.f32 %v4698, %v5026
      %v5028 = vpop.f32.mrf.mxu0
      %v5029 = vadd.f32 %v4700, %v5028
      %5030 = vmatmul.bf16.gmra.mxu0 %v3554
      %v5031 = vpop.f32.mrf.mxu0
      %v5032 = vadd.f32 %v4703, %v5031
      %v5033 = vpop.f32.mrf.mxu0
      %v5034 = vadd.f32 %v4705, %v5033
      %5035 = vmatmul.bf16.gmra.mxu0 %v3556
      %v5036 = vpop.f32.mrf.mxu0
      %v5037 = vadd.f32 %v4708, %v5036
      %v5038 = vpop.f32.mrf.mxu0
      %v5039 = vadd.f32 %v4710, %v5038
      %5040 = vmatmul.bf16.gmra.mxu0 %v3558
      %v5041 = vpop.f32.mrf.mxu0
      %v5042 = vadd.f32 %v4713, %v5041
      %v5043 = vpop.f32.mrf.mxu0
      %v5044 = vadd.f32 %v4715, %v5043
      %5045 = vmatmul.bf16.gmra.mxu0 %v3560
      %v5046 = vpop.f32.mrf.mxu0
      %v5047 = vadd.f32 %v4718, %v5046
      %v5048 = vpop.f32.mrf.mxu0
      %v5049 = vadd.f32 %v4720, %v5048
      %5050 = vmatmul.bf16.gmra.mxu0 %v3562
      %v5051 = vpop.f32.mrf.mxu0
      %v5052 = vadd.f32 %v4723, %v5051
      %v5053 = vpop.f32.mrf.mxu0
      %v5054 = vadd.f32 %v4725, %v5053
      %5055 = vmatmul.bf16.gmra.mxu0 %v3564
      %v5056 = vpop.f32.mrf.mxu0
      %v5057 = vadd.f32 %v4728, %v5056
      %v5058 = vpop.f32.mrf.mxu0
      %v5059 = vadd.f32 %v4730, %v5058
      %5060 = vmatmul.bf16.gmra.mxu0 %v3566
      %v5061 = vpop.f32.mrf.mxu0
      %v5062 = vadd.f32 %v4733, %v5061
      %v5063 = vpop.f32.mrf.mxu0
      %v5064 = vadd.f32 %v4735, %v5063
      %5065 = vmatmul.bf16.gmra.mxu0 %v3568
      %v5066 = vpop.f32.mrf.mxu0
      %v5067 = vadd.f32 %v4738, %v5066
      %v5068 = vpop.f32.mrf.mxu0
      %v5069 = vadd.f32 %v4740, %v5068
      %5070 = vmatmul.bf16.gmra.mxu0 %v3570
      %v5071 = vpop.f32.mrf.mxu0
      %v5072 = vadd.f32 %v4743, %v5071
      %v5073 = vpop.f32.mrf.mxu0
      %v5074 = vadd.f32 %v4745, %v5073
      %5075 = vmatmul.bf16.gmra.mxu0 %v3572
      %v5076 = vpop.f32.mrf.mxu0
      %v5077 = vadd.f32 %v4748, %v5076
      %v5078 = vpop.f32.mrf.mxu0
      %v5079 = vadd.f32 %v4750, %v5078
      %5080 = vdwg.mxu0
      %v5081 = vmax.f32 %v4104, 0.0
      %v5082 = vmax.f32 %v4762, 0.0
      %v5083 = vmax.f32 %v4106, 0.0
      %v5084 = vmax.f32 %v4764, 0.0
      %v5085 = vmax.f32 %v4109, 0.0
      %v5086 = vmax.f32 %v4767, 0.0
      %v5087 = vmax.f32 %v4111, 0.0
      %v5088 = vmax.f32 %v4769, 0.0
      %v5089 = vmax.f32 %v4114, 0.0
      %v5090 = vmax.f32 %v4772, 0.0
      %v5091 = vmax.f32 %v4116, 0.0
      %v5092 = vmax.f32 %v4774, 0.0
      %v5093 = vmax.f32 %v4119, 0.0
      %v5094 = vmax.f32 %v4777, 0.0
      %v5095 = vmax.f32 %v4121, 0.0
      %v5096 = vmax.f32 %v4779, 0.0
      %v5097 = vmax.f32 %v4124, 0.0
      %v5098 = vmax.f32 %v4782, 0.0
      %v5099 = vmax.f32 %v4126, 0.0
      %v5100 = vmax.f32 %v4784, 0.0
      %v5101 = vmax.f32 %v4129, 0.0
      %v5102 = vmax.f32 %v4787, 0.0
      %v5103 = vmax.f32 %v4131, 0.0
      %v5104 = vmax.f32 %v4789, 0.0
      %v5105 = vmax.f32 %v4134, 0.0
      %v5106 = vmax.f32 %v4792, 0.0
      %v5107 = vmax.f32 %v4136, 0.0
      %v5108 = vmax.f32 %v4794, 0.0
      %v5109 = vmax.f32 %v4139, 0.0
      %v5110 = vmax.f32 %v4797, 0.0
      %v5111 = vmax.f32 %v4141, 0.0
      %v5112 = vmax.f32 %v4799, 0.0
      %v5113 = vmax.f32 %v4144, 0.0
      %v5114 = vmax.f32 %v4802, 0.0
      %v5115 = vmax.f32 %v4146, 0.0
      %v5116 = vmax.f32 %v4804, 0.0
      %v5117 = vmax.f32 %v4149, 0.0
      %v5118 = vmax.f32 %v4807, 0.0
      %v5119 = vmax.f32 %v4151, 0.0
      %v5120 = vmax.f32 %v4809, 0.0
      %v5121 = vmax.f32 %v4154, 0.0
      %v5122 = vmax.f32 %v4812, 0.0
      %v5123 = vmax.f32 %v4156, 0.0
      %v5124 = vmax.f32 %v4814, 0.0
      %v5125 = vmax.f32 %v4159, 0.0
      %v5126 = vmax.f32 %v4817, 0.0
      %v5127 = vmax.f32 %v4161, 0.0
      %v5128 = vmax.f32 %v4819, 0.0
      %v5129 = vmax.f32 %v4164, 0.0
      %v5130 = vmax.f32 %v4822, 0.0
      %v5131 = vmax.f32 %v4166, 0.0
      %v5132 = vmax.f32 %v4824, 0.0
      %v5133 = vmax.f32 %v4169, 0.0
      %v5134 = vmax.f32 %v4827, 0.0
      %v5135 = vmax.f32 %v4171, 0.0
      %v5136 = vmax.f32 %v4829, 0.0
      %v5137 = vmax.f32 %v4174, 0.0
      %v5138 = vmax.f32 %v4832, 0.0
      %v5139 = vmax.f32 %v4176, 0.0
      %v5140 = vmax.f32 %v4834, 0.0
      %v5141 = vmax.f32 %v4179, 0.0
      %v5142 = vmax.f32 %v4837, 0.0
      %v5143 = vmax.f32 %v4181, 0.0
      %v5144 = vmax.f32 %v4839, 0.0
      %v5145 = vmax.f32 %v4184, 0.0
      %v5146 = vmax.f32 %v4842, 0.0
      %v5147 = vmax.f32 %v4186, 0.0
      %v5148 = vmax.f32 %v4844, 0.0
      %v5149 = vmax.f32 %v4189, 0.0
      %v5150 = vmax.f32 %v4847, 0.0
      %v5151 = vmax.f32 %v4191, 0.0
      %v5152 = vmax.f32 %v4849, 0.0
      %v5153 = vmax.f32 %v4194, 0.0
      %v5154 = vmax.f32 %v4852, 0.0
      %v5155 = vmax.f32 %v4196, 0.0
      %v5156 = vmax.f32 %v4854, 0.0
      %v5157 = vmax.f32 %v4199, 0.0
      %v5158 = vmax.f32 %v4857, 0.0
      %v5159 = vmax.f32 %v4201, 0.0
      %v5160 = vmax.f32 %v4859, 0.0
      %v5161 = vmax.f32 %v4204, 0.0
      %v5162 = vmax.f32 %v4862, 0.0
      %v5163 = vmax.f32 %v4206, 0.0
      %v5164 = vmax.f32 %v4864, 0.0
      %v5165 = vmax.f32 %v4209, 0.0
      %v5166 = vmax.f32 %v4867, 0.0
      %v5167 = vmax.f32 %v4211, 0.0
      %v5168 = vmax.f32 %v4869, 0.0
      %v5169 = vmax.f32 %v4214, 0.0
      %v5170 = vmax.f32 %v4872, 0.0
      %v5171 = vmax.f32 %v4216, 0.0
      %v5172 = vmax.f32 %v4874, 0.0
      %v5173 = vmax.f32 %v4219, 0.0
      %v5174 = vmax.f32 %v4877, 0.0
      %v5175 = vmax.f32 %v4221, 0.0
      %v5176 = vmax.f32 %v4879, 0.0
      %v5177 = vmax.f32 %v4224, 0.0
      %v5178 = vmax.f32 %v4882, 0.0
      %v5179 = vmax.f32 %v4226, 0.0
      %v5180 = vmax.f32 %v4884, 0.0
      %v5181 = vmax.f32 %v4229, 0.0
      %v5182 = vmax.f32 %v4887, 0.0
      %v5183 = vmax.f32 %v4231, 0.0
      %v5184 = vmax.f32 %v4889, 0.0
      %v5185 = vmax.f32 %v4234, 0.0
      %v5186 = vmax.f32 %v4892, 0.0
      %v5187 = vmax.f32 %v4236, 0.0
      %v5188 = vmax.f32 %v4894, 0.0
      %v5189 = vmax.f32 %v4239, 0.0
      %v5190 = vmax.f32 %v4897, 0.0
      %v5191 = vmax.f32 %v4241, 0.0
      %v5192 = vmax.f32 %v4899, 0.0
      %v5193 = vmax.f32 %v4244, 0.0
      %v5194 = vmax.f32 %v4902, 0.0
      %v5195 = vmax.f32 %v4246, 0.0
      %v5196 = vmax.f32 %v4904, 0.0
      %v5197 = vmax.f32 %v4249, 0.0
      %v5198 = vmax.f32 %v4907, 0.0
      %v5199 = vmax.f32 %v4251, 0.0
      %v5200 = vmax.f32 %v4909, 0.0
      %v5201 = vmax.f32 %v4254, 0.0
      %v5202 = vmax.f32 %v4912, 0.0
      %v5203 = vmax.f32 %v4256, 0.0
      %v5204 = vmax.f32 %v4914, 0.0
      %v5205 = vmax.f32 %v4259, 0.0
      %v5206 = vmax.f32 %v4917, 0.0
      %v5207 = vmax.f32 %v4261, 0.0
      %v5208 = vmax.f32 %v4919, 0.0
      %v5209 = vmax.f32 %v4264, 0.0
      %v5210 = vmax.f32 %v4922, 0.0
      %v5211 = vmax.f32 %v4266, 0.0
      %v5212 = vmax.f32 %v4924, 0.0
      %v5213 = vmax.f32 %v4269, 0.0
      %v5214 = vmax.f32 %v4927, 0.0
      %v5215 = vmax.f32 %v4271, 0.0
      %v5216 = vmax.f32 %v4929, 0.0
      %v5217 = vmax.f32 %v4274, 0.0
      %v5218 = vmax.f32 %v4932, 0.0
      %v5219 = vmax.f32 %v4276, 0.0
      %v5220 = vmax.f32 %v4934, 0.0
      %v5221 = vmax.f32 %v4279, 0.0
      %v5222 = vmax.f32 %v4937, 0.0
      %v5223 = vmax.f32 %v4281, 0.0
      %v5224 = vmax.f32 %v4939, 0.0
      %v5225 = vmax.f32 %v4284, 0.0
      %v5226 = vmax.f32 %v4942, 0.0
      %v5227 = vmax.f32 %v4286, 0.0
      %v5228 = vmax.f32 %v4944, 0.0
      %v5229 = vmax.f32 %v4289, 0.0
      %v5230 = vmax.f32 %v4947, 0.0
      %v5231 = vmax.f32 %v4291, 0.0
      %v5232 = vmax.f32 %v4949, 0.0
      %v5233 = vmax.f32 %v4294, 0.0
      %v5234 = vmax.f32 %v4952, 0.0
      %v5235 = vmax.f32 %v4296, 0.0
      %v5236 = vmax.f32 %v4954, 0.0
      %v5237 = vmax.f32 %v4299, 0.0
      %v5238 = vmax.f32 %v4957, 0.0
      %v5239 = vmax.f32 %v4301, 0.0
      %v5240 = vmax.f32 %v4959, 0.0
      %v5241 = vmax.f32 %v4304, 0.0
      %v5242 = vmax.f32 %v4962, 0.0
      %v5243 = vmax.f32 %v4306, 0.0
      %v5244 = vmax.f32 %v4964, 0.0
      %v5245 = vmax.f32 %v4309, 0.0
      %v5246 = vmax.f32 %v4967, 0.0
      %v5247 = vmax.f32 %v4311, 0.0
      %v5248 = vmax.f32 %v4969, 0.0
      %v5249 = vmax.f32 %v4314, 0.0
      %v5250 = vmax.f32 %v4972, 0.0
      %v5251 = vmax.f32 %v4316, 0.0
      %v5252 = vmax.f32 %v4974, 0.0
      %v5253 = vmax.f32 %v4319, 0.0
      %v5254 = vmax.f32 %v4977, 0.0
      %v5255 = vmax.f32 %v4321, 0.0
      %v5256 = vmax.f32 %v4979, 0.0
      %v5257 = vmax.f32 %v4324, 0.0
      %v5258 = vmax.f32 %v4982, 0.0
      %v5259 = vmax.f32 %v4326, 0.0
      %v5260 = vmax.f32 %v4984, 0.0
      %v5261 = vmax.f32 %v4329, 0.0
      %v5262 = vmax.f32 %v4987, 0.0
      %v5263 = vmax.f32 %v4331, 0.0
      %v5264 = vmax.f32 %v4989, 0.0
      %v5265 = vmax.f32 %v4334, 0.0
      %v5266 = vmax.f32 %v4992, 0.0
      %v5267 = vmax.f32 %v4336, 0.0
      %v5268 = vmax.f32 %v4994, 0.0
      %v5269 = vmax.f32 %v4339, 0.0
      %v5270 = vmax.f32 %v4997, 0.0
      %v5271 = vmax.f32 %v4341, 0.0
      %v5272 = vmax.f32 %v4999, 0.0
      %v5273 = vmax.f32 %v4344, 0.0
      %v5274 = vmax.f32 %v5002, 0.0
      %v5275 = vmax.f32 %v4346, 0.0
      %v5276 = vmax.f32 %v5004, 0.0
      %v5277 = vmax.f32 %v4349, 0.0
      %v5278 = vmax.f32 %v5007, 0.0
      %v5279 = vmax.f32 %v4351, 0.0
      %v5280 = vmax.f32 %v5009, 0.0
      %v5281 = vmax.f32 %v4354, 0.0
      %v5282 = vmax.f32 %v5012, 0.0
      %v5283 = vmax.f32 %v4356, 0.0
      %v5284 = vmax.f32 %v5014, 0.0
      %v5285 = vmax.f32 %v4359, 0.0
      %v5286 = vmax.f32 %v5017, 0.0
      %v5287 = vmax.f32 %v4361, 0.0
      %v5288 = vmax.f32 %v5019, 0.0
      %v5289 = vmax.f32 %v4364, 0.0
      %v5290 = vmax.f32 %v5022, 0.0
      %v5291 = vmax.f32 %v4366, 0.0
      %v5292 = vmax.f32 %v5024, 0.0
      %v5293 = vmax.f32 %v4369, 0.0
      %v5294 = vmax.f32 %v5027, 0.0
      %v5295 = vmax.f32 %v4371, 0.0
      %v5296 = vmax.f32 %v5029, 0.0
      %v5297 = vmax.f32 %v4374, 0.0
      %v5298 = vmax.f32 %v5032, 0.0
      %v5299 = vmax.f32 %v4376, 0.0
      %v5300 = vmax.f32 %v5034, 0.0
      %v5301 = vmax.f32 %v4379, 0.0
      %v5302 = vmax.f32 %v5037, 0.0
      %v5303 = vmax.f32 %v4381, 0.0
      %v5304 = vmax.f32 %v5039, 0.0
      %v5305 = vmax.f32 %v4384, 0.0
      %v5306 = vmax.f32 %v5042, 0.0
      %v5307 = vmax.f32 %v4386, 0.0
      %v5308 = vmax.f32 %v5044, 0.0
      %v5309 = vmax.f32 %v4389, 0.0
      %v5310 = vmax.f32 %v5047, 0.0
      %v5311 = vmax.f32 %v4391, 0.0
      %v5312 = vmax.f32 %v5049, 0.0
      %v5313 = vmax.f32 %v4394, 0.0
      %v5314 = vmax.f32 %v5052, 0.0
      %v5315 = vmax.f32 %v4396, 0.0
      %v5316 = vmax.f32 %v5054, 0.0
      %v5317 = vmax.f32 %v4399, 0.0
      %v5318 = vmax.f32 %v5057, 0.0
      %v5319 = vmax.f32 %v4401, 0.0
      %v5320 = vmax.f32 %v5059, 0.0
      %v5321 = vmax.f32 %v4404, 0.0
      %v5322 = vmax.f32 %v5062, 0.0
      %v5323 = vmax.f32 %v4406, 0.0
      %v5324 = vmax.f32 %v5064, 0.0
      %v5325 = vmax.f32 %v4409, 0.0
      %v5326 = vmax.f32 %v5067, 0.0
      %v5327 = vmax.f32 %v4411, 0.0
      %v5328 = vmax.f32 %v5069, 0.0
      %v5329 = vmax.f32 %v4414, 0.0
      %v5330 = vmax.f32 %v5072, 0.0
      %v5331 = vmax.f32 %v4416, 0.0
      %v5332 = vmax.f32 %v5074, 0.0
      %v5333 = vmax.f32 %v4419, 0.0
      %v5334 = vmax.f32 %v5077, 0.0
      %v5335 = vmax.f32 %v4421, 0.0
      %v5336 = vmax.f32 %v5079, 0.0
      %v5337 = vpack.c.bf16 %v5083, %v5081
      %v5338 = vpack.c.bf16 %v5084, %v5082
      %v5339 = vpack.c.bf16 %v5087, %v5085
      %v5340 = vpack.c.bf16 %v5088, %v5086
      %v5341 = vpack.c.bf16 %v5091, %v5089
      %v5342 = vpack.c.bf16 %v5092, %v5090
      %v5343 = vpack.c.bf16 %v5095, %v5093
      %v5344 = vpack.c.bf16 %v5096, %v5094
      %v5345 = vpack.c.bf16 %v5099, %v5097
      %v5346 = vpack.c.bf16 %v5100, %v5098
      %v5347 = vpack.c.bf16 %v5103, %v5101
      %v5348 = vpack.c.bf16 %v5104, %v5102
      %v5349 = vpack.c.bf16 %v5107, %v5105
      %v5350 = vpack.c.bf16 %v5108, %v5106
      %v5351 = vpack.c.bf16 %v5111, %v5109
      %v5352 = vpack.c.bf16 %v5112, %v5110
      %v5353 = vpack.c.bf16 %v5115, %v5113
      %v5354 = vpack.c.bf16 %v5116, %v5114
      %v5355 = vpack.c.bf16 %v5119, %v5117
      %v5356 = vpack.c.bf16 %v5120, %v5118
      %v5357 = vpack.c.bf16 %v5123, %v5121
      %v5358 = vpack.c.bf16 %v5124, %v5122
      %v5359 = vpack.c.bf16 %v5127, %v5125
      %v5360 = vpack.c.bf16 %v5128, %v5126
      %v5361 = vpack.c.bf16 %v5131, %v5129
      %v5362 = vpack.c.bf16 %v5132, %v5130
      %v5363 = vpack.c.bf16 %v5135, %v5133
      %v5364 = vpack.c.bf16 %v5136, %v5134
      %v5365 = vpack.c.bf16 %v5139, %v5137
      %v5366 = vpack.c.bf16 %v5140, %v5138
      %v5367 = vpack.c.bf16 %v5143, %v5141
      %v5368 = vpack.c.bf16 %v5144, %v5142
      %v5369 = vpack.c.bf16 %v5147, %v5145
      %v5370 = vpack.c.bf16 %v5148, %v5146
      %v5371 = vpack.c.bf16 %v5151, %v5149
      %v5372 = vpack.c.bf16 %v5152, %v5150
      %v5373 = vpack.c.bf16 %v5155, %v5153
      %v5374 = vpack.c.bf16 %v5156, %v5154
      %v5375 = vpack.c.bf16 %v5159, %v5157
      %v5376 = vpack.c.bf16 %v5160, %v5158
      %v5377 = vpack.c.bf16 %v5163, %v5161
      %v5378 = vpack.c.bf16 %v5164, %v5162
      %v5379 = vpack.c.bf16 %v5167, %v5165
      %v5380 = vpack.c.bf16 %v5168, %v5166
      %v5381 = vpack.c.bf16 %v5171, %v5169
      %v5382 = vpack.c.bf16 %v5172, %v5170
      %v5383 = vpack.c.bf16 %v5175, %v5173
      %v5384 = vpack.c.bf16 %v5176, %v5174
      %v5385 = vpack.c.bf16 %v5179, %v5177
      %v5386 = vpack.c.bf16 %v5180, %v5178
      %v5387 = vpack.c.bf16 %v5183, %v5181
      %v5388 = vpack.c.bf16 %v5184, %v5182
      %v5389 = vpack.c.bf16 %v5187, %v5185
      %v5390 = vpack.c.bf16 %v5188, %v5186
      %v5391 = vpack.c.bf16 %v5191, %v5189
      %v5392 = vpack.c.bf16 %v5192, %v5190
      %v5393 = vpack.c.bf16 %v5195, %v5193
      %v5394 = vpack.c.bf16 %v5196, %v5194
      %v5395 = vpack.c.bf16 %v5199, %v5197
      %v5396 = vpack.c.bf16 %v5200, %v5198
      %v5397 = vpack.c.bf16 %v5203, %v5201
      %v5398 = vpack.c.bf16 %v5204, %v5202
      %v5399 = vpack.c.bf16 %v5207, %v5205
      %v5400 = vpack.c.bf16 %v5208, %v5206
      %v5401 = vpack.c.bf16 %v5211, %v5209
      %v5402 = vpack.c.bf16 %v5212, %v5210
      %v5403 = vpack.c.bf16 %v5215, %v5213
      %v5404 = vpack.c.bf16 %v5216, %v5214
      %v5405 = vpack.c.bf16 %v5219, %v5217
      %v5406 = vpack.c.bf16 %v5220, %v5218
      %v5407 = vpack.c.bf16 %v5223, %v5221
      %v5408 = vpack.c.bf16 %v5224, %v5222
      %v5409 = vpack.c.bf16 %v5227, %v5225
      %v5410 = vpack.c.bf16 %v5228, %v5226
      %v5411 = vpack.c.bf16 %v5231, %v5229
      %v5412 = vpack.c.bf16 %v5232, %v5230
      %v5413 = vpack.c.bf16 %v5235, %v5233
      %v5414 = vpack.c.bf16 %v5236, %v5234
      %v5415 = vpack.c.bf16 %v5239, %v5237
      %v5416 = vpack.c.bf16 %v5240, %v5238
      %v5417 = vpack.c.bf16 %v5243, %v5241
      %v5418 = vpack.c.bf16 %v5244, %v5242
      %v5419 = vpack.c.bf16 %v5247, %v5245
      %v5420 = vpack.c.bf16 %v5248, %v5246
      %v5421 = vpack.c.bf16 %v5251, %v5249
      %v5422 = vpack.c.bf16 %v5252, %v5250
      %v5423 = vpack.c.bf16 %v5255, %v5253
      %v5424 = vpack.c.bf16 %v5256, %v5254
      %v5425 = vpack.c.bf16 %v5259, %v5257
      %v5426 = vpack.c.bf16 %v5260, %v5258
      %v5427 = vpack.c.bf16 %v5263, %v5261
      %v5428 = vpack.c.bf16 %v5264, %v5262
      %v5429 = vpack.c.bf16 %v5267, %v5265
      %v5430 = vpack.c.bf16 %v5268, %v5266
      %v5431 = vpack.c.bf16 %v5271, %v5269
      %v5432 = vpack.c.bf16 %v5272, %v5270
      %v5433 = vpack.c.bf16 %v5275, %v5273
      %v5434 = vpack.c.bf16 %v5276, %v5274
      %v5435 = vpack.c.bf16 %v5279, %v5277
      %v5436 = vpack.c.bf16 %v5280, %v5278
      %v5437 = vpack.c.bf16 %v5283, %v5281
      %v5438 = vpack.c.bf16 %v5284, %v5282
      %v5439 = vpack.c.bf16 %v5287, %v5285
      %v5440 = vpack.c.bf16 %v5288, %v5286
      %v5441 = vpack.c.bf16 %v5291, %v5289
      %v5442 = vpack.c.bf16 %v5292, %v5290
      %v5443 = vpack.c.bf16 %v5295, %v5293
      %v5444 = vpack.c.bf16 %v5296, %v5294
      %v5445 = vpack.c.bf16 %v5299, %v5297
      %v5446 = vpack.c.bf16 %v5300, %v5298
      %v5447 = vpack.c.bf16 %v5303, %v5301
      %v5448 = vpack.c.bf16 %v5304, %v5302
      %v5449 = vpack.c.bf16 %v5307, %v5305
      %v5450 = vpack.c.bf16 %v5308, %v5306
      %v5451 = vpack.c.bf16 %v5311, %v5309
      %v5452 = vpack.c.bf16 %v5312, %v5310
      %v5453 = vpack.c.bf16 %v5315, %v5313
      %v5454 = vpack.c.bf16 %v5316, %v5314
      %v5455 = vpack.c.bf16 %v5319, %v5317
      %v5456 = vpack.c.bf16 %v5320, %v5318
      %v5457 = vpack.c.bf16 %v5323, %v5321
      %v5458 = vpack.c.bf16 %v5324, %v5322
      %v5459 = vpack.c.bf16 %v5327, %v5325
      %v5460 = vpack.c.bf16 %v5328, %v5326
      %v5461 = vpack.c.bf16 %v5331, %v5329
      %v5462 = vpack.c.bf16 %v5332, %v5330
      %v5463 = vpack.c.bf16 %v5335, %v5333
      %v5464 = vpack.c.bf16 %v5336, %v5334
      %v5465 = vld [vmem:[%s4] sm:$0xf]
      %v5466 = vld [vmem:[%s4 + $0x4] sm:$0xf]
      %v5467 = vld [vmem:[%s4 + $0x8] sm:$0xf]
      %v5468 = vld [vmem:[%s4 + $0xc] sm:$0xf]
      %v5469 = vld [vmem:[%s4 + $0x10] sm:$0xf]
      %v5470 = vld [vmem:[%s4 + $0x14] sm:$0xf]
      %v5471 = vld [vmem:[%s4 + $0x18] sm:$0xf]
      %v5472 = vld [vmem:[%s4 + $0x1c] sm:$0xf]
      %v5473 = vld [vmem:[%s4 + $0x20] sm:$0xf]
      %v5474 = vld [vmem:[%s4 + $0x24] sm:$0xf]
      %v5475 = vld [vmem:[%s4 + $0x28] sm:$0xf]
      %v5476 = vld [vmem:[%s4 + $0x2c] sm:$0xf]
      %v5477 = vld [vmem:[%s4 + $0x30] sm:$0xf]
      %v5478 = vld [vmem:[%s4 + $0x34] sm:$0xf]
      %v5479 = vld [vmem:[%s4 + $0x38] sm:$0xf]
      %v5480 = vld [vmem:[%s4 + $0x3c] sm:$0xf]
      %v5481 = vld [vmem:[%s4 + $0x40] sm:$0xf]
      %v5482 = vld [vmem:[%s4 + $0x44] sm:$0xf]
      %v5483 = vld [vmem:[%s4 + $0x48] sm:$0xf]
      %v5484 = vld [vmem:[%s4 + $0x4c] sm:$0xf]
      %v5485 = vld [vmem:[%s4 + $0x50] sm:$0xf]
      %v5486 = vld [vmem:[%s4 + $0x54] sm:$0xf]
      %v5487 = vld [vmem:[%s4 + $0x58] sm:$0xf]
      %v5488 = vld [vmem:[%s4 + $0x5c] sm:$0xf]
      %v5489 = vld [vmem:[%s4 + $0x60] sm:$0xf]
      %v5490 = vld [vmem:[%s4 + $0x64] sm:$0xf]
      %v5491 = vld [vmem:[%s4 + $0x68] sm:$0xf]
      %v5492 = vld [vmem:[%s4 + $0x6c] sm:$0xf]
      %v5493 = vld [vmem:[%s4 + $0x70] sm:$0xf]
      %v5494 = vld [vmem:[%s4 + $0x74] sm:$0xf]
      %v5495 = vld [vmem:[%s4 + $0x78] sm:$0xf]
      %v5496 = vld [vmem:[%s4 + $0x7c] sm:$0xf]
      %v5529 = vunpack.c.l.b16 %v5465
      %v5530 = vunpack.c.l.b16 %v5466
      %v5531 = vunpack.c.l.b16 %v5467
      %v5532 = vunpack.c.l.b16 %v5468
      %v5533 = vunpack.c.l.b16 %v5469
      %v5534 = vunpack.c.l.b16 %v5470
      %v5535 = vunpack.c.l.b16 %v5471
      %v5536 = vunpack.c.l.b16 %v5472
      %v5537 = vunpack.c.l.b16 %v5473
      %v5538 = vunpack.c.l.b16 %v5474
      %v5539 = vunpack.c.l.b16 %v5475
      %v5540 = vunpack.c.l.b16 %v5476
      %v5541 = vunpack.c.l.b16 %v5477
      %v5542 = vunpack.c.l.b16 %v5478
      %v5543 = vunpack.c.l.b16 %v5479
      %v5544 = vunpack.c.l.b16 %v5480
      %v5545 = vunpack.c.l.b16 %v5481
      %v5546 = vunpack.c.l.b16 %v5482
      %v5547 = vunpack.c.l.b16 %v5483
      %v5548 = vunpack.c.l.b16 %v5484
      %v5549 = vunpack.c.l.b16 %v5485
      %v5550 = vunpack.c.l.b16 %v5486
      %v5551 = vunpack.c.l.b16 %v5487
      %v5552 = vunpack.c.l.b16 %v5488
      %v5553 = vunpack.c.l.b16 %v5489
      %v5554 = vunpack.c.l.b16 %v5490
      %v5555 = vunpack.c.l.b16 %v5491
      %v5556 = vunpack.c.l.b16 %v5492
      %v5557 = vunpack.c.l.b16 %v5493
      %v5558 = vunpack.c.l.b16 %v5494
      %v5559 = vunpack.c.l.b16 %v5495
      %v5560 = vunpack.c.l.b16 %v5496
      %v5561 = vpack.c.b16 %v5530, %v5529
      %v5562 = vpack.c.b16 %v5532, %v5531
      %v5563 = vpack.c.b16 %v5534, %v5533
      %v5564 = vpack.c.b16 %v5536, %v5535
      %v5565 = vpack.c.b16 %v5538, %v5537
      %v5566 = vpack.c.b16 %v5540, %v5539
      %v5567 = vpack.c.b16 %v5542, %v5541
      %v5568 = vpack.c.b16 %v5544, %v5543
      %v5569 = vpack.c.b16 %v5546, %v5545
      %v5570 = vpack.c.b16 %v5548, %v5547
      %v5571 = vpack.c.b16 %v5550, %v5549
      %v5572 = vpack.c.b16 %v5552, %v5551
      %v5573 = vpack.c.b16 %v5554, %v5553
      %v5574 = vpack.c.b16 %v5556, %v5555
      %v5575 = vpack.c.b16 %v5558, %v5557
      %v5576 = vpack.c.b16 %v5560, %v5559
      %5593 = vmatpush.bf16.msra.mxu0 %v5568
      %5594 = vmatpush.bf16.msra.mxu0 %v5567
      %5595 = vmatpush.bf16.msra.mxu0 %v5566
      %5596 = vmatpush.bf16.msra.mxu0 %v5565
      %5597 = vmatpush.bf16.msra.mxu0 %v5564
      %5598 = vmatpush.bf16.msra.mxu0 %v5563
      %5599 = vmatpush.bf16.msra.mxu0 %v5562
      %5600 = vmatpush.bf16.msra.mxu0 %v5561
      %5601 = vmatmul.bf16.gmra.mxu0 %v5337
      %v5602 = vpop.f32.mrf.mxu0
      %v5603 = vadd.f32 0.0, %v5602
      %v5604 = vpop.f32.mrf.mxu0
      %v5605 = vadd.f32 0.0, %v5604
      %5606 = vmatmul.bf16.gmra.mxu0 %v5339
      %v5607 = vpop.f32.mrf.mxu0
      %v5608 = vadd.f32 0.0, %v5607
      %v5609 = vpop.f32.mrf.mxu0
      %v5610 = vadd.f32 0.0, %v5609
      %5611 = vmatmul.bf16.gmra.mxu0 %v5341
      %v5612 = vpop.f32.mrf.mxu0
      %v5613 = vadd.f32 0.0, %v5612
      %v5614 = vpop.f32.mrf.mxu0
      %v5615 = vadd.f32 0.0, %v5614
      %5616 = vmatmul.bf16.gmra.mxu0 %v5343
      %v5617 = vpop.f32.mrf.mxu0
      %v5618 = vadd.f32 0.0, %v5617
      %v5619 = vpop.f32.mrf.mxu0
      %v5620 = vadd.f32 0.0, %v5619
      %5621 = vmatmul.bf16.gmra.mxu0 %v5345
      %v5622 = vpop.f32.mrf.mxu0
      %v5623 = vadd.f32 0.0, %v5622
      %v5624 = vpop.f32.mrf.mxu0
      %v5625 = vadd.f32 0.0, %v5624
      %5626 = vmatmul.bf16.gmra.mxu0 %v5347
      %v5627 = vpop.f32.mrf.mxu0
      %v5628 = vadd.f32 0.0, %v5627
      %v5629 = vpop.f32.mrf.mxu0
      %v5630 = vadd.f32 0.0, %v5629
      %5631 = vmatmul.bf16.gmra.mxu0 %v5349
      %v5632 = vpop.f32.mrf.mxu0
      %v5633 = vadd.f32 0.0, %v5632
      %v5634 = vpop.f32.mrf.mxu0
      %v5635 = vadd.f32 0.0, %v5634
      %5636 = vmatmul.bf16.gmra.mxu0 %v5351
      %v5637 = vpop.f32.mrf.mxu0
      %v5638 = vadd.f32 0.0, %v5637
      %v5639 = vpop.f32.mrf.mxu0
      %v5640 = vadd.f32 0.0, %v5639
      %5641 = vmatmul.bf16.gmra.mxu0 %v5353
      %v5642 = vpop.f32.mrf.mxu0
      %v5643 = vadd.f32 0.0, %v5642
      %v5644 = vpop.f32.mrf.mxu0
      %v5645 = vadd.f32 0.0, %v5644
      %5646 = vmatmul.bf16.gmra.mxu0 %v5355
      %v5647 = vpop.f32.mrf.mxu0
      %v5648 = vadd.f32 0.0, %v5647
      %v5649 = vpop.f32.mrf.mxu0
      %v5650 = vadd.f32 0.0, %v5649
      %5651 = vmatmul.bf16.gmra.mxu0 %v5357
      %v5652 = vpop.f32.mrf.mxu0
      %v5653 = vadd.f32 0.0, %v5652
      %v5654 = vpop.f32.mrf.mxu0
      %v5655 = vadd.f32 0.0, %v5654
      %5656 = vmatmul.bf16.gmra.mxu0 %v5359
      %v5657 = vpop.f32.mrf.mxu0
      %v5658 = vadd.f32 0.0, %v5657
      %v5659 = vpop.f32.mrf.mxu0
      %v5660 = vadd.f32 0.0, %v5659
      %5661 = vmatmul.bf16.gmra.mxu0 %v5361
      %v5662 = vpop.f32.mrf.mxu0
      %v5663 = vadd.f32 0.0, %v5662
      %v5664 = vpop.f32.mrf.mxu0
      %v5665 = vadd.f32 0.0, %v5664
      %5666 = vmatmul.bf16.gmra.mxu0 %v5363
      %v5667 = vpop.f32.mrf.mxu0
      %v5668 = vadd.f32 0.0, %v5667
      %v5669 = vpop.f32.mrf.mxu0
      %v5670 = vadd.f32 0.0, %v5669
      %5671 = vmatmul.bf16.gmra.mxu0 %v5365
      %v5672 = vpop.f32.mrf.mxu0
      %v5673 = vadd.f32 0.0, %v5672
      %v5674 = vpop.f32.mrf.mxu0
      %v5675 = vadd.f32 0.0, %v5674
      %5676 = vmatmul.bf16.gmra.mxu0 %v5367
      %v5677 = vpop.f32.mrf.mxu0
      %v5678 = vadd.f32 0.0, %v5677
      %v5679 = vpop.f32.mrf.mxu0
      %v5680 = vadd.f32 0.0, %v5679
      %5681 = vmatmul.bf16.gmra.mxu0 %v5369
      %v5682 = vpop.f32.mrf.mxu0
      %v5683 = vadd.f32 0.0, %v5682
      %v5684 = vpop.f32.mrf.mxu0
      %v5685 = vadd.f32 0.0, %v5684
      %5686 = vmatmul.bf16.gmra.mxu0 %v5371
      %v5687 = vpop.f32.mrf.mxu0
      %v5688 = vadd.f32 0.0, %v5687
      %v5689 = vpop.f32.mrf.mxu0
      %v5690 = vadd.f32 0.0, %v5689
      %5691 = vmatmul.bf16.gmra.mxu0 %v5373
      %v5692 = vpop.f32.mrf.mxu0
      %v5693 = vadd.f32 0.0, %v5692
      %v5694 = vpop.f32.mrf.mxu0
      %v5695 = vadd.f32 0.0, %v5694
      %5696 = vmatmul.bf16.gmra.mxu0 %v5375
      %v5697 = vpop.f32.mrf.mxu0
      %v5698 = vadd.f32 0.0, %v5697
      %v5699 = vpop.f32.mrf.mxu0
      %v5700 = vadd.f32 0.0, %v5699
      %5701 = vmatmul.bf16.gmra.mxu0 %v5377
      %v5702 = vpop.f32.mrf.mxu0
      %v5703 = vadd.f32 0.0, %v5702
      %v5704 = vpop.f32.mrf.mxu0
      %v5705 = vadd.f32 0.0, %v5704
      %5706 = vmatmul.bf16.gmra.mxu0 %v5379
      %v5707 = vpop.f32.mrf.mxu0
      %v5708 = vadd.f32 0.0, %v5707
      %v5709 = vpop.f32.mrf.mxu0
      %v5710 = vadd.f32 0.0, %v5709
      %5711 = vmatmul.bf16.gmra.mxu0 %v5381
      %v5712 = vpop.f32.mrf.mxu0
      %v5713 = vadd.f32 0.0, %v5712
      %v5714 = vpop.f32.mrf.mxu0
      %v5715 = vadd.f32 0.0, %v5714
      %5716 = vmatmul.bf16.gmra.mxu0 %v5383
      %v5717 = vpop.f32.mrf.mxu0
      %v5718 = vadd.f32 0.0, %v5717
      %v5719 = vpop.f32.mrf.mxu0
      %v5720 = vadd.f32 0.0, %v5719
      %5721 = vmatmul.bf16.gmra.mxu0 %v5385
      %v5722 = vpop.f32.mrf.mxu0
      %v5723 = vadd.f32 0.0, %v5722
      %v5724 = vpop.f32.mrf.mxu0
      %v5725 = vadd.f32 0.0, %v5724
      %5726 = vmatmul.bf16.gmra.mxu0 %v5387
      %v5727 = vpop.f32.mrf.mxu0
      %v5728 = vadd.f32 0.0, %v5727
      %v5729 = vpop.f32.mrf.mxu0
      %v5730 = vadd.f32 0.0, %v5729
      %5731 = vmatmul.bf16.gmra.mxu0 %v5389
      %v5732 = vpop.f32.mrf.mxu0
      %v5733 = vadd.f32 0.0, %v5732
      %v5734 = vpop.f32.mrf.mxu0
      %v5735 = vadd.f32 0.0, %v5734
      %5736 = vmatmul.bf16.gmra.mxu0 %v5391
      %v5737 = vpop.f32.mrf.mxu0
      %v5738 = vadd.f32 0.0, %v5737
      %v5739 = vpop.f32.mrf.mxu0
      %v5740 = vadd.f32 0.0, %v5739
      %5741 = vmatmul.bf16.gmra.mxu0 %v5393
      %v5742 = vpop.f32.mrf.mxu0
      %v5743 = vadd.f32 0.0, %v5742
      %v5744 = vpop.f32.mrf.mxu0
      %v5745 = vadd.f32 0.0, %v5744
      %5746 = vmatmul.bf16.gmra.mxu0 %v5395
      %v5747 = vpop.f32.mrf.mxu0
      %v5748 = vadd.f32 0.0, %v5747
      %v5749 = vpop.f32.mrf.mxu0
      %v5750 = vadd.f32 0.0, %v5749
      %5751 = vmatmul.bf16.gmra.mxu0 %v5397
      %v5752 = vpop.f32.mrf.mxu0
      %v5753 = vadd.f32 0.0, %v5752
      %v5754 = vpop.f32.mrf.mxu0
      %v5755 = vadd.f32 0.0, %v5754
      %5756 = vmatmul.bf16.gmra.mxu0 %v5399
      %v5757 = vpop.f32.mrf.mxu0
      %v5758 = vadd.f32 0.0, %v5757
      %v5759 = vpop.f32.mrf.mxu0
      %v5760 = vadd.f32 0.0, %v5759
      %5761 = vmatmul.bf16.gmra.mxu0 %v5401
      %v5762 = vpop.f32.mrf.mxu0
      %v5763 = vadd.f32 0.0, %v5762
      %v5764 = vpop.f32.mrf.mxu0
      %v5765 = vadd.f32 0.0, %v5764
      %5766 = vmatmul.bf16.gmra.mxu0 %v5403
      %v5767 = vpop.f32.mrf.mxu0
      %v5768 = vadd.f32 0.0, %v5767
      %v5769 = vpop.f32.mrf.mxu0
      %v5770 = vadd.f32 0.0, %v5769
      %5771 = vmatmul.bf16.gmra.mxu0 %v5405
      %v5772 = vpop.f32.mrf.mxu0
      %v5773 = vadd.f32 0.0, %v5772
      %v5774 = vpop.f32.mrf.mxu0
      %v5775 = vadd.f32 0.0, %v5774
      %5776 = vmatmul.bf16.gmra.mxu0 %v5407
      %v5777 = vpop.f32.mrf.mxu0
      %v5778 = vadd.f32 0.0, %v5777
      %v5779 = vpop.f32.mrf.mxu0
      %v5780 = vadd.f32 0.0, %v5779
      %5781 = vmatmul.bf16.gmra.mxu0 %v5409
      %v5782 = vpop.f32.mrf.mxu0
      %v5783 = vadd.f32 0.0, %v5782
      %v5784 = vpop.f32.mrf.mxu0
      %v5785 = vadd.f32 0.0, %v5784
      %5786 = vmatmul.bf16.gmra.mxu0 %v5411
      %v5787 = vpop.f32.mrf.mxu0
      %v5788 = vadd.f32 0.0, %v5787
      %v5789 = vpop.f32.mrf.mxu0
      %v5790 = vadd.f32 0.0, %v5789
      %5791 = vmatmul.bf16.gmra.mxu0 %v5413
      %v5792 = vpop.f32.mrf.mxu0
      %v5793 = vadd.f32 0.0, %v5792
      %v5794 = vpop.f32.mrf.mxu0
      %v5795 = vadd.f32 0.0, %v5794
      %5796 = vmatmul.bf16.gmra.mxu0 %v5415
      %v5797 = vpop.f32.mrf.mxu0
      %v5798 = vadd.f32 0.0, %v5797
      %v5799 = vpop.f32.mrf.mxu0
      %v5800 = vadd.f32 0.0, %v5799
      %5801 = vmatmul.bf16.gmra.mxu0 %v5417
      %v5802 = vpop.f32.mrf.mxu0
      %v5803 = vadd.f32 0.0, %v5802
      %v5804 = vpop.f32.mrf.mxu0
      %v5805 = vadd.f32 0.0, %v5804
      %5806 = vmatmul.bf16.gmra.mxu0 %v5419
      %v5807 = vpop.f32.mrf.mxu0
      %v5808 = vadd.f32 0.0, %v5807
      %v5809 = vpop.f32.mrf.mxu0
      %v5810 = vadd.f32 0.0, %v5809
      %5811 = vmatmul.bf16.gmra.mxu0 %v5421
      %v5812 = vpop.f32.mrf.mxu0
      %v5813 = vadd.f32 0.0, %v5812
      %v5814 = vpop.f32.mrf.mxu0
      %v5815 = vadd.f32 0.0, %v5814
      %5816 = vmatmul.bf16.gmra.mxu0 %v5423
      %v5817 = vpop.f32.mrf.mxu0
      %v5818 = vadd.f32 0.0, %v5817
      %v5819 = vpop.f32.mrf.mxu0
      %v5820 = vadd.f32 0.0, %v5819
      %5821 = vmatmul.bf16.gmra.mxu0 %v5425
      %v5822 = vpop.f32.mrf.mxu0
      %v5823 = vadd.f32 0.0, %v5822
      %v5824 = vpop.f32.mrf.mxu0
      %v5825 = vadd.f32 0.0, %v5824
      %5826 = vmatmul.bf16.gmra.mxu0 %v5427
      %v5827 = vpop.f32.mrf.mxu0
      %v5828 = vadd.f32 0.0, %v5827
      %v5829 = vpop.f32.mrf.mxu0
      %v5830 = vadd.f32 0.0, %v5829
      %5831 = vmatmul.bf16.gmra.mxu0 %v5429
      %v5832 = vpop.f32.mrf.mxu0
      %v5833 = vadd.f32 0.0, %v5832
      %v5834 = vpop.f32.mrf.mxu0
      %v5835 = vadd.f32 0.0, %v5834
      %5836 = vmatmul.bf16.gmra.mxu0 %v5431
      %v5837 = vpop.f32.mrf.mxu0
      %v5838 = vadd.f32 0.0, %v5837
      %v5839 = vpop.f32.mrf.mxu0
      %v5840 = vadd.f32 0.0, %v5839
      %5841 = vmatmul.bf16.gmra.mxu0 %v5433
      %v5842 = vpop.f32.mrf.mxu0
      %v5843 = vadd.f32 0.0, %v5842
      %v5844 = vpop.f32.mrf.mxu0
      %v5845 = vadd.f32 0.0, %v5844
      %5846 = vmatmul.bf16.gmra.mxu0 %v5435
      %v5847 = vpop.f32.mrf.mxu0
      %v5848 = vadd.f32 0.0, %v5847
      %v5849 = vpop.f32.mrf.mxu0
      %v5850 = vadd.f32 0.0, %v5849
      %5851 = vmatmul.bf16.gmra.mxu0 %v5437
      %v5852 = vpop.f32.mrf.mxu0
      %v5853 = vadd.f32 0.0, %v5852
      %v5854 = vpop.f32.mrf.mxu0
      %v5855 = vadd.f32 0.0, %v5854
      %5856 = vmatmul.bf16.gmra.mxu0 %v5439
      %v5857 = vpop.f32.mrf.mxu0
      %v5858 = vadd.f32 0.0, %v5857
      %v5859 = vpop.f32.mrf.mxu0
      %v5860 = vadd.f32 0.0, %v5859
      %5861 = vmatmul.bf16.gmra.mxu0 %v5441
      %v5862 = vpop.f32.mrf.mxu0
      %v5863 = vadd.f32 0.0, %v5862
      %v5864 = vpop.f32.mrf.mxu0
      %v5865 = vadd.f32 0.0, %v5864
      %5866 = vmatmul.bf16.gmra.mxu0 %v5443
      %v5867 = vpop.f32.mrf.mxu0
      %v5868 = vadd.f32 0.0, %v5867
      %v5869 = vpop.f32.mrf.mxu0
      %v5870 = vadd.f32 0.0, %v5869
      %5871 = vmatmul.bf16.gmra.mxu0 %v5445
      %v5872 = vpop.f32.mrf.mxu0
      %v5873 = vadd.f32 0.0, %v5872
      %v5874 = vpop.f32.mrf.mxu0
      %v5875 = vadd.f32 0.0, %v5874
      %5876 = vmatmul.bf16.gmra.mxu0 %v5447
      %v5877 = vpop.f32.mrf.mxu0
      %v5878 = vadd.f32 0.0, %v5877
      %v5879 = vpop.f32.mrf.mxu0
      %v5880 = vadd.f32 0.0, %v5879
      %5881 = vmatmul.bf16.gmra.mxu0 %v5449
      %v5882 = vpop.f32.mrf.mxu0
      %v5883 = vadd.f32 0.0, %v5882
      %v5884 = vpop.f32.mrf.mxu0
      %v5885 = vadd.f32 0.0, %v5884
      %5886 = vmatmul.bf16.gmra.mxu0 %v5451
      %v5887 = vpop.f32.mrf.mxu0
      %v5888 = vadd.f32 0.0, %v5887
      %v5889 = vpop.f32.mrf.mxu0
      %v5890 = vadd.f32 0.0, %v5889
      %5891 = vmatmul.bf16.gmra.mxu0 %v5453
      %v5892 = vpop.f32.mrf.mxu0
      %v5893 = vadd.f32 0.0, %v5892
      %v5894 = vpop.f32.mrf.mxu0
      %v5895 = vadd.f32 0.0, %v5894
      %5896 = vmatmul.bf16.gmra.mxu0 %v5455
      %v5897 = vpop.f32.mrf.mxu0
      %v5898 = vadd.f32 0.0, %v5897
      %v5899 = vpop.f32.mrf.mxu0
      %v5900 = vadd.f32 0.0, %v5899
      %5901 = vmatmul.bf16.gmra.mxu0 %v5457
      %v5902 = vpop.f32.mrf.mxu0
      %v5903 = vadd.f32 0.0, %v5902
      %v5904 = vpop.f32.mrf.mxu0
      %v5905 = vadd.f32 0.0, %v5904
      %5906 = vmatmul.bf16.gmra.mxu0 %v5459
      %v5907 = vpop.f32.mrf.mxu0
      %v5908 = vadd.f32 0.0, %v5907
      %v5909 = vpop.f32.mrf.mxu0
      %v5910 = vadd.f32 0.0, %v5909
      %5911 = vmatmul.bf16.gmra.mxu0 %v5461
      %v5912 = vpop.f32.mrf.mxu0
      %v5913 = vadd.f32 0.0, %v5912
      %v5914 = vpop.f32.mrf.mxu0
      %v5915 = vadd.f32 0.0, %v5914
      %5916 = vmatmul.bf16.gmra.mxu0 %v5463
      %v5917 = vpop.f32.mrf.mxu0
      %v5918 = vadd.f32 0.0, %v5917
      %v5919 = vpop.f32.mrf.mxu0
      %v5920 = vadd.f32 0.0, %v5919
      %5921 = vdwg.mxu0
      %5922 = vmatpush.bf16.msra.mxu0 %v5576
      %5923 = vmatpush.bf16.msra.mxu0 %v5575
      %5924 = vmatpush.bf16.msra.mxu0 %v5574
      %5925 = vmatpush.bf16.msra.mxu0 %v5573
      %5926 = vmatpush.bf16.msra.mxu0 %v5572
      %5927 = vmatpush.bf16.msra.mxu0 %v5571
      %5928 = vmatpush.bf16.msra.mxu0 %v5570
      %5929 = vmatpush.bf16.msra.mxu0 %v5569
      %5930 = vmatmul.bf16.gmra.mxu0 %v5338
      %v5931 = vpop.f32.mrf.mxu0
      %v5932 = vadd.f32 %v5603, %v5931
      %v5933 = vpop.f32.mrf.mxu0
      %v5934 = vadd.f32 %v5605, %v5933
      %5935 = vmatmul.bf16.gmra.mxu0 %v5340
      %v5936 = vpop.f32.mrf.mxu0
      %v5937 = vadd.f32 %v5608, %v5936
      %v5938 = vpop.f32.mrf.mxu0
      %v5939 = vadd.f32 %v5610, %v5938
      %5940 = vmatmul.bf16.gmra.mxu0 %v5342
      %v5941 = vpop.f32.mrf.mxu0
      %v5942 = vadd.f32 %v5613, %v5941
      %v5943 = vpop.f32.mrf.mxu0
      %v5944 = vadd.f32 %v5615, %v5943
      %5945 = vmatmul.bf16.gmra.mxu0 %v5344
      %v5946 = vpop.f32.mrf.mxu0
      %v5947 = vadd.f32 %v5618, %v5946
      %v5948 = vpop.f32.mrf.mxu0
      %v5949 = vadd.f32 %v5620, %v5948
      %5950 = vmatmul.bf16.gmra.mxu0 %v5346
      %v5951 = vpop.f32.mrf.mxu0
      %v5952 = vadd.f32 %v5623, %v5951
      %v5953 = vpop.f32.mrf.mxu0
      %v5954 = vadd.f32 %v5625, %v5953
      %5955 = vmatmul.bf16.gmra.mxu0 %v5348
      %v5956 = vpop.f32.mrf.mxu0
      %v5957 = vadd.f32 %v5628, %v5956
      %v5958 = vpop.f32.mrf.mxu0
      %v5959 = vadd.f32 %v5630, %v5958
      %5960 = vmatmul.bf16.gmra.mxu0 %v5350
      %v5961 = vpop.f32.mrf.mxu0
      %v5962 = vadd.f32 %v5633, %v5961
      %v5963 = vpop.f32.mrf.mxu0
      %v5964 = vadd.f32 %v5635, %v5963
      %5965 = vmatmul.bf16.gmra.mxu0 %v5352
      %v5966 = vpop.f32.mrf.mxu0
      %v5967 = vadd.f32 %v5638, %v5966
      %v5968 = vpop.f32.mrf.mxu0
      %v5969 = vadd.f32 %v5640, %v5968
      %5970 = vmatmul.bf16.gmra.mxu0 %v5354
      %v5971 = vpop.f32.mrf.mxu0
      %v5972 = vadd.f32 %v5643, %v5971
      %v5973 = vpop.f32.mrf.mxu0
      %v5974 = vadd.f32 %v5645, %v5973
      %5975 = vmatmul.bf16.gmra.mxu0 %v5356
      %v5976 = vpop.f32.mrf.mxu0
      %v5977 = vadd.f32 %v5648, %v5976
      %v5978 = vpop.f32.mrf.mxu0
      %v5979 = vadd.f32 %v5650, %v5978
      %5980 = vmatmul.bf16.gmra.mxu0 %v5358
      %v5981 = vpop.f32.mrf.mxu0
      %v5982 = vadd.f32 %v5653, %v5981
      %v5983 = vpop.f32.mrf.mxu0
      %v5984 = vadd.f32 %v5655, %v5983
      %5985 = vmatmul.bf16.gmra.mxu0 %v5360
      %v5986 = vpop.f32.mrf.mxu0
      %v5987 = vadd.f32 %v5658, %v5986
      %v5988 = vpop.f32.mrf.mxu0
      %v5989 = vadd.f32 %v5660, %v5988
      %5990 = vmatmul.bf16.gmra.mxu0 %v5362
      %v5991 = vpop.f32.mrf.mxu0
      %v5992 = vadd.f32 %v5663, %v5991
      %v5993 = vpop.f32.mrf.mxu0
      %v5994 = vadd.f32 %v5665, %v5993
      %5995 = vmatmul.bf16.gmra.mxu0 %v5364
      %v5996 = vpop.f32.mrf.mxu0
      %v5997 = vadd.f32 %v5668, %v5996
      %v5998 = vpop.f32.mrf.mxu0
      %v5999 = vadd.f32 %v5670, %v5998
      %6000 = vmatmul.bf16.gmra.mxu0 %v5366
      %v6001 = vpop.f32.mrf.mxu0
      %v6002 = vadd.f32 %v5673, %v6001
      %v6003 = vpop.f32.mrf.mxu0
      %v6004 = vadd.f32 %v5675, %v6003
      %6005 = vmatmul.bf16.gmra.mxu0 %v5368
      %v6006 = vpop.f32.mrf.mxu0
      %v6007 = vadd.f32 %v5678, %v6006
      %v6008 = vpop.f32.mrf.mxu0
      %v6009 = vadd.f32 %v5680, %v6008
      %6010 = vmatmul.bf16.gmra.mxu0 %v5370
      %v6011 = vpop.f32.mrf.mxu0
      %v6012 = vadd.f32 %v5683, %v6011
      %v6013 = vpop.f32.mrf.mxu0
      %v6014 = vadd.f32 %v5685, %v6013
      %6015 = vmatmul.bf16.gmra.mxu0 %v5372
      %v6016 = vpop.f32.mrf.mxu0
      %v6017 = vadd.f32 %v5688, %v6016
      %v6018 = vpop.f32.mrf.mxu0
      %v6019 = vadd.f32 %v5690, %v6018
      %6020 = vmatmul.bf16.gmra.mxu0 %v5374
      %v6021 = vpop.f32.mrf.mxu0
      %v6022 = vadd.f32 %v5693, %v6021
      %v6023 = vpop.f32.mrf.mxu0
      %v6024 = vadd.f32 %v5695, %v6023
      %6025 = vmatmul.bf16.gmra.mxu0 %v5376
      %v6026 = vpop.f32.mrf.mxu0
      %v6027 = vadd.f32 %v5698, %v6026
      %v6028 = vpop.f32.mrf.mxu0
      %v6029 = vadd.f32 %v5700, %v6028
      %6030 = vmatmul.bf16.gmra.mxu0 %v5378
      %v6031 = vpop.f32.mrf.mxu0
      %v6032 = vadd.f32 %v5703, %v6031
      %v6033 = vpop.f32.mrf.mxu0
      %v6034 = vadd.f32 %v5705, %v6033
      %6035 = vmatmul.bf16.gmra.mxu0 %v5380
      %v6036 = vpop.f32.mrf.mxu0
      %v6037 = vadd.f32 %v5708, %v6036
      %v6038 = vpop.f32.mrf.mxu0
      %v6039 = vadd.f32 %v5710, %v6038
      %6040 = vmatmul.bf16.gmra.mxu0 %v5382
      %v6041 = vpop.f32.mrf.mxu0
      %v6042 = vadd.f32 %v5713, %v6041
      %v6043 = vpop.f32.mrf.mxu0
      %v6044 = vadd.f32 %v5715, %v6043
      %6045 = vmatmul.bf16.gmra.mxu0 %v5384
      %v6046 = vpop.f32.mrf.mxu0
      %v6047 = vadd.f32 %v5718, %v6046
      %v6048 = vpop.f32.mrf.mxu0
      %v6049 = vadd.f32 %v5720, %v6048
      %6050 = vmatmul.bf16.gmra.mxu0 %v5386
      %v6051 = vpop.f32.mrf.mxu0
      %v6052 = vadd.f32 %v5723, %v6051
      %v6053 = vpop.f32.mrf.mxu0
      %v6054 = vadd.f32 %v5725, %v6053
      %6055 = vmatmul.bf16.gmra.mxu0 %v5388
      %v6056 = vpop.f32.mrf.mxu0
      %v6057 = vadd.f32 %v5728, %v6056
      %v6058 = vpop.f32.mrf.mxu0
      %v6059 = vadd.f32 %v5730, %v6058
      %6060 = vmatmul.bf16.gmra.mxu0 %v5390
      %v6061 = vpop.f32.mrf.mxu0
      %v6062 = vadd.f32 %v5733, %v6061
      %v6063 = vpop.f32.mrf.mxu0
      %v6064 = vadd.f32 %v5735, %v6063
      %6065 = vmatmul.bf16.gmra.mxu0 %v5392
      %v6066 = vpop.f32.mrf.mxu0
      %v6067 = vadd.f32 %v5738, %v6066
      %v6068 = vpop.f32.mrf.mxu0
      %v6069 = vadd.f32 %v5740, %v6068
      %6070 = vmatmul.bf16.gmra.mxu0 %v5394
      %v6071 = vpop.f32.mrf.mxu0
      %v6072 = vadd.f32 %v5743, %v6071
      %v6073 = vpop.f32.mrf.mxu0
      %v6074 = vadd.f32 %v5745, %v6073
      %6075 = vmatmul.bf16.gmra.mxu0 %v5396
      %v6076 = vpop.f32.mrf.mxu0
      %v6077 = vadd.f32 %v5748, %v6076
      %v6078 = vpop.f32.mrf.mxu0
      %v6079 = vadd.f32 %v5750, %v6078
      %6080 = vmatmul.bf16.gmra.mxu0 %v5398
      %v6081 = vpop.f32.mrf.mxu0
      %v6082 = vadd.f32 %v5753, %v6081
      %v6083 = vpop.f32.mrf.mxu0
      %v6084 = vadd.f32 %v5755, %v6083
      %6085 = vmatmul.bf16.gmra.mxu0 %v5400
      %v6086 = vpop.f32.mrf.mxu0
      %v6087 = vadd.f32 %v5758, %v6086
      %v6088 = vpop.f32.mrf.mxu0
      %v6089 = vadd.f32 %v5760, %v6088
      %6090 = vmatmul.bf16.gmra.mxu0 %v5402
      %v6091 = vpop.f32.mrf.mxu0
      %v6092 = vadd.f32 %v5763, %v6091
      %v6093 = vpop.f32.mrf.mxu0
      %v6094 = vadd.f32 %v5765, %v6093
      %6095 = vmatmul.bf16.gmra.mxu0 %v5404
      %v6096 = vpop.f32.mrf.mxu0
      %v6097 = vadd.f32 %v5768, %v6096
      %v6098 = vpop.f32.mrf.mxu0
      %v6099 = vadd.f32 %v5770, %v6098
      %6100 = vmatmul.bf16.gmra.mxu0 %v5406
      %v6101 = vpop.f32.mrf.mxu0
      %v6102 = vadd.f32 %v5773, %v6101
      %v6103 = vpop.f32.mrf.mxu0
      %v6104 = vadd.f32 %v5775, %v6103
      %6105 = vmatmul.bf16.gmra.mxu0 %v5408
      %v6106 = vpop.f32.mrf.mxu0
      %v6107 = vadd.f32 %v5778, %v6106
      %v6108 = vpop.f32.mrf.mxu0
      %v6109 = vadd.f32 %v5780, %v6108
      %6110 = vmatmul.bf16.gmra.mxu0 %v5410
      %v6111 = vpop.f32.mrf.mxu0
      %v6112 = vadd.f32 %v5783, %v6111
      %v6113 = vpop.f32.mrf.mxu0
      %v6114 = vadd.f32 %v5785, %v6113
      %6115 = vmatmul.bf16.gmra.mxu0 %v5412
      %v6116 = vpop.f32.mrf.mxu0
      %v6117 = vadd.f32 %v5788, %v6116
      %v6118 = vpop.f32.mrf.mxu0
      %v6119 = vadd.f32 %v5790, %v6118
      %6120 = vmatmul.bf16.gmra.mxu0 %v5414
      %v6121 = vpop.f32.mrf.mxu0
      %v6122 = vadd.f32 %v5793, %v6121
      %v6123 = vpop.f32.mrf.mxu0
      %v6124 = vadd.f32 %v5795, %v6123
      %6125 = vmatmul.bf16.gmra.mxu0 %v5416
      %v6126 = vpop.f32.mrf.mxu0
      %v6127 = vadd.f32 %v5798, %v6126
      %v6128 = vpop.f32.mrf.mxu0
      %v6129 = vadd.f32 %v5800, %v6128
      %6130 = vmatmul.bf16.gmra.mxu0 %v5418
      %v6131 = vpop.f32.mrf.mxu0
      %v6132 = vadd.f32 %v5803, %v6131
      %v6133 = vpop.f32.mrf.mxu0
      %v6134 = vadd.f32 %v5805, %v6133
      %6135 = vmatmul.bf16.gmra.mxu0 %v5420
      %v6136 = vpop.f32.mrf.mxu0
      %v6137 = vadd.f32 %v5808, %v6136
      %v6138 = vpop.f32.mrf.mxu0
      %v6139 = vadd.f32 %v5810, %v6138
      %6140 = vmatmul.bf16.gmra.mxu0 %v5422
      %v6141 = vpop.f32.mrf.mxu0
      %v6142 = vadd.f32 %v5813, %v6141
      %v6143 = vpop.f32.mrf.mxu0
      %v6144 = vadd.f32 %v5815, %v6143
      %6145 = vmatmul.bf16.gmra.mxu0 %v5424
      %v6146 = vpop.f32.mrf.mxu0
      %v6147 = vadd.f32 %v5818, %v6146
      %v6148 = vpop.f32.mrf.mxu0
      %v6149 = vadd.f32 %v5820, %v6148
      %6150 = vmatmul.bf16.gmra.mxu0 %v5426
      %v6151 = vpop.f32.mrf.mxu0
      %v6152 = vadd.f32 %v5823, %v6151
      %v6153 = vpop.f32.mrf.mxu0
      %v6154 = vadd.f32 %v5825, %v6153
      %6155 = vmatmul.bf16.gmra.mxu0 %v5428
      %v6156 = vpop.f32.mrf.mxu0
      %v6157 = vadd.f32 %v5828, %v6156
      %v6158 = vpop.f32.mrf.mxu0
      %v6159 = vadd.f32 %v5830, %v6158
      %6160 = vmatmul.bf16.gmra.mxu0 %v5430
      %v6161 = vpop.f32.mrf.mxu0
      %v6162 = vadd.f32 %v5833, %v6161
      %v6163 = vpop.f32.mrf.mxu0
      %v6164 = vadd.f32 %v5835, %v6163
      %6165 = vmatmul.bf16.gmra.mxu0 %v5432
      %v6166 = vpop.f32.mrf.mxu0
      %v6167 = vadd.f32 %v5838, %v6166
      %v6168 = vpop.f32.mrf.mxu0
      %v6169 = vadd.f32 %v5840, %v6168
      %6170 = vmatmul.bf16.gmra.mxu0 %v5434
      %v6171 = vpop.f32.mrf.mxu0
      %v6172 = vadd.f32 %v5843, %v6171
      %v6173 = vpop.f32.mrf.mxu0
      %v6174 = vadd.f32 %v5845, %v6173
      %6175 = vmatmul.bf16.gmra.mxu0 %v5436
      %v6176 = vpop.f32.mrf.mxu0
      %v6177 = vadd.f32 %v5848, %v6176
      %v6178 = vpop.f32.mrf.mxu0
      %v6179 = vadd.f32 %v5850, %v6178
      %6180 = vmatmul.bf16.gmra.mxu0 %v5438
      %v6181 = vpop.f32.mrf.mxu0
      %v6182 = vadd.f32 %v5853, %v6181
      %v6183 = vpop.f32.mrf.mxu0
      %v6184 = vadd.f32 %v5855, %v6183
      %6185 = vmatmul.bf16.gmra.mxu0 %v5440
      %v6186 = vpop.f32.mrf.mxu0
      %v6187 = vadd.f32 %v5858, %v6186
      %v6188 = vpop.f32.mrf.mxu0
      %v6189 = vadd.f32 %v5860, %v6188
      %6190 = vmatmul.bf16.gmra.mxu0 %v5442
      %v6191 = vpop.f32.mrf.mxu0
      %v6192 = vadd.f32 %v5863, %v6191
      %v6193 = vpop.f32.mrf.mxu0
      %v6194 = vadd.f32 %v5865, %v6193
      %6195 = vmatmul.bf16.gmra.mxu0 %v5444
      %v6196 = vpop.f32.mrf.mxu0
      %v6197 = vadd.f32 %v5868, %v6196
      %v6198 = vpop.f32.mrf.mxu0
      %v6199 = vadd.f32 %v5870, %v6198
      %6200 = vmatmul.bf16.gmra.mxu0 %v5446
      %v6201 = vpop.f32.mrf.mxu0
      %v6202 = vadd.f32 %v5873, %v6201
      %v6203 = vpop.f32.mrf.mxu0
      %v6204 = vadd.f32 %v5875, %v6203
      %6205 = vmatmul.bf16.gmra.mxu0 %v5448
      %v6206 = vpop.f32.mrf.mxu0
      %v6207 = vadd.f32 %v5878, %v6206
      %v6208 = vpop.f32.mrf.mxu0
      %v6209 = vadd.f32 %v5880, %v6208
      %6210 = vmatmul.bf16.gmra.mxu0 %v5450
      %v6211 = vpop.f32.mrf.mxu0
      %v6212 = vadd.f32 %v5883, %v6211
      %v6213 = vpop.f32.mrf.mxu0
      %v6214 = vadd.f32 %v5885, %v6213
      %6215 = vmatmul.bf16.gmra.mxu0 %v5452
      %v6216 = vpop.f32.mrf.mxu0
      %v6217 = vadd.f32 %v5888, %v6216
      %v6218 = vpop.f32.mrf.mxu0
      %v6219 = vadd.f32 %v5890, %v6218
      %6220 = vmatmul.bf16.gmra.mxu0 %v5454
      %v6221 = vpop.f32.mrf.mxu0
      %v6222 = vadd.f32 %v5893, %v6221
      %v6223 = vpop.f32.mrf.mxu0
      %v6224 = vadd.f32 %v5895, %v6223
      %6225 = vmatmul.bf16.gmra.mxu0 %v5456
      %v6226 = vpop.f32.mrf.mxu0
      %v6227 = vadd.f32 %v5898, %v6226
      %v6228 = vpop.f32.mrf.mxu0
      %v6229 = vadd.f32 %v5900, %v6228
      %6230 = vmatmul.bf16.gmra.mxu0 %v5458
      %v6231 = vpop.f32.mrf.mxu0
      %v6232 = vadd.f32 %v5903, %v6231
      %v6233 = vpop.f32.mrf.mxu0
      %v6234 = vadd.f32 %v5905, %v6233
      %6235 = vmatmul.bf16.gmra.mxu0 %v5460
      %v6236 = vpop.f32.mrf.mxu0
      %v6237 = vadd.f32 %v5908, %v6236
      %v6238 = vpop.f32.mrf.mxu0
      %v6239 = vadd.f32 %v5910, %v6238
      %6240 = vmatmul.bf16.gmra.mxu0 %v5462
      %v6241 = vpop.f32.mrf.mxu0
      %v6242 = vadd.f32 %v5913, %v6241
      %v6243 = vpop.f32.mrf.mxu0
      %v6244 = vadd.f32 %v5915, %v6243
      %6245 = vmatmul.bf16.gmra.mxu0 %v5464
      %v6246 = vpop.f32.mrf.mxu0
      %v6247 = vadd.f32 %v5918, %v6246
      %v6248 = vpop.f32.mrf.mxu0
      %v6249 = vadd.f32 %v5920, %v6248
      %6250 = vdwg.mxu0
      %vm6251 = vcmask 7168
      %6252 = vst.msk [vmem:[%s226] sm:$0xff] %vm6251, %v5932
      %6253 = vst.msk [vmem:[%s226 + $0x8] sm:$0xff] %vm6251, %v5934
      %6254 = vst.msk [vmem:[%s226 + $0x10] sm:$0xff] %vm6251, %v5937
      %6255 = vst.msk [vmem:[%s226 + $0x18] sm:$0xff] %vm6251, %v5939
      %6256 = vst.msk [vmem:[%s226 + $0x20] sm:$0xff] %vm6251, %v5942
      %6257 = vst.msk [vmem:[%s226 + $0x28] sm:$0xff] %vm6251, %v5944
      %6258 = vst.msk [vmem:[%s226 + $0x30] sm:$0xff] %vm6251, %v5947
      %6259 = vst.msk [vmem:[%s226 + $0x38] sm:$0xff] %vm6251, %v5949
      %6260 = vst.msk [vmem:[%s226 + $0x40] sm:$0xff] %vm6251, %v5952
      %6261 = vst.msk [vmem:[%s226 + $0x48] sm:$0xff] %vm6251, %v5954
      %6262 = vst.msk [vmem:[%s226 + $0x50] sm:$0xff] %vm6251, %v5957
      %6263 = vst.msk [vmem:[%s226 + $0x58] sm:$0xff] %vm6251, %v5959
      %6264 = vst.msk [vmem:[%s226 + $0x60] sm:$0xff] %vm6251, %v5962
      %6265 = vst.msk [vmem:[%s226 + $0x68] sm:$0xff] %vm6251, %v5964
      %6266 = vst.msk [vmem:[%s226 + $0x70] sm:$0xff] %vm6251, %v5967
      %6267 = vst.msk [vmem:[%s226 + $0x78] sm:$0xff] %vm6251, %v5969
      %6268 = vst.msk [vmem:[%s226 + $0x80] sm:$0xff] %vm6251, %v5972
      %6269 = vst.msk [vmem:[%s226 + $0x88] sm:$0xff] %vm6251, %v5974
      %6270 = vst.msk [vmem:[%s226 + $0x90] sm:$0xff] %vm6251, %v5977
      %6271 = vst.msk [vmem:[%s226 + $0x98] sm:$0xff] %vm6251, %v5979
      %6272 = vst.msk [vmem:[%s226 + $0xa0] sm:$0xff] %vm6251, %v5982
      %6273 = vst.msk [vmem:[%s226 + $0xa8] sm:$0xff] %vm6251, %v5984
      %6274 = vst.msk [vmem:[%s226 + $0xb0] sm:$0xff] %vm6251, %v5987
      %6275 = vst.msk [vmem:[%s226 + $0xb8] sm:$0xff] %vm6251, %v5989
      %6276 = vst.msk [vmem:[%s226 + $0xc0] sm:$0xff] %vm6251, %v5992
      %6277 = vst.msk [vmem:[%s226 + $0xc8] sm:$0xff] %vm6251, %v5994
      %6278 = vst.msk [vmem:[%s226 + $0xd0] sm:$0xff] %vm6251, %v5997
      %6279 = vst.msk [vmem:[%s226 + $0xd8] sm:$0xff] %vm6251, %v5999
      %6280 = vst.msk [vmem:[%s226 + $0xe0] sm:$0xff] %vm6251, %v6002
      %6281 = vst.msk [vmem:[%s226 + $0xe8] sm:$0xff] %vm6251, %v6004
      %6282 = vst.msk [vmem:[%s226 + $0xf0] sm:$0xff] %vm6251, %v6007
      %6283 = vst.msk [vmem:[%s226 + $0xf8] sm:$0xff] %vm6251, %v6009
      %6284 = vst.msk [vmem:[%s226 + $0x100] sm:$0xff] %vm6251, %v6012
      %6285 = vst.msk [vmem:[%s226 + $0x108] sm:$0xff] %vm6251, %v6014
      %6286 = vst.msk [vmem:[%s226 + $0x110] sm:$0xff] %vm6251, %v6017
      %6287 = vst.msk [vmem:[%s226 + $0x118] sm:$0xff] %vm6251, %v6019
      %6288 = vst.msk [vmem:[%s226 + $0x120] sm:$0xff] %vm6251, %v6022
      %6289 = vst.msk [vmem:[%s226 + $0x128] sm:$0xff] %vm6251, %v6024
      %6290 = vst.msk [vmem:[%s226 + $0x130] sm:$0xff] %vm6251, %v6027
      %6291 = vst.msk [vmem:[%s226 + $0x138] sm:$0xff] %vm6251, %v6029
      %6292 = vst.msk [vmem:[%s226 + $0x140] sm:$0xff] %vm6251, %v6032
      %6293 = vst.msk [vmem:[%s226 + $0x148] sm:$0xff] %vm6251, %v6034
      %6294 = vst.msk [vmem:[%s226 + $0x150] sm:$0xff] %vm6251, %v6037
      %6295 = vst.msk [vmem:[%s226 + $0x158] sm:$0xff] %vm6251, %v6039
      %6296 = vst.msk [vmem:[%s226 + $0x160] sm:$0xff] %vm6251, %v6042
      %6297 = vst.msk [vmem:[%s226 + $0x168] sm:$0xff] %vm6251, %v6044
      %6298 = vst.msk [vmem:[%s226 + $0x170] sm:$0xff] %vm6251, %v6047
      %6299 = vst.msk [vmem:[%s226 + $0x178] sm:$0xff] %vm6251, %v6049
      %6300 = vst.msk [vmem:[%s226 + $0x180] sm:$0xff] %vm6251, %v6052
      %6301 = vst.msk [vmem:[%s226 + $0x188] sm:$0xff] %vm6251, %v6054
      %6302 = vst.msk [vmem:[%s226 + $0x190] sm:$0xff] %vm6251, %v6057
      %6303 = vst.msk [vmem:[%s226 + $0x198] sm:$0xff] %vm6251, %v6059
      %6304 = vst.msk [vmem:[%s226 + $0x1a0] sm:$0xff] %vm6251, %v6062
      %6305 = vst.msk [vmem:[%s226 + $0x1a8] sm:$0xff] %vm6251, %v6064
      %6306 = vst.msk [vmem:[%s226 + $0x1b0] sm:$0xff] %vm6251, %v6067
      %6307 = vst.msk [vmem:[%s226 + $0x1b8] sm:$0xff] %vm6251, %v6069
      %6308 = vst.msk [vmem:[%s226 + $0x1c0] sm:$0xff] %vm6251, %v6072
      %6309 = vst.msk [vmem:[%s226 + $0x1c8] sm:$0xff] %vm6251, %v6074
      %6310 = vst.msk [vmem:[%s226 + $0x1d0] sm:$0xff] %vm6251, %v6077
      %6311 = vst.msk [vmem:[%s226 + $0x1d8] sm:$0xff] %vm6251, %v6079
      %6312 = vst.msk [vmem:[%s226 + $0x1e0] sm:$0xff] %vm6251, %v6082
      %6313 = vst.msk [vmem:[%s226 + $0x1e8] sm:$0xff] %vm6251, %v6084
      %6314 = vst.msk [vmem:[%s226 + $0x1f0] sm:$0xff] %vm6251, %v6087
      %6315 = vst.msk [vmem:[%s226 + $0x1f8] sm:$0xff] %vm6251, %v6089
      %6316 = vst.msk [vmem:[%s226 + $0x200] sm:$0xff] %vm6251, %v6092
      %6317 = vst.msk [vmem:[%s226 + $0x208] sm:$0xff] %vm6251, %v6094
      %6318 = vst.msk [vmem:[%s226 + $0x210] sm:$0xff] %vm6251, %v6097
      %6319 = vst.msk [vmem:[%s226 + $0x218] sm:$0xff] %vm6251, %v6099
      %6320 = vst.msk [vmem:[%s226 + $0x220] sm:$0xff] %vm6251, %v6102
      %6321 = vst.msk [vmem:[%s226 + $0x228] sm:$0xff] %vm6251, %v6104
      %6322 = vst.msk [vmem:[%s226 + $0x230] sm:$0xff] %vm6251, %v6107
      %6323 = vst.msk [vmem:[%s226 + $0x238] sm:$0xff] %vm6251, %v6109
      %6324 = vst.msk [vmem:[%s226 + $0x240] sm:$0xff] %vm6251, %v6112
      %6325 = vst.msk [vmem:[%s226 + $0x248] sm:$0xff] %vm6251, %v6114
      %6326 = vst.msk [vmem:[%s226 + $0x250] sm:$0xff] %vm6251, %v6117
      %6327 = vst.msk [vmem:[%s226 + $0x258] sm:$0xff] %vm6251, %v6119
      %6328 = vst.msk [vmem:[%s226 + $0x260] sm:$0xff] %vm6251, %v6122
      %6329 = vst.msk [vmem:[%s226 + $0x268] sm:$0xff] %vm6251, %v6124
      %6330 = vst.msk [vmem:[%s226 + $0x270] sm:$0xff] %vm6251, %v6127
      %6331 = vst.msk [vmem:[%s226 + $0x278] sm:$0xff] %vm6251, %v6129
      %6332 = vst.msk [vmem:[%s226 + $0x280] sm:$0xff] %vm6251, %v6132
      %6333 = vst.msk [vmem:[%s226 + $0x288] sm:$0xff] %vm6251, %v6134
      %6334 = vst.msk [vmem:[%s226 + $0x290] sm:$0xff] %vm6251, %v6137
      %6335 = vst.msk [vmem:[%s226 + $0x298] sm:$0xff] %vm6251, %v6139
      %6336 = vst.msk [vmem:[%s226 + $0x2a0] sm:$0xff] %vm6251, %v6142
      %6337 = vst.msk [vmem:[%s226 + $0x2a8] sm:$0xff] %vm6251, %v6144
      %6338 = vst.msk [vmem:[%s226 + $0x2b0] sm:$0xff] %vm6251, %v6147
      %6339 = vst.msk [vmem:[%s226 + $0x2b8] sm:$0xff] %vm6251, %v6149
      %6340 = vst.msk [vmem:[%s226 + $0x2c0] sm:$0xff] %vm6251, %v6152
      %6341 = vst.msk [vmem:[%s226 + $0x2c8] sm:$0xff] %vm6251, %v6154
      %6342 = vst.msk [vmem:[%s226 + $0x2d0] sm:$0xff] %vm6251, %v6157
      %6343 = vst.msk [vmem:[%s226 + $0x2d8] sm:$0xff] %vm6251, %v6159
      %6344 = vst.msk [vmem:[%s226 + $0x2e0] sm:$0xff] %vm6251, %v6162
      %6345 = vst.msk [vmem:[%s226 + $0x2e8] sm:$0xff] %vm6251, %v6164
      %6346 = vst.msk [vmem:[%s226 + $0x2f0] sm:$0xff] %vm6251, %v6167
      %6347 = vst.msk [vmem:[%s226 + $0x2f8] sm:$0xff] %vm6251, %v6169
      %6348 = vst.msk [vmem:[%s226 + $0x300] sm:$0xff] %vm6251, %v6172
      %6349 = vst.msk [vmem:[%s226 + $0x308] sm:$0xff] %vm6251, %v6174
      %6350 = vst.msk [vmem:[%s226 + $0x310] sm:$0xff] %vm6251, %v6177
      %6351 = vst.msk [vmem:[%s226 + $0x318] sm:$0xff] %vm6251, %v6179
      %6352 = vst.msk [vmem:[%s226 + $0x320] sm:$0xff] %vm6251, %v6182
      %6353 = vst.msk [vmem:[%s226 + $0x328] sm:$0xff] %vm6251, %v6184
      %6354 = vst.msk [vmem:[%s226 + $0x330] sm:$0xff] %vm6251, %v6187
      %6355 = vst.msk [vmem:[%s226 + $0x338] sm:$0xff] %vm6251, %v6189
      %6356 = vst.msk [vmem:[%s226 + $0x340] sm:$0xff] %vm6251, %v6192
      %6357 = vst.msk [vmem:[%s226 + $0x348] sm:$0xff] %vm6251, %v6194
      %6358 = vst.msk [vmem:[%s226 + $0x350] sm:$0xff] %vm6251, %v6197
      %6359 = vst.msk [vmem:[%s226 + $0x358] sm:$0xff] %vm6251, %v6199
      %6360 = vst.msk [vmem:[%s226 + $0x360] sm:$0xff] %vm6251, %v6202
      %6361 = vst.msk [vmem:[%s226 + $0x368] sm:$0xff] %vm6251, %v6204
      %6362 = vst.msk [vmem:[%s226 + $0x370] sm:$0xff] %vm6251, %v6207
      %6363 = vst.msk [vmem:[%s226 + $0x378] sm:$0xff] %vm6251, %v6209
      %6364 = vst.msk [vmem:[%s226 + $0x380] sm:$0xff] %vm6251, %v6212
      %6365 = vst.msk [vmem:[%s226 + $0x388] sm:$0xff] %vm6251, %v6214
      %6366 = vst.msk [vmem:[%s226 + $0x390] sm:$0xff] %vm6251, %v6217
      %6367 = vst.msk [vmem:[%s226 + $0x398] sm:$0xff] %vm6251, %v6219
      %6368 = vst.msk [vmem:[%s226 + $0x3a0] sm:$0xff] %vm6251, %v6222
      %6369 = vst.msk [vmem:[%s226 + $0x3a8] sm:$0xff] %vm6251, %v6224
      %6370 = vst.msk [vmem:[%s226 + $0x3b0] sm:$0xff] %vm6251, %v6227
      %6371 = vst.msk [vmem:[%s226 + $0x3b8] sm:$0xff] %vm6251, %v6229
      %6372 = vst.msk [vmem:[%s226 + $0x3c0] sm:$0xff] %vm6251, %v6232
      %6373 = vst.msk [vmem:[%s226 + $0x3c8] sm:$0xff] %vm6251, %v6234
      %6374 = vst.msk [vmem:[%s226 + $0x3d0] sm:$0xff] %vm6251, %v6237
      %6375 = vst.msk [vmem:[%s226 + $0x3d8] sm:$0xff] %vm6251, %v6239
      %6376 = vst.msk [vmem:[%s226 + $0x3e0] sm:$0xff] %vm6251, %v6242
      %6377 = vst.msk [vmem:[%s226 + $0x3e8] sm:$0xff] %vm6251, %v6244
      %6378 = vst.msk [vmem:[%s226 + $0x3f0] sm:$0xff] %vm6251, %v6247
      %6379 = vst.msk [vmem:[%s226 + $0x3f8] sm:$0xff] %vm6251, %v6249
      %s6380 = smul.u32 128, %s16
      %p6381 = scmp.lt.s32.totalorder %s6380, 255
      %s6382 = scalar_select %p6381, %s6380, 255
      %s6383 = smul.addr %s6382, 8
      %s6384 = scalar_lea.vmem %s5, %s6383
      // Predicated region
      $region41: #{four_layer_nn.1} parent=39 // pred_check
        %p6385 = pneg %p144
      $region42: #{four_layer_nn.1} parent=39 // pred_check_branch
        %6387 = sbr.rel (%p6385) target = $region44
      $region43: #{four_layer_nn.1} parent=39 // pred_region
        %s6388 = smul.u32 128, %s16
      $region44: #{four_layer_nn.1} parent=39 // pred_fallthru
        _
    $region40: #{four_layer_nn.1} parent=5 // pred_fallthru
      _
    %p6389 = scmp.le.s32.totalorder 2, %s11
    // Predicated region
    $region45: #{four_layer_nn.1} parent=5 // pred_check
      %p6390 = pneg %p6389
    $region46: #{four_layer_nn.1} parent=5 // pred_check_branch
      %6392 = sbr.rel (%p6390) target = $region48
    $region47: #{four_layer_nn.1} parent=5 // pred_region
      %s6393 = ssub.s32 %s11, 2
      // Predicated region
      $region49: #{four_layer_nn.1} parent=47 // pred_check
        %p6394 = pneg %p150
      $region50: #{four_layer_nn.1} parent=47 // pred_check_branch
        %6396 = sbr.rel (%p6394) target = $region52
      $region51: #{four_layer_nn.1} parent=47 // pred_region
        %s6397 = smul.u32 128, %s17
        %p6398 = scmp.lt.s32.totalorder %s6397, 255
        %s6399 = scalar_select %p6398, %s6397, 255
        %s6400 = smul.addr %s6399, 8
        %s6401 = scalar_lea.vmem %s5, %s6400
      $region52: #{four_layer_nn.1} parent=47 // pred_fallthru
        _
    $region48: #{four_layer_nn.1} parent=5 // pred_fallthru
      _
  $region6: #{four_layer_nn.1} parent=0 // loop_footer
    %s15 = sadd.s32 1, %s11
  $region7: #{four_layer_nn.1} parent=0 // loop_footer_branch
    %10 = sbr.rel target = $region3
  $region8: #{four_layer_nn.1} parent=0 // loop_exit
    _

</llo_original>
